<compile_context>
chip_gen: v7x
topology: tpu7x:2x2x1
jax: 0.10.0
libtpu: 0.0.40
codegen_flags: <defaults>
</compile_context>

<pallas_src>
import functools
import math

import jax
import jax.numpy as jnp
from jax.experimental import pallas as pl
from jax.experimental.pallas import tpu as pltpu


# ----------------------------------------------------------------------------- utils
def _round_up(n, m):
    return (n + m - 1) // m * m


def _r8(n):
    return _round_up(n, 8)


def _choose_tile_n(B, L):
    """Tile of the flattened N = B*L axis: multiple of L (so a tile only ever contains
    whole per-batch segments) and of 128 (lane-dense stores)."""
    base = (L * 128) // math.gcd(L, 128)          # lcm(L, 128)
    total = _round_up(B * L, base)
    tile = base
    while tile * 2 <= total and tile * 2 <= 1024:
        tile *= 2
    return tile


# ----------------------------------------------------------------------------- in-kernel helpers
def _pdot(w, x, b):
    """1x1 conv on the (C, N) layout: bf16 MXU matmul, f32 accumulate, f32 bias."""
    return jnp.dot(w, x.astype(jnp.bfloat16), preferred_element_type=jnp.float32) + b


def _tap_conv(x, w_taps, bias, dilation, pad_left, L, relu):
    """K-tap 1-D conv on the flattened (Cin, Ntile) layout.

    Tap k contributes w_k @ x[:, t + k*dilation - pad_left] with zero padding outside
    [0, L) of each length-L batch segment.  The shift is a lane rotation; a per-column
    mask (column % L) enforces both the zero padding and the batch boundaries (the tile
    width is a multiple of L, so valid reads never cross a tile edge).
    """
    ntile = x.shape[1]
    t = jax.lax.broadcasted_iota(jnp.int32, (1, ntile), 1) % L
    acc = None
    for k, wk in enumerate(w_taps):
        off = k * dilation - pad_left
        if off == 0:
            xs = x
        else:
            xs = pltpu.roll(x, (-off) % ntile, 1)          # xs[:, n] = x[:, n + off]
            valid = jnp.logical_and(t + off >= 0, t + off < L)
            xs = jnp.where(valid, xs, 0.0)
        y = jnp.dot(wk, xs.astype(jnp.bfloat16), preferred_element_type=jnp.float32)
        acc = y if acc is None else acc + y
    acc = acc + bias
    if relu:
        acc = jnp.maximum(acc, 0.0)
    return acc


# ----------------------------------------------------------------------------- kernels
def _make_tcn_branch_kernel(blocks_meta, L):
    """Whole TCN branch (all residual blocks + the trailing 1x1 projection) in one kernel.

    Ref order: x, then per block [w1_tap0, w1_tap1, b1, w2_tap0, w2_tap1, b2, (wd, bd)],
    then proj_w, proj_b, out.  blocks_meta: tuple of (dilation, has_downsample).
    """
    def kernel(*refs):
        x_ref, o_ref = refs[0], refs[-1]
        x = x_ref[...]
        i = 1
        for dil, has_down in blocks_meta:
            w1 = (refs[i][...], refs[i + 1][...]); b1 = refs[i + 2][...]
            w2 = (refs[i + 3][...], refs[i + 4][...]); b2 = refs[i + 5][...]
            i += 6
            out = _tap_conv(x, w1, b1, dil, dil, L, True)      # causal conv + chomp + relu
            out = _tap_conv(out, w2, b2, dil, dil, L, True)
            if has_down:
                res = _pdot(refs[i][...], x, refs[i + 1][...])
                i += 2
            else:
                res = x
            x = jnp.maximum(out + res, 0.0)                    # block residual + relu
        o_ref[...] = _pdot(refs[i][...], x, refs[i + 1][...])  # 1x1 projection back to C
    return kernel


def _make_head_kernel(L):
    """Fused: branch_1 (folded), branch_2 (3 chained k=3 convs), concat-free conv1
    (sum of four per-branch matmuls), conv2, eval-BN, hardswish, residual add.

    Ref order: x, x3, x4, w1f, b1f, [3 x (tap0, tap1, tap2, b)], c1_chunk0..3, c1_b,
    c2_w, c2_b, bn_scale, bn_shift, out.
    """
    def kernel(*refs):
        x_ref, x3_ref, x4_ref, o_ref = refs[0], refs[1], refs[2], refs[-1]
        x = x_ref[...]
        i = 3
        # branch 1: two 1x1 convs folded into a single matmul at init.
        x1 = _pdot(refs[i][...], x, refs[i + 1][...]); i += 2
        # branch 2: three k=3 pad=1 convs chained entirely in VMEM.
        x2 = x
        for _ in range(3):
            taps = (refs[i][...], refs[i + 1][...], refs[i + 2][...])
            b = refs[i + 3][...]
            i += 4
            x2 = _tap_conv(x2, taps, b, 1, 1, L, False)
        # conv1 over the *virtual* concat([x1,x2,x3,x4]) = sum of per-branch matmuls.
        h = None
        for xb in (x1, x2, x3_ref[...], x4_ref[...]):
            y = jnp.dot(refs[i][...], xb.astype(jnp.bfloat16),
                        preferred_element_type=jnp.float32)
            h = y if h is None else h + y
            i += 1
        h = h + refs[i][...]; i += 1                               # conv1 bias
        y = _pdot(refs[i][...], h, refs[i + 1][...]); i += 2       # conv2
        y = y * refs[i][...] + refs[i + 1][...]                    # BatchNorm1d (eval)
        y = y * jnp.clip(y + 3.0, 0.0, 6.0) * (1.0 / 6.0)          # hardswish
        o_ref[...] = y + x                                         # residual add
        # TODO(synk): nn.Dropout(p) is identity at inference; stochastic dropout skipped.
    return kernel


# ----------------------------------------------------------------------------- pallas_call driver
def _tiled_call(kernel, tiled_inputs, const_inputs, out_rows, tile_n):
    """Run `kernel` over N tiles.  `tiled_inputs` are (rows, Npad) activations tiled on
    the lane axis; `const_inputs` are small prepacked weights kept whole in VMEM."""
    npad = tiled_inputs[0].shape[1]
    grid = (npad // tile_n,)
    in_specs = [pl.BlockSpec((a.shape[0], tile_n), lambda j: (0, j)) for a in tiled_inputs]
    in_specs += [pl.BlockSpec(a.shape, lambda j: (0, 0)) for a in const_inputs]
    return pl.pallas_call(
        kernel,
        grid=grid,
        in_specs=in_specs,
        out_specs=pl.BlockSpec((out_rows, tile_n), lambda j: (0, j)),
        out_shape=jax.ShapeDtypeStruct((out_rows, npad), jnp.float32),
        compiler_params=pltpu.CompilerParams(
            dimension_semantics=("parallel",),          # N tiles are independent
            vmem_limit_bytes=32 * 1024 * 1024),         # safe on v5e/v6e/v7x
    )(*tiled_inputs, *const_inputs)


# ----------------------------------------------------------------------------- layout glue (once)
def _to_flat(x, cp, npad):
    B, C, L = x.shape
    xm = jnp.transpose(x, (1, 0, 2)).reshape(C, B * L)
    return jnp.zeros((cp, npad), jnp.float32).at[:C, :B * L].set(xm)


def _from_flat(y, B, C, L):
    return jnp.transpose(y[:C, :B * L].reshape(C, B, L), (1, 0, 2))


# ----------------------------------------------------------------------------- parameter packing
def _pad2(a, rows, cols, dtype):
    a = jnp.asarray(a, dtype)
    return jnp.zeros((rows, cols), dtype).at[:a.shape[0], :a.shape[1]].set(a)


def _bias_col(b, rows):
    return _pad2(jnp.asarray(b, jnp.float32).reshape(-1, 1), rows, 1, jnp.float32)


def _prep_conv_taps(w, coutp, cinp):
    """(Cout, Cin, K) -> K separate (coutp, cinp) bf16 tap matrices (zero padded)."""
    _, _, K = w.shape
    return [_pad2(w[:, :, k], coutp, cinp, jnp.bfloat16) for k in range(K)]


def _prep_tcn_branch(blocks, proj_w, proj_b, cp_out):
    meta, consts = [], []
    for blk in blocks:
        out_ch, in_ch, _ = blk["w1"].shape
        cinp, coutp = _r8(in_ch), _r8(out_ch)
        consts += _prep_conv_taps(blk["w1"], coutp, cinp) + [_bias_col(blk["b1"], coutp)]
        consts += _prep_conv_taps(blk["w2"], coutp, coutp) + [_bias_col(blk["b2"], coutp)]
        has_down = "wd" in blk
        if has_down:
            consts += [_pad2(blk["wd"][:, :, 0], coutp, cinp, jnp.bfloat16),
                       _bias_col(blk["bd"], coutp)]
        meta.append((blk["dilation"], has_down))
    last_coutp = _r8(blocks[-1]["w1"].shape[0])
    consts += [_pad2(proj_w[:, :, 0], cp_out, last_coutp, jnp.bfloat16),
               _bias_col(proj_b, cp_out)]
    return tuple(meta), consts


def _prep_head(raw, C, cp):
    # Fold branch_1's two 1x1 convs: y = Wb(Wa x + ba) + bb = (Wb Wa) x + (Wb ba + bb).
    w1a, w1b = raw["b1_w1"][:, :, 0], raw["b1_w2"][:, :, 0]
    w1f = w1b @ w1a
    b1f = w1b @ raw["b1_b1"] + raw["b1_b2"]
    consts = [_pad2(w1f, cp, cp, jnp.bfloat16), _bias_col(b1f, cp)]
    for w, b in raw["branch2"]:
        consts += _prep_conv_taps(w, cp, cp) + [_bias_col(b, cp)]
    # conv1 weight split into 4 per-branch chunks -> the HBM concat disappears.
    c1w = raw["c1_w"][:, :, 0]
    c1rows = _r8(c1w.shape[0])
    for i in range(4):
        consts.append(_pad2(c1w[:, i * C:(i + 1) * C], c1rows, cp, jnp.bfloat16))
    consts.append(_bias_col(raw["c1_b"], c1rows))
    consts += [_pad2(raw["c2_w"][:, :, 0], cp, c1rows, jnp.bfloat16),
               _bias_col(raw["c2_b"], cp)]
    eps = 1e-5
    scale = raw["bn_gamma"] / jnp.sqrt(raw["bn_var"] + eps)
    shift = raw["bn_beta"] - raw["bn_mean"] * scale
    consts += [_bias_col(scale, cp), _bias_col(shift, cp)]
    return consts


# ----------------------------------------------------------------------------- raw parameters
class ParamGen:
    def __init__(self, seed=0):
        self.key = jax.random.PRNGKey(seed)

    def normal(self, shape, scale=0.1):
        self.key, sub = jax.random.split(self.key)
        return scale * jax.random.normal(sub, shape, jnp.float32)

    def uniform(self, shape, lo, hi):
        self.key, sub = jax.random.split(self.key)
        return jax.random.uniform(sub, shape, jnp.float32, lo, hi)


def make_tcn_params(gen, num_inputs, num_channels, kernel_size=2):
    blocks = []
    for i, out_ch in enumerate(num_channels):
        in_ch = num_inputs if i == 0 else num_channels[i - 1]
        blk = {
            "w1": gen.normal((out_ch, in_ch, kernel_size)),
            "b1": gen.normal((out_ch,)),
            "w2": gen.normal((out_ch, out_ch, kernel_size)),
            "b2": gen.normal((out_ch,)),
            "dilation": 2 ** i,
        }
        if in_ch != out_ch:
            blk["wd"] = gen.normal((out_ch, in_ch, 1))
            blk["bd"] = gen.normal((out_ch,))
        blocks.append(blk)
    return blocks


def make_inception_params(channels, seed=0):
    g = ParamGen(seed)
    return {
        "b1_w1": g.normal((channels, channels, 1)), "b1_b1": g.normal((channels,)),
        "b1_w2": g.normal((channels, channels, 1)), "b1_b2": g.normal((channels,)),
        "branch2": [(g.normal((channels, channels, 3)), g.normal((channels,)))
                    for _ in range(3)],
        "tcn3": make_tcn_params(g, channels, [channels // 2, channels // 4]),
        "b3_w": g.normal((channels, channels // 4, 1)), "b3_b": g.normal((channels,)),
        "tcn4": make_tcn_params(g, channels,
                                [channels // 2, channels // 4, channels // 8]),
        "b4_w": g.normal((channels, channels // 8, 1)), "b4_b": g.normal((channels,)),
        "c1_w": g.normal((128, channels * 4, 1)), "c1_b": g.normal((128,)),
        "c2_w": g.normal((channels, 128, 1)), "c2_b": g.normal((channels,)),
        "bn_gamma": g.uniform((channels,), 0.5, 1.5),
        "bn_beta": g.normal((channels,)),
        "bn_mean": g.normal((channels,)),
        "bn_var": g.uniform((channels,), 0.5, 1.5),
    }


# ----------------------------------------------------------------------------- build forward
def build_inception_block(channels, B, L, seed=0):
    raw = make_inception_params(channels, seed)
    cp = _r8(channels)
    tile_n = _choose_tile_n(B, L)
    npad = _round_up(B * L, tile_n)

    tcn3_meta, tcn3_consts = _prep_tcn_branch(raw["tcn3"], raw["b3_w"], raw["b3_b"], cp)
    tcn4_meta, tcn4_consts = _prep_tcn_branch(raw["tcn4"], raw["b4_w"], raw["b4_b"], cp)
    head_consts = _prep_head(raw, channels, cp)

    tcn3_kernel = _make_tcn_branch_kernel(tcn3_meta, L)
    tcn4_kernel = _make_tcn_branch_kernel(tcn4_meta, L)
    head_kernel = _make_head_kernel(L)

    consts = {"tcn3": tcn3_consts, "tcn4": tcn4_consts, "head": head_consts}

    def forward(x, consts):
        xm = _to_flat(x, cp, npad)                                   # layout change, once
        x3 = _tiled_call(tcn3_kernel, [xm], consts["tcn3"], cp, tile_n)
        x4 = _tiled_call(tcn4_kernel, [xm], consts["tcn4"], cp, tile_n)
        out = _tiled_call(head_kernel, [xm, x3, x4], consts["head"], cp, tile_n)
        return _from_flat(out, B, channels, L)

    return jax.jit(forward), consts, raw


# ----------------------------------------------------------------------------- pure-JAX reference
def _ref_conv1d(x, w, b, dilation=1, pad_left=0, pad_right=0):
    B, cin, L = x.shape
    cout, _, K = w.shape
    xp = jnp.pad(x, ((0, 0), (0, 0), (pad_left, pad_right)))
    lout = L + pad_left + pad_right - (K - 1) * dilation
    y = jnp.zeros((B, cout, lout), jnp.float32)
    for k in range(K):
        xs = xp[:, :, k * dilation:k * dilation + lout]
        y = y + jnp.einsum('oc,bcl->bol', w[:, :, k], xs,
                           precision=jax.lax.Precision.HIGHEST)
    return y + b[None, :, None]


def _ref_tcn(x, blocks):
    for blk in blocks:
        d = blk["dilation"]
        pad = d  # (kernel_size - 1) * dilation, kernel_size = 2
        out = jax.nn.relu(_ref_conv1d(x, blk["w1"], blk["b1"], d, pad_left=pad))
        out = jax.nn.relu(_ref_conv1d(out, blk["w2"], blk["b2"], d, pad_left=pad))
        res = _ref_conv1d(x, blk["wd"], blk["bd"]) if "wd" in blk else x
        x = jax.nn.relu(out + res)
    return x


def _ref_forward(x, raw):
    identity = x
    x1 = _ref_conv1d(_ref_conv1d(x, raw["b1_w1"], raw["b1_b1"]),
                     raw["b1_w2"], raw["b1_b2"])
    x2 = x
    for w, b in raw["branch2"]:
        x2 = _ref_conv1d(x2, w, b, pad_left=1, pad_right=1)
    x3 = _ref_conv1d(_ref_tcn(x, raw["tcn3"]), raw["b3_w"], raw["b3_b"])
    x4 = _ref_conv1d(_ref_tcn(x, raw["tcn4"]), raw["b4_w"], raw["b4_b"])
    cat = jnp.concatenate([x1, x2, x3, x4], axis=1)
    out = _ref_conv1d(_ref_conv1d(cat, raw["c1_w"], raw["c1_b"]),
                      raw["c2_w"], raw["c2_b"])
    eps = 1e-5
    scale = raw["bn_gamma"] / jnp.sqrt(raw["bn_var"] + eps)
    shift = raw["bn_beta"] - raw["bn_mean"] * scale
    y = out * scale[None, :, None] + shift[None, :, None]
    y = y * jnp.clip(y + 3.0, 0.0, 6.0) / 6.0
    return y + identity


# ----------------------------------------------------------------------------- main
if __name__ == "__main__":
    B, C, L = 2, 8, 16  # channels divisible by 8 so branch_4's channels // 8 >= 1
    key = jax.random.PRNGKey(0)
    x = jax.random.normal(key, (B, C, L), jnp.float32)

    fwd, consts, raw = build_inception_block(C, B, L, seed=0)
    out = jax.block_until_ready(fwd(x, consts))

    assert out.shape == (B, C, L), out.shape
    assert bool(jnp.all(jnp.isfinite(out)))

    ref = _ref_forward(x, raw)
    err = float(jnp.max(jnp.abs(out - ref)))
    assert err < 4e-2, f"max abs err vs reference: {err}"  # bf16 MXU inputs, f32 accum

    print("KERNEL_OK")
</pallas_src>

<mosaic_0001>
module attributes {stable_mosaic.version = 11 : i64} {
  func.func @kernel(%arg0: i32, %arg1: memref<8x128xf32, #tpu.memory_space<vmem>>, %arg2: memref<8x8xbf16, #tpu.memory_space<vmem>>, %arg3: memref<8x8xbf16, #tpu.memory_space<vmem>>, %arg4: memref<8x1xf32, #tpu.memory_space<vmem>>, %arg5: memref<8x8xbf16, #tpu.memory_space<vmem>>, %arg6: memref<8x8xbf16, #tpu.memory_space<vmem>>, %arg7: memref<8x1xf32, #tpu.memory_space<vmem>>, %arg8: memref<8x8xbf16, #tpu.memory_space<vmem>>, %arg9: memref<8x1xf32, #tpu.memory_space<vmem>>, %arg10: memref<8x8xbf16, #tpu.memory_space<vmem>>, %arg11: memref<8x8xbf16, #tpu.memory_space<vmem>>, %arg12: memref<8x1xf32, #tpu.memory_space<vmem>>, %arg13: memref<8x8xbf16, #tpu.memory_space<vmem>>, %arg14: memref<8x8xbf16, #tpu.memory_space<vmem>>, %arg15: memref<8x1xf32, #tpu.memory_space<vmem>>, %arg16: memref<8x8xbf16, #tpu.memory_space<vmem>>, %arg17: memref<8x1xf32, #tpu.memory_space<vmem>>, %arg18: memref<8x8xbf16, #tpu.memory_space<vmem>>, %arg19: memref<8x8xbf16, #tpu.memory_space<vmem>>, %arg20: memref<8x1xf32, #tpu.memory_space<vmem>>, %arg21: memref<8x8xbf16, #tpu.memory_space<vmem>>, %arg22: memref<8x8xbf16, #tpu.memory_space<vmem>>, %arg23: memref<8x1xf32, #tpu.memory_space<vmem>>, %arg24: memref<8x8xbf16, #tpu.memory_space<vmem>>, %arg25: memref<8x1xf32, #tpu.memory_space<vmem>>, %arg26: memref<8x8xbf16, #tpu.memory_space<vmem>>, %arg27: memref<8x1xf32, #tpu.memory_space<vmem>>, %arg28: memref<8x128xf32, #tpu.memory_space<vmem>>) attributes {dimension_semantics = [#tpu.dimension_semantics<parallel>], iteration_bounds = array<i64: 1>, scalar_prefetch = 0 : i64, scratch_operands = 0 : i64, tpu.core_type = #tpu.core_type<tc>, window_params = [{transform_indices = @transform_0, window_bounds = array<i64: 8, 128>}, {pipeline_mode = #tpu.pipeline_mode<synchronous>, transform_indices = @transform_1, window_bounds = array<i64: 8, 8>}, {pipeline_mode = #tpu.pipeline_mode<synchronous>, transform_indices = @transform_2, window_bounds = array<i64: 8, 8>}, {pipeline_mode = #tpu.pipeline_mode<synchronous>, transform_indices = @transform_3, window_bounds = array<i64: 8, 1>}, {pipeline_mode = #tpu.pipeline_mode<synchronous>, transform_indices = @transform_4, window_bounds = array<i64: 8, 8>}, {pipeline_mode = #tpu.pipeline_mode<synchronous>, transform_indices = @transform_5, window_bounds = array<i64: 8, 8>}, {pipeline_mode = #tpu.pipeline_mode<synchronous>, transform_indices = @transform_6, window_bounds = array<i64: 8, 1>}, {pipeline_mode = #tpu.pipeline_mode<synchronous>, transform_indices = @transform_7, window_bounds = array<i64: 8, 8>}, {pipeline_mode = #tpu.pipeline_mode<synchronous>, transform_indices = @transform_8, window_bounds = array<i64: 8, 1>}, {pipeline_mode = #tpu.pipeline_mode<synchronous>, transform_indices = @transform_9, window_bounds = array<i64: 8, 8>}, {pipeline_mode = #tpu.pipeline_mode<synchronous>, transform_indices = @transform_10, window_bounds = array<i64: 8, 8>}, {pipeline_mode = #tpu.pipeline_mode<synchronous>, transform_indices = @transform_11, window_bounds = array<i64: 8, 1>}, {pipeline_mode = #tpu.pipeline_mode<synchronous>, transform_indices = @transform_12, window_bounds = array<i64: 8, 8>}, {pipeline_mode = #tpu.pipeline_mode<synchronous>, transform_indices = @transform_13, window_bounds = array<i64: 8, 8>}, {pipeline_mode = #tpu.pipeline_mode<synchronous>, transform_indices = @transform_14, window_bounds = array<i64: 8, 1>}, {pipeline_mode = #tpu.pipeline_mode<synchronous>, transform_indices = @transform_15, window_bounds = array<i64: 8, 8>}, {pipeline_mode = #tpu.pipeline_mode<synchronous>, transform_indices = @transform_16, window_bounds = array<i64: 8, 1>}, {pipeline_mode = #tpu.pipeline_mode<synchronous>, transform_indices = @transform_17, window_bounds = array<i64: 8, 8>}, {pipeline_mode = #tpu.pipeline_mode<synchronous>, transform_indices = @transform_18, window_bounds = array<i64: 8, 8>}, {pipeline_mode = #tpu.pipeline_mode<synchronous>, transform_indices = @transform_19, window_bounds = array<i64: 8, 1>}, {pipeline_mode = #tpu.pipeline_mode<synchronous>, transform_indices = @transform_20, window_bounds = array<i64: 8, 8>}, {pipeline_mode = #tpu.pipeline_mode<synchronous>, transform_indices = @transform_21, window_bounds = array<i64: 8, 8>}, {pipeline_mode = #tpu.pipeline_mode<synchronous>, transform_indices = @transform_22, window_bounds = array<i64: 8, 1>}, {pipeline_mode = #tpu.pipeline_mode<synchronous>, transform_indices = @transform_23, window_bounds = array<i64: 8, 8>}, {pipeline_mode = #tpu.pipeline_mode<synchronous>, transform_indices = @transform_24, window_bounds = array<i64: 8, 1>}, {pipeline_mode = #tpu.pipeline_mode<synchronous>, transform_indices = @transform_25, window_bounds = array<i64: 8, 8>}, {pipeline_mode = #tpu.pipeline_mode<synchronous>, transform_indices = @transform_26, window_bounds = array<i64: 8, 1>}, {transform_indices = @transform_27, window_bounds = array<i64: 8, 128>}]} {
    %c0 = arith.constant 0 : index
    %c0_0 = arith.constant 0 : index
    %0 = vector.load %arg1[%c0, %c0_0] : memref<8x128xf32, #tpu.memory_space<vmem>>, vector<8x128xf32>
    %c0_1 = arith.constant 0 : index
    %c0_2 = arith.constant 0 : index
    %1 = vector.load %arg2[%c0_1, %c0_2] : memref<8x8xbf16, #tpu.memory_space<vmem>>, vector<8x8xbf16>
    %c0_3 = arith.constant 0 : index
    %c0_4 = arith.constant 0 : index
    %2 = vector.load %arg3[%c0_3, %c0_4] : memref<8x8xbf16, #tpu.memory_space<vmem>>, vector<8x8xbf16>
    %c0_5 = arith.constant 0 : index
    %c0_6 = arith.constant 0 : index
    %3 = vector.load %arg4[%c0_5, %c0_6] : memref<8x1xf32, #tpu.memory_space<vmem>>, vector<8x1xf32>
    %c0_7 = arith.constant 0 : index
    %c0_8 = arith.constant 0 : index
    %4 = vector.load %arg5[%c0_7, %c0_8] : memref<8x8xbf16, #tpu.memory_space<vmem>>, vector<8x8xbf16>
    %c0_9 = arith.constant 0 : index
    %c0_10 = arith.constant 0 : index
    %5 = vector.load %arg6[%c0_9, %c0_10] : memref<8x8xbf16, #tpu.memory_space<vmem>>, vector<8x8xbf16>
    %c0_11 = arith.constant 0 : index
    %c0_12 = arith.constant 0 : index
    %6 = vector.load %arg7[%c0_11, %c0_12] : memref<8x1xf32, #tpu.memory_space<vmem>>, vector<8x1xf32>
    %7 = tpu.iota {dimensions = array<i32: 1>} : vector<1x128xi32>
    %c16_i32 = arith.constant 16 : i32
    %c0_i32 = arith.constant 0 : i32
    %8 = arith.cmpi eq, %c16_i32, %c0_i32 : i32
    %c1_i32 = arith.constant 1 : i32
    %9 = arith.select %8, %c1_i32, %c16_i32 : i32
    %10 = vector.broadcast %9 : i32 to vector<1x128xi32>
    %11 = arith.remsi %7, %10 : vector<1x128xi32>
    %c0_i32_13 = arith.constant 0 : i32
    %12 = vector.broadcast %c0_i32_13 : i32 to vector<1x128xi32>
    %13 = arith.cmpi ne, %11, %12 : vector<1x128xi32>
    %c0_i32_14 = arith.constant 0 : i32
    %14 = vector.broadcast %c0_i32_14 : i32 to vector<1x128xi32>
    %15 = arith.cmpi slt, %11, %14 : vector<1x128xi32>
    %c0_i32_15 = arith.constant 0 : i32
    %16 = arith.cmpi slt, %9, %c0_i32_15 : i32
    %17 = vector.broadcast %16 : i1 to vector<1x128xi1>
    %18 = vector.broadcast %17 : vector<1x128xi1> to vector<1x128xi1>
    %19 = arith.xori %15, %18 : vector<1x128xi1>
    %20 = arith.andi %19, %13 : vector<1x128xi1>
    %21 = vector.broadcast %9 : i32 to vector<1x128xi32>
    %22 = arith.addi %11, %21 : vector<1x128xi32>
    %23 = arith.select %20, %22, %11 : vector<1x128xi1>, vector<1x128xi32>
    %c1_i32_16 = arith.constant 1 : i32
    %24 = tpu.dynamic_rotate %0 by %c1_i32_16 dim 1 : vector<8x128xf32>, i32 -> vector<8x128xf32>
    %c-1_i32 = arith.constant -1 : i32
    %25 = vector.broadcast %c-1_i32 : i32 to vector<1x128xi32>
    %26 = arith.addi %23, %25 : vector<1x128xi32>
    %c0_i32_17 = arith.constant 0 : i32
    %27 = vector.broadcast %c0_i32_17 : i32 to vector<1x128xi32>
    %28 = arith.cmpi sge, %26, %27 : vector<1x128xi32>
    %c-1_i32_18 = arith.constant -1 : i32
    %29 = vector.broadcast %c-1_i32_18 : i32 to vector<1x128xi32>
    %30 = arith.addi %23, %29 : vector<1x128xi32>
    %c16_i32_19 = arith.constant 16 : i32
    %31 = vector.broadcast %c16_i32_19 : i32 to vector<1x128xi32>
    %32 = arith.cmpi slt, %30, %31 : vector<1x128xi32>
    %33 = arith.andi %28, %32 : vector<1x128xi1>
    %cst = arith.constant 0.000000e+00 : f32
    %34 = vector.shape_cast %33 : vector<1x128xi1> to vector<1x128xi1>
    %35 = vector.broadcast %34 : vector<1x128xi1> to vector<8x128xi1>
    %36 = vector.broadcast %cst : f32 to vector<8x128xf32>
    %37 = arith.select %35, %24, %36 : vector<8x128xi1>, vector<8x128xf32>
    %38 = arith.truncf %37 : vector<8x128xf32> to vector<8x128xbf16>
    %cst_20 = arith.constant dense<0.000000e+00> : vector<8x128xf32>
    %39 = tpu.matmul %1, %38, %cst_20 {dimension_numbers = #tpu.dot_dimension_numbers<[1], [0], [0], [1], [0, 0, 1, 1], [], []>} : vector<8x8xbf16>, vector<8x128xbf16>, vector<8x128xf32> -> vector<8x128xf32>
    %40 = arith.truncf %0 : vector<8x128xf32> to vector<8x128xbf16>
    %cst_21 = arith.constant dense<0.000000e+00> : vector<8x128xf32>
    %41 = tpu.matmul %2, %40, %cst_21 {dimension_numbers = #tpu.dot_dimension_numbers<[1], [0], [0], [1], [0, 0, 1, 1], [], []>} : vector<8x8xbf16>, vector<8x128xbf16>, vector<8x128xf32> -> vector<8x128xf32>
    %42 = arith.addf %39, %41 : vector<8x128xf32>
    %43 = vector.broadcast %3 : vector<8x1xf32> to vector<8x128xf32>
    %44 = arith.addf %42, %43 : vector<8x128xf32>
    %cst_22 = arith.constant 0.000000e+00 : f32
    %45 = vector.broadcast %cst_22 : f32 to vector<8x128xf32>
    %46 = arith.maximumf %44, %45 : vector<8x128xf32>
    %47 = tpu.iota {dimensions = array<i32: 1>} : vector<1x128xi32>
    %c16_i32_23 = arith.constant 16 : i32
    %c0_i32_24 = arith.constant 0 : i32
    %48 = arith.cmpi eq, %c16_i32_23, %c0_i32_24 : i32
    %c1_i32_25 = arith.constant 1 : i32
    %49 = arith.select %48, %c1_i32_25, %c16_i32_23 : i32
    %50 = vector.broadcast %49 : i32 to vector<1x128xi32>
    %51 = arith.remsi %47, %50 : vector<1x128xi32>
    %c0_i32_26 = arith.constant 0 : i32
    %52 = vector.broadcast %c0_i32_26 : i32 to vector<1x128xi32>
    %53 = arith.cmpi ne, %51, %52 : vector<1x128xi32>
    %c0_i32_27 = arith.constant 0 : i32
    %54 = vector.broadcast %c0_i32_27 : i32 to vector<1x128xi32>
    %55 = arith.cmpi slt, %51, %54 : vector<1x128xi32>
    %c0_i32_28 = arith.constant 0 : i32
    %56 = arith.cmpi slt, %49, %c0_i32_28 : i32
    %57 = vector.broadcast %56 : i1 to vector<1x128xi1>
    %58 = vector.broadcast %57 : vector<1x128xi1> to vector<1x128xi1>
    %59 = arith.xori %55, %58 : vector<1x128xi1>
    %60 = arith.andi %59, %53 : vector<1x128xi1>
    %61 = vector.broadcast %49 : i32 to vector<1x128xi32>
    %62 = arith.addi %51, %61 : vector<1x128xi32>
    %63 = arith.select %60, %62, %51 : vector<1x128xi1>, vector<1x128xi32>
    %c1_i32_29 = arith.constant 1 : i32
    %64 = tpu.dynamic_rotate %46 by %c1_i32_29 dim 1 : vector<8x128xf32>, i32 -> vector<8x128xf32>
    %c-1_i32_30 = arith.constant -1 : i32
    %65 = vector.broadcast %c-1_i32_30 : i32 to vector<1x128xi32>
    %66 = arith.addi %63, %65 : vector<1x128xi32>
    %c0_i32_31 = arith.constant 0 : i32
    %67 = vector.broadcast %c0_i32_31 : i32 to vector<1x128xi32>
    %68 = arith.cmpi sge, %66, %67 : vector<1x128xi32>
    %c-1_i32_32 = arith.constant -1 : i32
    %69 = vector.broadcast %c-1_i32_32 : i32 to vector<1x128xi32>
    %70 = arith.addi %63, %69 : vector<1x128xi32>
    %c16_i32_33 = arith.constant 16 : i32
    %71 = vector.broadcast %c16_i32_33 : i32 to vector<1x128xi32>
    %72 = arith.cmpi slt, %70, %71 : vector<1x128xi32>
    %73 = arith.andi %68, %72 : vector<1x128xi1>
    %cst_34 = arith.constant 0.000000e+00 : f32
    %74 = vector.shape_cast %73 : vector<1x128xi1> to vector<1x128xi1>
    %75 = vector.broadcast %74 : vector<1x128xi1> to vector<8x128xi1>
    %76 = vector.broadcast %cst_34 : f32 to vector<8x128xf32>
    %77 = arith.select %75, %64, %76 : vector<8x128xi1>, vector<8x128xf32>
    %78 = arith.truncf %77 : vector<8x128xf32> to vector<8x128xbf16>
    %cst_35 = arith.constant dense<0.000000e+00> : vector<8x128xf32>
    %79 = tpu.matmul %4, %78, %cst_35 {dimension_numbers = #tpu.dot_dimension_numbers<[1], [0], [0], [1], [0, 0, 1, 1], [], []>} : vector<8x8xbf16>, vector<8x128xbf16>, vector<8x128xf32> -> vector<8x128xf32>
    %80 = arith.truncf %46 : vector<8x128xf32> to vector<8x128xbf16>
    %cst_36 = arith.constant dense<0.000000e+00> : vector<8x128xf32>
    %81 = tpu.matmul %5, %80, %cst_36 {dimension_numbers = #tpu.dot_dimension_numbers<[1], [0], [0], [1], [0, 0, 1, 1], [], []>} : vector<8x8xbf16>, vector<8x128xbf16>, vector<8x128xf32> -> vector<8x128xf32>
    %82 = arith.addf %79, %81 : vector<8x128xf32>
    %83 = vector.broadcast %6 : vector<8x1xf32> to vector<8x128xf32>
    %84 = arith.addf %82, %83 : vector<8x128xf32>
    %cst_37 = arith.constant 0.000000e+00 : f32
    %85 = vector.broadcast %cst_37 : f32 to vector<8x128xf32>
    %86 = arith.maximumf %84, %85 : vector<8x128xf32>
    %c0_38 = arith.constant 0 : index
    %c0_39 = arith.constant 0 : index
    %87 = vector.load %arg8[%c0_38, %c0_39] : memref<8x8xbf16, #tpu.memory_space<vmem>>, vector<8x8xbf16>
    %c0_40 = arith.constant 0 : index
    %c0_41 = arith.constant 0 : index
    %88 = vector.load %arg9[%c0_40, %c0_41] : memref<8x1xf32, #tpu.memory_space<vmem>>, vector<8x1xf32>
    %89 = arith.truncf %0 : vector<8x128xf32> to vector<8x128xbf16>
    %cst_42 = arith.constant dense<0.000000e+00> : vector<8x128xf32>
    %90 = tpu.matmul %87, %89, %cst_42 {dimension_numbers = #tpu.dot_dimension_numbers<[1], [0], [0], [1], [0, 0, 1, 1], [], []>} : vector<8x8xbf16>, vector<8x128xbf16>, vector<8x128xf32> -> vector<8x128xf32>
    %91 = vector.broadcast %88 : vector<8x1xf32> to vector<8x128xf32>
    %92 = arith.addf %90, %91 : vector<8x128xf32>
    %93 = arith.addf %86, %92 : vector<8x128xf32>
    %cst_43 = arith.constant 0.000000e+00 : f32
    %94 = vector.broadcast %cst_43 : f32 to vector<8x128xf32>
    %95 = arith.maximumf %93, %94 : vector<8x128xf32>
    %c0_44 = arith.constant 0 : index
    %c0_45 = arith.constant 0 : index
    %96 = vector.load %arg10[%c0_44, %c0_45] : memref<8x8xbf16, #tpu.memory_space<vmem>>, vector<8x8xbf16>
    %c0_46 = arith.constant 0 : index
    %c0_47 = arith.constant 0 : index
    %97 = vector.load %arg11[%c0_46, %c0_47] : memref<8x8xbf16, #tpu.memory_space<vmem>>, vector<8x8xbf16>
    %c0_48 = arith.constant 0 : index
    %c0_49 = arith.constant 0 : index
    %98 = vector.load %arg12[%c0_48, %c0_49] : memref<8x1xf32, #tpu.memory_space<vmem>>, vector<8x1xf32>
    %c0_50 = arith.constant 0 : index
    %c0_51 = arith.constant 0 : index
    %99 = vector.load %arg13[%c0_50, %c0_51] : memref<8x8xbf16, #tpu.memory_space<vmem>>, vector<8x8xbf16>
    %c0_52 = arith.constant 0 : index
    %c0_53 = arith.constant 0 : index
    %100 = vector.load %arg14[%c0_52, %c0_53] : memref<8x8xbf16, #tpu.memory_space<vmem>>, vector<8x8xbf16>
    %c0_54 = arith.constant 0 : index
    %c0_55 = arith.constant 0 : index
    %101 = vector.load %arg15[%c0_54, %c0_55] : memref<8x1xf32, #tpu.memory_space<vmem>>, vector<8x1xf32>
    %102 = tpu.iota {dimensions = array<i32: 1>} : vector<1x128xi32>
    %c16_i32_56 = arith.constant 16 : i32
    %c0_i32_57 = arith.constant 0 : i32
    %103 = arith.cmpi eq, %c16_i32_56, %c0_i32_57 : i32
    %c1_i32_58 = arith.constant 1 : i32
    %104 = arith.select %103, %c1_i32_58, %c16_i32_56 : i32
    %105 = vector.broadcast %104 : i32 to vector<1x128xi32>
    %106 = arith.remsi %102, %105 : vector<1x128xi32>
    %c0_i32_59 = arith.constant 0 : i32
    %107 = vector.broadcast %c0_i32_59 : i32 to vector<1x128xi32>
    %108 = arith.cmpi ne, %106, %107 : vector<1x128xi32>
    %c0_i32_60 = arith.constant 0 : i32
    %109 = vector.broadcast %c0_i32_60 : i32 to vector<1x128xi32>
    %110 = arith.cmpi slt, %106, %109 : vector<1x128xi32>
    %c0_i32_61 = arith.constant 0 : i32
    %111 = arith.cmpi slt, %104, %c0_i32_61 : i32
    %112 = vector.broadcast %111 : i1 to vector<1x128xi1>
    %113 = vector.broadcast %112 : vector<1x128xi1> to vector<1x128xi1>
    %114 = arith.xori %110, %113 : vector<1x128xi1>
    %115 = arith.andi %114, %108 : vector<1x128xi1>
    %116 = vector.broadcast %104 : i32 to vector<1x128xi32>
    %117 = arith.addi %106, %116 : vector<1x128xi32>
    %118 = arith.select %115, %117, %106 : vector<1x128xi1>, vector<1x128xi32>
    %c2_i32 = arith.constant 2 : i32
    %119 = tpu.dynamic_rotate %95 by %c2_i32 dim 1 : vector<8x128xf32>, i32 -> vector<8x128xf32>
    %c-2_i32 = arith.constant -2 : i32
    %120 = vector.broadcast %c-2_i32 : i32 to vector<1x128xi32>
    %121 = arith.addi %118, %120 : vector<1x128xi32>
    %c0_i32_62 = arith.constant 0 : i32
    %122 = vector.broadcast %c0_i32_62 : i32 to vector<1x128xi32>
    %123 = arith.cmpi sge, %121, %122 : vector<1x128xi32>
    %c-2_i32_63 = arith.constant -2 : i32
    %124 = vector.broadcast %c-2_i32_63 : i32 to vector<1x128xi32>
    %125 = arith.addi %118, %124 : vector<1x128xi32>
    %c16_i32_64 = arith.constant 16 : i32
    %126 = vector.broadcast %c16_i32_64 : i32 to vector<1x128xi32>
    %127 = arith.cmpi slt, %125, %126 : vector<1x128xi32>
    %128 = arith.andi %123, %127 : vector<1x128xi1>
    %cst_65 = arith.constant 0.000000e+00 : f32
    %129 = vector.shape_cast %128 : vector<1x128xi1> to vector<1x128xi1>
    %130 = vector.broadcast %129 : vector<1x128xi1> to vector<8x128xi1>
    %131 = vector.broadcast %cst_65 : f32 to vector<8x128xf32>
    %132 = arith.select %130, %119, %131 : vector<8x128xi1>, vector<8x128xf32>
    %133 = arith.truncf %132 : vector<8x128xf32> to vector<8x128xbf16>
    %cst_66 = arith.constant dense<0.000000e+00> : vector<8x128xf32>
    %134 = tpu.matmul %96, %133, %cst_66 {dimension_numbers = #tpu.dot_dimension_numbers<[1], [0], [0], [1], [0, 0, 1, 1], [], []>} : vector<8x8xbf16>, vector<8x128xbf16>, vector<8x128xf32> -> vector<8x128xf32>
    %135 = arith.truncf %95 : vector<8x128xf32> to vector<8x128xbf16>
    %cst_67 = arith.constant dense<0.000000e+00> : vector<8x128xf32>
    %136 = tpu.matmul %97, %135, %cst_67 {dimension_numbers = #tpu.dot_dimension_numbers<[1], [0], [0], [1], [0, 0, 1, 1], [], []>} : vector<8x8xbf16>, vector<8x128xbf16>, vector<8x128xf32> -> vector<8x128xf32>
    %137 = arith.addf %134, %136 : vector<8x128xf32>
    %138 = vector.broadcast %98 : vector<8x1xf32> to vector<8x128xf32>
    %139 = arith.addf %137, %138 : vector<8x128xf32>
    %cst_68 = arith.constant 0.000000e+00 : f32
    %140 = vector.broadcast %cst_68 : f32 to vector<8x128xf32>
    %141 = arith.maximumf %139, %140 : vector<8x128xf32>
    %142 = tpu.iota {dimensions = array<i32: 1>} : vector<1x128xi32>
    %c16_i32_69 = arith.constant 16 : i32
    %c0_i32_70 = arith.constant 0 : i32
    %143 = arith.cmpi eq, %c16_i32_69, %c0_i32_70 : i32
    %c1_i32_71 = arith.constant 1 : i32
    %144 = arith.select %143, %c1_i32_71, %c16_i32_69 : i32
    %145 = vector.broadcast %144 : i32 to vector<1x128xi32>
    %146 = arith.remsi %142, %145 : vector<1x128xi32>
    %c0_i32_72 = arith.constant 0 : i32
    %147 = vector.broadcast %c0_i32_72 : i32 to vector<1x128xi32>
    %148 = arith.cmpi ne, %146, %147 : vector<1x128xi32>
    %c0_i32_73 = arith.constant 0 : i32
    %149 = vector.broadcast %c0_i32_73 : i32 to vector<1x128xi32>
    %150 = arith.cmpi slt, %146, %149 : vector<1x128xi32>
    %c0_i32_74 = arith.constant 0 : i32
    %151 = arith.cmpi slt, %144, %c0_i32_74 : i32
    %152 = vector.broadcast %151 : i1 to vector<1x128xi1>
    %153 = vector.broadcast %152 : vector<1x128xi1> to vector<1x128xi1>
    %154 = arith.xori %150, %153 : vector<1x128xi1>
    %155 = arith.andi %154, %148 : vector<1x128xi1>
    %156 = vector.broadcast %144 : i32 to vector<1x128xi32>
    %157 = arith.addi %146, %156 : vector<1x128xi32>
    %158 = arith.select %155, %157, %146 : vector<1x128xi1>, vector<1x128xi32>
    %c2_i32_75 = arith.constant 2 : i32
    %159 = tpu.dynamic_rotate %141 by %c2_i32_75 dim 1 : vector<8x128xf32>, i32 -> vector<8x128xf32>
    %c-2_i32_76 = arith.constant -2 : i32
    %160 = vector.broadcast %c-2_i32_76 : i32 to vector<1x128xi32>
    %161 = arith.addi %158, %160 : vector<1x128xi32>
    %c0_i32_77 = arith.constant 0 : i32
    %162 = vector.broadcast %c0_i32_77 : i32 to vector<1x128xi32>
    %163 = arith.cmpi sge, %161, %162 : vector<1x128xi32>
    %c-2_i32_78 = arith.constant -2 : i32
    %164 = vector.broadcast %c-2_i32_78 : i32 to vector<1x128xi32>
    %165 = arith.addi %158, %164 : vector<1x128xi32>
    %c16_i32_79 = arith.constant 16 : i32
    %166 = vector.broadcast %c16_i32_79 : i32 to vector<1x128xi32>
    %167 = arith.cmpi slt, %165, %166 : vector<1x128xi32>
    %168 = arith.andi %163, %167 : vector<1x128xi1>
    %cst_80 = arith.constant 0.000000e+00 : f32
    %169 = vector.shape_cast %168 : vector<1x128xi1> to vector<1x128xi1>
    %170 = vector.broadcast %169 : vector<1x128xi1> to vector<8x128xi1>
    %171 = vector.broadcast %cst_80 : f32 to vector<8x128xf32>
    %172 = arith.select %170, %159, %171 : vector<8x128xi1>, vector<8x128xf32>
    %173 = arith.truncf %172 : vector<8x128xf32> to vector<8x128xbf16>
    %cst_81 = arith.constant dense<0.000000e+00> : vector<8x128xf32>
    %174 = tpu.matmul %99, %173, %cst_81 {dimension_numbers = #tpu.dot_dimension_numbers<[1], [0], [0], [1], [0, 0, 1, 1], [], []>} : vector<8x8xbf16>, vector<8x128xbf16>, vector<8x128xf32> -> vector<8x128xf32>
    %175 = arith.truncf %141 : vector<8x128xf32> to vector<8x128xbf16>
    %cst_82 = arith.constant dense<0.000000e+00> : vector<8x128xf32>
    %176 = tpu.matmul %100, %175, %cst_82 {dimension_numbers = #tpu.dot_dimension_numbers<[1], [0], [0], [1], [0, 0, 1, 1], [], []>} : vector<8x8xbf16>, vector<8x128xbf16>, vector<8x128xf32> -> vector<8x128xf32>
    %177 = arith.addf %174, %176 : vector<8x128xf32>
    %178 = vector.broadcast %101 : vector<8x1xf32> to vector<8x128xf32>
    %179 = arith.addf %177, %178 : vector<8x128xf32>
    %cst_83 = arith.constant 0.000000e+00 : f32
    %180 = vector.broadcast %cst_83 : f32 to vector<8x128xf32>
    %181 = arith.maximumf %179, %180 : vector<8x128xf32>
    %c0_84 = arith.constant 0 : index
    %c0_85 = arith.constant 0 : index
    %182 = vector.load %arg16[%c0_84, %c0_85] : memref<8x8xbf16, #tpu.memory_space<vmem>>, vector<8x8xbf16>
    %c0_86 = arith.constant 0 : index
    %c0_87 = arith.constant 0 : index
    %183 = vector.load %arg17[%c0_86, %c0_87] : memref<8x1xf32, #tpu.memory_space<vmem>>, vector<8x1xf32>
    %184 = arith.truncf %95 : vector<8x128xf32> to vector<8x128xbf16>
    %cst_88 = arith.constant dense<0.000000e+00> : vector<8x128xf32>
    %185 = tpu.matmul %182, %184, %cst_88 {dimension_numbers = #tpu.dot_dimension_numbers<[1], [0], [0], [1], [0, 0, 1, 1], [], []>} : vector<8x8xbf16>, vector<8x128xbf16>, vector<8x128xf32> -> vector<8x128xf32>
    %186 = vector.broadcast %183 : vector<8x1xf32> to vector<8x128xf32>
    %187 = arith.addf %185, %186 : vector<8x128xf32>
    %188 = arith.addf %181, %187 : vector<8x128xf32>
    %cst_89 = arith.constant 0.000000e+00 : f32
    %189 = vector.broadcast %cst_89 : f32 to vector<8x128xf32>
    %190 = arith.maximumf %188, %189 : vector<8x128xf32>
    %c0_90 = arith.constant 0 : index
    %c0_91 = arith.constant 0 : index
    %191 = vector.load %arg18[%c0_90, %c0_91] : memref<8x8xbf16, #tpu.memory_space<vmem>>, vector<8x8xbf16>
    %c0_92 = arith.constant 0 : index
    %c0_93 = arith.constant 0 : index
    %192 = vector.load %arg19[%c0_92, %c0_93] : memref<8x8xbf16, #tpu.memory_space<vmem>>, vector<8x8xbf16>
    %c0_94 = arith.constant 0 : index
    %c0_95 = arith.constant 0 : index
    %193 = vector.load %arg20[%c0_94, %c0_95] : memref<8x1xf32, #tpu.memory_space<vmem>>, vector<8x1xf32>
    %c0_96 = arith.constant 0 : index
    %c0_97 = arith.constant 0 : index
    %194 = vector.load %arg21[%c0_96, %c0_97] : memref<8x8xbf16, #tpu.memory_space<vmem>>, vector<8x8xbf16>
    %c0_98 = arith.constant 0 : index
    %c0_99 = arith.constant 0 : index
    %195 = vector.load %arg22[%c0_98, %c0_99] : memref<8x8xbf16, #tpu.memory_space<vmem>>, vector<8x8xbf16>
    %c0_100 = arith.constant 0 : index
    %c0_101 = arith.constant 0 : index
    %196 = vector.load %arg23[%c0_100, %c0_101] : memref<8x1xf32, #tpu.memory_space<vmem>>, vector<8x1xf32>
    %197 = tpu.iota {dimensions = array<i32: 1>} : vector<1x128xi32>
    %c16_i32_102 = arith.constant 16 : i32
    %c0_i32_103 = arith.constant 0 : i32
    %198 = arith.cmpi eq, %c16_i32_102, %c0_i32_103 : i32
    %c1_i32_104 = arith.constant 1 : i32
    %199 = arith.select %198, %c1_i32_104, %c16_i32_102 : i32
    %200 = vector.broadcast %199 : i32 to vector<1x128xi32>
    %201 = arith.remsi %197, %200 : vector<1x128xi32>
    %c0_i32_105 = arith.constant 0 : i32
    %202 = vector.broadcast %c0_i32_105 : i32 to vector<1x128xi32>
    %203 = arith.cmpi ne, %201, %202 : vector<1x128xi32>
    %c0_i32_106 = arith.constant 0 : i32
    %204 = vector.broadcast %c0_i32_106 : i32 to vector<1x128xi32>
    %205 = arith.cmpi slt, %201, %204 : vector<1x128xi32>
    %c0_i32_107 = arith.constant 0 : i32
    %206 = arith.cmpi slt, %199, %c0_i32_107 : i32
    %207 = vector.broadcast %206 : i1 to vector<1x128xi1>
    %208 = vector.broadcast %207 : vector<1x128xi1> to vector<1x128xi1>
    %209 = arith.xori %205, %208 : vector<1x128xi1>
    %210 = arith.andi %209, %203 : vector<1x128xi1>
    %211 = vector.broadcast %199 : i32 to vector<1x128xi32>
    %212 = arith.addi %201, %211 : vector<1x128xi32>
    %213 = arith.select %210, %212, %201 : vector<1x128xi1>, vector<1x128xi32>
    %c4_i32 = arith.constant 4 : i32
    %214 = tpu.dynamic_rotate %190 by %c4_i32 dim 1 : vector<8x128xf32>, i32 -> vector<8x128xf32>
    %c-4_i32 = arith.constant -4 : i32
    %215 = vector.broadcast %c-4_i32 : i32 to vector<1x128xi32>
    %216 = arith.addi %213, %215 : vector<1x128xi32>
    %c0_i32_108 = arith.constant 0 : i32
    %217 = vector.broadcast %c0_i32_108 : i32 to vector<1x128xi32>
    %218 = arith.cmpi sge, %216, %217 : vector<1x128xi32>
    %c-4_i32_109 = arith.constant -4 : i32
    %219 = vector.broadcast %c-4_i32_109 : i32 to vector<1x128xi32>
    %220 = arith.addi %213, %219 : vector<1x128xi32>
    %c16_i32_110 = arith.constant 16 : i32
    %221 = vector.broadcast %c16_i32_110 : i32 to vector<1x128xi32>
    %222 = arith.cmpi slt, %220, %221 : vector<1x128xi32>
    %223 = arith.andi %218, %222 : vector<1x128xi1>
    %cst_111 = arith.constant 0.000000e+00 : f32
    %224 = vector.shape_cast %223 : vector<1x128xi1> to vector<1x128xi1>
    %225 = vector.broadcast %224 : vector<1x128xi1> to vector<8x128xi1>
    %226 = vector.broadcast %cst_111 : f32 to vector<8x128xf32>
    %227 = arith.select %225, %214, %226 : vector<8x128xi1>, vector<8x128xf32>
    %228 = arith.truncf %227 : vector<8x128xf32> to vector<8x128xbf16>
    %cst_112 = arith.constant dense<0.000000e+00> : vector<8x128xf32>
    %229 = tpu.matmul %191, %228, %cst_112 {dimension_numbers = #tpu.dot_dimension_numbers<[1], [0], [0], [1], [0, 0, 1, 1], [], []>} : vector<8x8xbf16>, vector<8x128xbf16>, vector<8x128xf32> -> vector<8x128xf32>
    %230 = arith.truncf %190 : vector<8x128xf32> to vector<8x128xbf16>
    %cst_113 = arith.constant dense<0.000000e+00> : vector<8x128xf32>
    %231 = tpu.matmul %192, %230, %cst_113 {dimension_numbers = #tpu.dot_dimension_numbers<[1], [0], [0], [1], [0, 0, 1, 1], [], []>} : vector<8x8xbf16>, vector<8x128xbf16>, vector<8x128xf32> -> vector<8x128xf32>
    %232 = arith.addf %229, %231 : vector<8x128xf32>
    %233 = vector.broadcast %193 : vector<8x1xf32> to vector<8x128xf32>
    %234 = arith.addf %232, %233 : vector<8x128xf32>
    %cst_114 = arith.constant 0.000000e+00 : f32
    %235 = vector.broadcast %cst_114 : f32 to vector<8x128xf32>
    %236 = arith.maximumf %234, %235 : vector<8x128xf32>
    %237 = tpu.iota {dimensions = array<i32: 1>} : vector<1x128xi32>
    %c16_i32_115 = arith.constant 16 : i32
    %c0_i32_116 = arith.constant 0 : i32
    %238 = arith.cmpi eq, %c16_i32_115, %c0_i32_116 : i32
    %c1_i32_117 = arith.constant 1 : i32
    %239 = arith.select %238, %c1_i32_117, %c16_i32_115 : i32
    %240 = vector.broadcast %239 : i32 to vector<1x128xi32>
    %241 = arith.remsi %237, %240 : vector<1x128xi32>
    %c0_i32_118 = arith.constant 0 : i32
    %242 = vector.broadcast %c0_i32_118 : i32 to vector<1x128xi32>
    %243 = arith.cmpi ne, %241, %242 : vector<1x128xi32>
    %c0_i32_119 = arith.constant 0 : i32
    %244 = vector.broadcast %c0_i32_119 : i32 to vector<1x128xi32>
    %245 = arith.cmpi slt, %241, %244 : vector<1x128xi32>
    %c0_i32_120 = arith.constant 0 : i32
    %246 = arith.cmpi slt, %239, %c0_i32_120 : i32
    %247 = vector.broadcast %246 : i1 to vector<1x128xi1>
    %248 = vector.broadcast %247 : vector<1x128xi1> to vector<1x128xi1>
    %249 = arith.xori %245, %248 : vector<1x128xi1>
    %250 = arith.andi %249, %243 : vector<1x128xi1>
    %251 = vector.broadcast %239 : i32 to vector<1x128xi32>
    %252 = arith.addi %241, %251 : vector<1x128xi32>
    %253 = arith.select %250, %252, %241 : vector<1x128xi1>, vector<1x128xi32>
    %c4_i32_121 = arith.constant 4 : i32
    %254 = tpu.dynamic_rotate %236 by %c4_i32_121 dim 1 : vector<8x128xf32>, i32 -> vector<8x128xf32>
    %c-4_i32_122 = arith.constant -4 : i32
    %255 = vector.broadcast %c-4_i32_122 : i32 to vector<1x128xi32>
    %256 = arith.addi %253, %255 : vector<1x128xi32>
    %c0_i32_123 = arith.constant 0 : i32
    %257 = vector.broadcast %c0_i32_123 : i32 to vector<1x128xi32>
    %258 = arith.cmpi sge, %256, %257 : vector<1x128xi32>
    %c-4_i32_124 = arith.constant -4 : i32
    %259 = vector.broadcast %c-4_i32_124 : i32 to vector<1x128xi32>
    %260 = arith.addi %253, %259 : vector<1x128xi32>
    %c16_i32_125 = arith.constant 16 : i32
    %261 = vector.broadcast %c16_i32_125 : i32 to vector<1x128xi32>
    %262 = arith.cmpi slt, %260, %261 : vector<1x128xi32>
    %263 = arith.andi %258, %262 : vector<1x128xi1>
    %cst_126 = arith.constant 0.000000e+00 : f32
    %264 = vector.shape_cast %263 : vector<1x128xi1> to vector<1x128xi1>
    %265 = vector.broadcast %264 : vector<1x128xi1> to vector<8x128xi1>
    %266 = vector.broadcast %cst_126 : f32 to vector<8x128xf32>
    %267 = arith.select %265, %254, %266 : vector<8x128xi1>, vector<8x128xf32>
    %268 = arith.truncf %267 : vector<8x128xf32> to vector<8x128xbf16>
    %cst_127 = arith.constant dense<0.000000e+00> : vector<8x128xf32>
    %269 = tpu.matmul %194, %268, %cst_127 {dimension_numbers = #tpu.dot_dimension_numbers<[1], [0], [0], [1], [0, 0, 1, 1], [], []>} : vector<8x8xbf16>, vector<8x128xbf16>, vector<8x128xf32> -> vector<8x128xf32>
    %270 = arith.truncf %236 : vector<8x128xf32> to vector<8x128xbf16>
    %cst_128 = arith.constant dense<0.000000e+00> : vector<8x128xf32>
    %271 = tpu.matmul %195, %270, %cst_128 {dimension_numbers = #tpu.dot_dimension_numbers<[1], [0], [0], [1], [0, 0, 1, 1], [], []>} : vector<8x8xbf16>, vector<8x128xbf16>, vector<8x128xf32> -> vector<8x128xf32>
    %272 = arith.addf %269, %271 : vector<8x128xf32>
    %273 = vector.broadcast %196 : vector<8x1xf32> to vector<8x128xf32>
    %274 = arith.addf %272, %273 : vector<8x128xf32>
    %cst_129 = arith.constant 0.000000e+00 : f32
    %275 = vector.broadcast %cst_129 : f32 to vector<8x128xf32>
    %276 = arith.maximumf %274, %275 : vector<8x128xf32>
    %c0_130 = arith.constant 0 : index
    %c0_131 = arith.constant 0 : index
    %277 = vector.load %arg24[%c0_130, %c0_131] : memref<8x8xbf16, #tpu.memory_space<vmem>>, vector<8x8xbf16>
    %c0_132 = arith.constant 0 : index
    %c0_133 = arith.constant 0 : index
    %278 = vector.load %arg25[%c0_132, %c0_133] : memref<8x1xf32, #tpu.memory_space<vmem>>, vector<8x1xf32>
    %279 = arith.truncf %190 : vector<8x128xf32> to vector<8x128xbf16>
    %cst_134 = arith.constant dense<0.000000e+00> : vector<8x128xf32>
    %280 = tpu.matmul %277, %279, %cst_134 {dimension_numbers = #tpu.dot_dimension_numbers<[1], [0], [0], [1], [0, 0, 1, 1], [], []>} : vector<8x8xbf16>, vector<8x128xbf16>, vector<8x128xf32> -> vector<8x128xf32>
    %281 = vector.broadcast %278 : vector<8x1xf32> to vector<8x128xf32>
    %282 = arith.addf %280, %281 : vector<8x128xf32>
    %283 = arith.addf %276, %282 : vector<8x128xf32>
    %cst_135 = arith.constant 0.000000e+00 : f32
    %284 = vector.broadcast %cst_135 : f32 to vector<8x128xf32>
    %285 = arith.maximumf %283, %284 : vector<8x128xf32>
    %c0_136 = arith.constant 0 : index
    %c0_137 = arith.constant 0 : index
    %286 = vector.load %arg26[%c0_136, %c0_137] : memref<8x8xbf16, #tpu.memory_space<vmem>>, vector<8x8xbf16>
    %c0_138 = arith.constant 0 : index
    %c0_139 = arith.constant 0 : index
    %287 = vector.load %arg27[%c0_138, %c0_139] : memref<8x1xf32, #tpu.memory_space<vmem>>, vector<8x1xf32>
    %288 = arith.truncf %285 : vector<8x128xf32> to vector<8x128xbf16>
    %cst_140 = arith.constant dense<0.000000e+00> : vector<8x128xf32>
    %289 = tpu.matmul %286, %288, %cst_140 {dimension_numbers = #tpu.dot_dimension_numbers<[1], [0], [0], [1], [0, 0, 1, 1], [], []>} : vector<8x8xbf16>, vector<8x128xbf16>, vector<8x128xf32> -> vector<8x128xf32>
    %290 = vector.broadcast %287 : vector<8x1xf32> to vector<8x128xf32>
    %291 = arith.addf %289, %290 : vector<8x128xf32>
    %c0_141 = arith.constant 0 : index
    %c0_142 = arith.constant 0 : index
    %292 = vector.load %arg28[%c0_141, %c0_142] : memref<8x128xf32, #tpu.memory_space<vmem>>, vector<8x128xf32>
    tpu.vector_store %arg28[%c0_141, %c0_142], %291 {strides = array<i32>} : memref<8x128xf32, #tpu.memory_space<vmem>>, vector<8x128xf32>,
    return
  }
  func.func @transform_0(%arg0: i32) -> (i32, i32) {
    %c0_i32 = arith.constant 0 : i32
    %c0_i32_0 = arith.constant 0 : i32
    return %c0_i32, %arg0 : i32, i32
  }
  func.func @transform_1(%arg0: i32) -> (i32, i32) {
    %c0_i32 = arith.constant 0 : i32
    %c0_i32_0 = arith.constant 0 : i32
    %c0_i32_1 = arith.constant 0 : i32
    return %c0_i32, %c0_i32_0 : i32, i32
  }
  func.func @transform_2(%arg0: i32) -> (i32, i32) {
    %c0_i32 = arith.constant 0 : i32
    %c0_i32_0 = arith.constant 0 : i32
    %c0_i32_1 = arith.constant 0 : i32
    return %c0_i32, %c0_i32_0 : i32, i32
  }
  func.func @transform_3(%arg0: i32) -> (i32, i32) {
    %c0_i32 = arith.constant 0 : i32
    %c0_i32_0 = arith.constant 0 : i32
    %c0_i32_1 = arith.constant 0 : i32
    return %c0_i32, %c0_i32_0 : i32, i32
  }
  func.func @transform_4(%arg0: i32) -> (i32, i32) {
    %c0_i32 = arith.constant 0 : i32
    %c0_i32_0 = arith.constant 0 : i32
    %c0_i32_1 = arith.constant 0 : i32
    return %c0_i32, %c0_i32_0 : i32, i32
  }
  func.func @transform_5(%arg0: i32) -> (i32, i32) {
    %c0_i32 = arith.constant 0 : i32
    %c0_i32_0 = arith.constant 0 : i32
    %c0_i32_1 = arith.constant 0 : i32
    return %c0_i32, %c0_i32_0 : i32, i32
  }
  func.func @transform_6(%arg0: i32) -> (i32, i32) {
    %c0_i32 = arith.constant 0 : i32
    %c0_i32_0 = arith.constant 0 : i32
    %c0_i32_1 = arith.constant 0 : i32
    return %c0_i32, %c0_i32_0 : i32, i32
  }
  func.func @transform_7(%arg0: i32) -> (i32, i32) {
    %c0_i32 = arith.constant 0 : i32
    %c0_i32_0 = arith.constant 0 : i32
    %c0_i32_1 = arith.constant 0 : i32
    return %c0_i32, %c0_i32_0 : i32, i32
  }
  func.func @transform_8(%arg0: i32) -> (i32, i32) {
    %c0_i32 = arith.constant 0 : i32
    %c0_i32_0 = arith.constant 0 : i32
    %c0_i32_1 = arith.constant 0 : i32
    return %c0_i32, %c0_i32_0 : i32, i32
  }
  func.func @transform_9(%arg0: i32) -> (i32, i32) {
    %c0_i32 = arith.constant 0 : i32
    %c0_i32_0 = arith.constant 0 : i32
    %c0_i32_1 = arith.constant 0 : i32
    return %c0_i32, %c0_i32_0 : i32, i32
  }
  func.func @transform_10(%arg0: i32) -> (i32, i32) {
    %c0_i32 = arith.constant 0 : i32
    %c0_i32_0 = arith.constant 0 : i32
    %c0_i32_1 = arith.constant 0 : i32
    return %c0_i32, %c0_i32_0 : i32, i32
  }
  func.func @transform_11(%arg0: i32) -> (i32, i32) {
    %c0_i32 = arith.constant 0 : i32
    %c0_i32_0 = arith.constant 0 : i32
    %c0_i32_1 = arith.constant 0 : i32
    return %c0_i32, %c0_i32_0 : i32, i32
  }
  func.func @transform_12(%arg0: i32) -> (i32, i32) {
    %c0_i32 = arith.constant 0 : i32
    %c0_i32_0 = arith.constant 0 : i32
    %c0_i32_1 = arith.constant 0 : i32
    return %c0_i32, %c0_i32_0 : i32, i32
  }
  func.func @transform_13(%arg0: i32) -> (i32, i32) {
    %c0_i32 = arith.constant 0 : i32
    %c0_i32_0 = arith.constant 0 : i32
    %c0_i32_1 = arith.constant 0 : i32
    return %c0_i32, %c0_i32_0 : i32, i32
  }
  func.func @transform_14(%arg0: i32) -> (i32, i32) {
    %c0_i32 = arith.constant 0 : i32
    %c0_i32_0 = arith.constant 0 : i32
    %c0_i32_1 = arith.constant 0 : i32
    return %c0_i32, %c0_i32_0 : i32, i32
  }
  func.func @transform_15(%arg0: i32) -> (i32, i32) {
    %c0_i32 = arith.constant 0 : i32
    %c0_i32_0 = arith.constant 0 : i32
    %c0_i32_1 = arith.constant 0 : i32
    return %c0_i32, %c0_i32_0 : i32, i32
  }
  func.func @transform_16(%arg0: i32) -> (i32, i32) {
    %c0_i32 = arith.constant 0 : i32
    %c0_i32_0 = arith.constant 0 : i32
    %c0_i32_1 = arith.constant 0 : i32
    return %c0_i32, %c0_i32_0 : i32, i32
  }
  func.func @transform_17(%arg0: i32) -> (i32, i32) {
    %c0_i32 = arith.constant 0 : i32
    %c0_i32_0 = arith.constant 0 : i32
    %c0_i32_1 = arith.constant 0 : i32
    return %c0_i32, %c0_i32_0 : i32, i32
  }
  func.func @transform_18(%arg0: i32) -> (i32, i32) {
    %c0_i32 = arith.constant 0 : i32
    %c0_i32_0 = arith.constant 0 : i32
    %c0_i32_1 = arith.constant 0 : i32
    return %c0_i32, %c0_i32_0 : i32, i32
  }
  func.func @transform_19(%arg0: i32) -> (i32, i32) {
    %c0_i32 = arith.constant 0 : i32
    %c0_i32_0 = arith.constant 0 : i32
    %c0_i32_1 = arith.constant 0 : i32
    return %c0_i32, %c0_i32_0 : i32, i32
  }
  func.func @transform_20(%arg0: i32) -> (i32, i32) {
    %c0_i32 = arith.constant 0 : i32
    %c0_i32_0 = arith.constant 0 : i32
    %c0_i32_1 = arith.constant 0 : i32
    return %c0_i32, %c0_i32_0 : i32, i32
  }
  func.func @transform_21(%arg0: i32) -> (i32, i32) {
    %c0_i32 = arith.constant 0 : i32
    %c0_i32_0 = arith.constant 0 : i32
    %c0_i32_1 = arith.constant 0 : i32
    return %c0_i32, %c0_i32_0 : i32, i32
  }
  func.func @transform_22(%arg0: i32) -> (i32, i32) {
    %c0_i32 = arith.constant 0 : i32
    %c0_i32_0 = arith.constant 0 : i32
    %c0_i32_1 = arith.constant 0 : i32
    return %c0_i32, %c0_i32_0 : i32, i32
  }
  func.func @transform_23(%arg0: i32) -> (i32, i32) {
    %c0_i32 = arith.constant 0 : i32
    %c0_i32_0 = arith.constant 0 : i32
    %c0_i32_1 = arith.constant 0 : i32
    return %c0_i32, %c0_i32_0 : i32, i32
  }
  func.func @transform_24(%arg0: i32) -> (i32, i32) {
    %c0_i32 = arith.constant 0 : i32
    %c0_i32_0 = arith.constant 0 : i32
    %c0_i32_1 = arith.constant 0 : i32
    return %c0_i32, %c0_i32_0 : i32, i32
  }
  func.func @transform_25(%arg0: i32) -> (i32, i32) {
    %c0_i32 = arith.constant 0 : i32
    %c0_i32_0 = arith.constant 0 : i32
    %c0_i32_1 = arith.constant 0 : i32
    return %c0_i32, %c0_i32_0 : i32, i32
  }
  func.func @transform_26(%arg0: i32) -> (i32, i32) {
    %c0_i32 = arith.constant 0 : i32
    %c0_i32_0 = arith.constant 0 : i32
    %c0_i32_1 = arith.constant 0 : i32
    return %c0_i32, %c0_i32_0 : i32, i32
  }
  func.func @transform_27(%arg0: i32) -> (i32, i32) {
    %c0_i32 = arith.constant 0 : i32
    %c0_i32_0 = arith.constant 0 : i32
    return %c0_i32, %arg0 : i32, i32
  }
}

module attributes {stable_mosaic.version = 11 : i64} {
  func.func @kernel(%arg0: i32, %arg1: memref<8x128xf32, #tpu.memory_space<vmem>>, %arg2: memref<8x8xbf16, #tpu.memory_space<vmem>>, %arg3: memref<8x8xbf16, #tpu.memory_space<vmem>>, %arg4: memref<8x1xf32, #tpu.memory_space<vmem>>, %arg5: memref<8x8xbf16, #tpu.memory_space<vmem>>, %arg6: memref<8x8xbf16, #tpu.memory_space<vmem>>, %arg7: memref<8x1xf32, #tpu.memory_space<vmem>>, %arg8: memref<8x8xbf16, #tpu.memory_space<vmem>>, %arg9: memref<8x1xf32, #tpu.memory_space<vmem>>, %arg10: memref<8x8xbf16, #tpu.memory_space<vmem>>, %arg11: memref<8x8xbf16, #tpu.memory_space<vmem>>, %arg12: memref<8x1xf32, #tpu.memory_space<vmem>>, %arg13: memref<8x8xbf16, #tpu.memory_space<vmem>>, %arg14: memref<8x8xbf16, #tpu.memory_space<vmem>>, %arg15: memref<8x1xf32, #tpu.memory_space<vmem>>, %arg16: memref<8x8xbf16, #tpu.memory_space<vmem>>, %arg17: memref<8x1xf32, #tpu.memory_space<vmem>>, %arg18: memref<8x8xbf16, #tpu.memory_space<vmem>>, %arg19: memref<8x1xf32, #tpu.memory_space<vmem>>, %arg20: memref<8x128xf32, #tpu.memory_space<vmem>>) attributes {dimension_semantics = [#tpu.dimension_semantics<parallel>], iteration_bounds = array<i64: 1>, scalar_prefetch = 0 : i64, scratch_operands = 0 : i64, tpu.core_type = #tpu.core_type<tc>, window_params = [{transform_indices = @transform_0, window_bounds = array<i64: 8, 128>}, {pipeline_mode = #tpu.pipeline_mode<synchronous>, transform_indices = @transform_1, window_bounds = array<i64: 8, 8>}, {pipeline_mode = #tpu.pipeline_mode<synchronous>, transform_indices = @transform_2, window_bounds = array<i64: 8, 8>}, {pipeline_mode = #tpu.pipeline_mode<synchronous>, transform_indices = @transform_3, window_bounds = array<i64: 8, 1>}, {pipeline_mode = #tpu.pipeline_mode<synchronous>, transform_indices = @transform_4, window_bounds = array<i64: 8, 8>}, {pipeline_mode = #tpu.pipeline_mode<synchronous>, transform_indices = @transform_5, window_bounds = array<i64: 8, 8>}, {pipeline_mode = #tpu.pipeline_mode<synchronous>, transform_indices = @transform_6, window_bounds = array<i64: 8, 1>}, {pipeline_mode = #tpu.pipeline_mode<synchronous>, transform_indices = @transform_7, window_bounds = array<i64: 8, 8>}, {pipeline_mode = #tpu.pipeline_mode<synchronous>, transform_indices = @transform_8, window_bounds = array<i64: 8, 1>}, {pipeline_mode = #tpu.pipeline_mode<synchronous>, transform_indices = @transform_9, window_bounds = array<i64: 8, 8>}, {pipeline_mode = #tpu.pipeline_mode<synchronous>, transform_indices = @transform_10, window_bounds = array<i64: 8, 8>}, {pipeline_mode = #tpu.pipeline_mode<synchronous>, transform_indices = @transform_11, window_bounds = array<i64: 8, 1>}, {pipeline_mode = #tpu.pipeline_mode<synchronous>, transform_indices = @transform_12, window_bounds = array<i64: 8, 8>}, {pipeline_mode = #tpu.pipeline_mode<synchronous>, transform_indices = @transform_13, window_bounds = array<i64: 8, 8>}, {pipeline_mode = #tpu.pipeline_mode<synchronous>, transform_indices = @transform_14, window_bounds = array<i64: 8, 1>}, {pipeline_mode = #tpu.pipeline_mode<synchronous>, transform_indices = @transform_15, window_bounds = array<i64: 8, 8>}, {pipeline_mode = #tpu.pipeline_mode<synchronous>, transform_indices = @transform_16, window_bounds = array<i64: 8, 1>}, {pipeline_mode = #tpu.pipeline_mode<synchronous>, transform_indices = @transform_17, window_bounds = array<i64: 8, 8>}, {pipeline_mode = #tpu.pipeline_mode<synchronous>, transform_indices = @transform_18, window_bounds = array<i64: 8, 1>}, {transform_indices = @transform_19, window_bounds = array<i64: 8, 128>}]} {
    %c0 = arith.constant 0 : index
    %c0_0 = arith.constant 0 : index
    %0 = vector.load %arg1[%c0, %c0_0] : memref<8x128xf32, #tpu.memory_space<vmem>>, vector<8x128xf32>
    %c0_1 = arith.constant 0 : index
    %c0_2 = arith.constant 0 : index
    %1 = vector.load %arg2[%c0_1, %c0_2] : memref<8x8xbf16, #tpu.memory_space<vmem>>, vector<8x8xbf16>
    %c0_3 = arith.constant 0 : index
    %c0_4 = arith.constant 0 : index
    %2 = vector.load %arg3[%c0_3, %c0_4] : memref<8x8xbf16, #tpu.memory_space<vmem>>, vector<8x8xbf16>
    %c0_5 = arith.constant 0 : index
    %c0_6 = arith.constant 0 : index
    %3 = vector.load %arg4[%c0_5, %c0_6] : memref<8x1xf32, #tpu.memory_space<vmem>>, vector<8x1xf32>
    %c0_7 = arith.constant 0 : index
    %c0_8 = arith.constant 0 : index
    %4 = vector.load %arg5[%c0_7, %c0_8] : memref<8x8xbf16, #tpu.memory_space<vmem>>, vector<8x8xbf16>
    %c0_9 = arith.constant 0 : index
    %c0_10 = arith.constant 0 : index
    %5 = vector.load %arg6[%c0_9, %c0_10] : memref<8x8xbf16, #tpu.memory_space<vmem>>, vector<8x8xbf16>
    %c0_11 = arith.constant 0 : index
    %c0_12 = arith.constant 0 : index
    %6 = vector.load %arg7[%c0_11, %c0_12] : memref<8x1xf32, #tpu.memory_space<vmem>>, vector<8x1xf32>
    %7 = tpu.iota {dimensions = array<i32: 1>} : vector<1x128xi32>
    %c16_i32 = arith.constant 16 : i32
    %c0_i32 = arith.constant 0 : i32
    %8 = arith.cmpi eq, %c16_i32, %c0_i32 : i32
    %c1_i32 = arith.constant 1 : i32
    %9 = arith.select %8, %c1_i32, %c16_i32 : i32
    %10 = vector.broadcast %9 : i32 to vector<1x128xi32>
    %11 = arith.remsi %7, %10 : vector<1x128xi32>
    %c0_i32_13 = arith.constant 0 : i32
    %12 = vector.broadcast %c0_i32_13 : i32 to vector<1x128xi32>
    %13 = arith.cmpi ne, %11, %12 : vector<1x128xi32>
    %c0_i32_14 = arith.constant 0 : i32
    %14 = vector.broadcast %c0_i32_14 : i32 to vector<1x128xi32>
    %15 = arith.cmpi slt, %11, %14 : vector<1x128xi32>
    %c0_i32_15 = arith.constant 0 : i32
    %16 = arith.cmpi slt, %9, %c0_i32_15 : i32
    %17 = vector.broadcast %16 : i1 to vector<1x128xi1>
    %18 = vector.broadcast %17 : vector<1x128xi1> to vector<1x128xi1>
    %19 = arith.xori %15, %18 : vector<1x128xi1>
    %20 = arith.andi %19, %13 : vector<1x128xi1>
    %21 = vector.broadcast %9 : i32 to vector<1x128xi32>
    %22 = arith.addi %11, %21 : vector<1x128xi32>
    %23 = arith.select %20, %22, %11 : vector<1x128xi1>, vector<1x128xi32>
    %c1_i32_16 = arith.constant 1 : i32
    %24 = tpu.dynamic_rotate %0 by %c1_i32_16 dim 1 : vector<8x128xf32>, i32 -> vector<8x128xf32>
    %c-1_i32 = arith.constant -1 : i32
    %25 = vector.broadcast %c-1_i32 : i32 to vector<1x128xi32>
    %26 = arith.addi %23, %25 : vector<1x128xi32>
    %c0_i32_17 = arith.constant 0 : i32
    %27 = vector.broadcast %c0_i32_17 : i32 to vector<1x128xi32>
    %28 = arith.cmpi sge, %26, %27 : vector<1x128xi32>
    %c-1_i32_18 = arith.constant -1 : i32
    %29 = vector.broadcast %c-1_i32_18 : i32 to vector<1x128xi32>
    %30 = arith.addi %23, %29 : vector<1x128xi32>
    %c16_i32_19 = arith.constant 16 : i32
    %31 = vector.broadcast %c16_i32_19 : i32 to vector<1x128xi32>
    %32 = arith.cmpi slt, %30, %31 : vector<1x128xi32>
    %33 = arith.andi %28, %32 : vector<1x128xi1>
    %cst = arith.constant 0.000000e+00 : f32
    %34 = vector.shape_cast %33 : vector<1x128xi1> to vector<1x128xi1>
    %35 = vector.broadcast %34 : vector<1x128xi1> to vector<8x128xi1>
    %36 = vector.broadcast %cst : f32 to vector<8x128xf32>
    %37 = arith.select %35, %24, %36 : vector<8x128xi1>, vector<8x128xf32>
    %38 = arith.truncf %37 : vector<8x128xf32> to vector<8x128xbf16>
    %cst_20 = arith.constant dense<0.000000e+00> : vector<8x128xf32>
    %39 = tpu.matmul %1, %38, %cst_20 {dimension_numbers = #tpu.dot_dimension_numbers<[1], [0], [0], [1], [0, 0, 1, 1], [], []>} : vector<8x8xbf16>, vector<8x128xbf16>, vector<8x128xf32> -> vector<8x128xf32>
    %40 = arith.truncf %0 : vector<8x128xf32> to vector<8x128xbf16>
    %cst_21 = arith.constant dense<0.000000e+00> : vector<8x128xf32>
    %41 = tpu.matmul %2, %40, %cst_21 {dimension_numbers = #tpu.dot_dimension_numbers<[1], [0], [0], [1], [0, 0, 1, 1], [], []>} : vector<8x8xbf16>, vector<8x128xbf16>, vector<8x128xf32> -> vector<8x128xf32>
    %42 = arith.addf %39, %41 : vector<8x128xf32>
    %43 = vector.broadcast %3 : vector<8x1xf32> to vector<8x128xf32>
    %44 = arith.addf %42, %43 : vector<8x128xf32>
    %cst_22 = arith.constant 0.000000e+00 : f32
    %45 = vector.broadcast %cst_22 : f32 to vector<8x128xf32>
    %46 = arith.maximumf %44, %45 : vector<8x128xf32>
    %47 = tpu.iota {dimensions = array<i32: 1>} : vector<1x128xi32>
    %c16_i32_23 = arith.constant 16 : i32
    %c0_i32_24 = arith.constant 0 : i32
    %48 = arith.cmpi eq, %c16_i32_23, %c0_i32_24 : i32
    %c1_i32_25 = arith.constant 1 : i32
    %49 = arith.select %48, %c1_i32_25, %c16_i32_23 : i32
    %50 = vector.broadcast %49 : i32 to vector<1x128xi32>
    %51 = arith.remsi %47, %50 : vector<1x128xi32>
    %c0_i32_26 = arith.constant 0 : i32
    %52 = vector.broadcast %c0_i32_26 : i32 to vector<1x128xi32>
    %53 = arith.cmpi ne, %51, %52 : vector<1x128xi32>
    %c0_i32_27 = arith.constant 0 : i32
    %54 = vector.broadcast %c0_i32_27 : i32 to vector<1x128xi32>
    %55 = arith.cmpi slt, %51, %54 : vector<1x128xi32>
    %c0_i32_28 = arith.constant 0 : i32
    %56 = arith.cmpi slt, %49, %c0_i32_28 : i32
    %57 = vector.broadcast %56 : i1 to vector<1x128xi1>
    %58 = vector.broadcast %57 : vector<1x128xi1> to vector<1x128xi1>
    %59 = arith.xori %55, %58 : vector<1x128xi1>
    %60 = arith.andi %59, %53 : vector<1x128xi1>
    %61 = vector.broadcast %49 : i32 to vector<1x128xi32>
    %62 = arith.addi %51, %61 : vector<1x128xi32>
    %63 = arith.select %60, %62, %51 : vector<1x128xi1>, vector<1x128xi32>
    %c1_i32_29 = arith.constant 1 : i32
    %64 = tpu.dynamic_rotate %46 by %c1_i32_29 dim 1 : vector<8x128xf32>, i32 -> vector<8x128xf32>
    %c-1_i32_30 = arith.constant -1 : i32
    %65 = vector.broadcast %c-1_i32_30 : i32 to vector<1x128xi32>
    %66 = arith.addi %63, %65 : vector<1x128xi32>
    %c0_i32_31 = arith.constant 0 : i32
    %67 = vector.broadcast %c0_i32_31 : i32 to vector<1x128xi32>
    %68 = arith.cmpi sge, %66, %67 : vector<1x128xi32>
    %c-1_i32_32 = arith.constant -1 : i32
    %69 = vector.broadcast %c-1_i32_32 : i32 to vector<1x128xi32>
    %70 = arith.addi %63, %69 : vector<1x128xi32>
    %c16_i32_33 = arith.constant 16 : i32
    %71 = vector.broadcast %c16_i32_33 : i32 to vector<1x128xi32>
    %72 = arith.cmpi slt, %70, %71 : vector<1x128xi32>
    %73 = arith.andi %68, %72 : vector<1x128xi1>
    %cst_34 = arith.constant 0.000000e+00 : f32
    %74 = vector.shape_cast %73 : vector<1x128xi1> to vector<1x128xi1>
    %75 = vector.broadcast %74 : vector<1x128xi1> to vector<8x128xi1>
    %76 = vector.broadcast %cst_34 : f32 to vector<8x128xf32>
    %77 = arith.select %75, %64, %76 : vector<8x128xi1>, vector<8x128xf32>
    %78 = arith.truncf %77 : vector<8x128xf32> to vector<8x128xbf16>
    %cst_35 = arith.constant dense<0.000000e+00> : vector<8x128xf32>
    %79 = tpu.matmul %4, %78, %cst_35 {dimension_numbers = #tpu.dot_dimension_numbers<[1], [0], [0], [1], [0, 0, 1, 1], [], []>} : vector<8x8xbf16>, vector<8x128xbf16>, vector<8x128xf32> -> vector<8x128xf32>
    %80 = arith.truncf %46 : vector<8x128xf32> to vector<8x128xbf16>
    %cst_36 = arith.constant dense<0.000000e+00> : vector<8x128xf32>
    %81 = tpu.matmul %5, %80, %cst_36 {dimension_numbers = #tpu.dot_dimension_numbers<[1], [0], [0], [1], [0, 0, 1, 1], [], []>} : vector<8x8xbf16>, vector<8x128xbf16>, vector<8x128xf32> -> vector<8x128xf32>
    %82 = arith.addf %79, %81 : vector<8x128xf32>
    %83 = vector.broadcast %6 : vector<8x1xf32> to vector<8x128xf32>
    %84 = arith.addf %82, %83 : vector<8x128xf32>
    %cst_37 = arith.constant 0.000000e+00 : f32
    %85 = vector.broadcast %cst_37 : f32 to vector<8x128xf32>
    %86 = arith.maximumf %84, %85 : vector<8x128xf32>
    %c0_38 = arith.constant 0 : index
    %c0_39 = arith.constant 0 : index
    %87 = vector.load %arg8[%c0_38, %c0_39] : memref<8x8xbf16, #tpu.memory_space<vmem>>, vector<8x8xbf16>
    %c0_40 = arith.constant 0 : index
    %c0_41 = arith.constant 0 : index
    %88 = vector.load %arg9[%c0_40, %c0_41] : memref<8x1xf32, #tpu.memory_space<vmem>>, vector<8x1xf32>
    %89 = arith.truncf %0 : vector<8x128xf32> to vector<8x128xbf16>
    %cst_42 = arith.constant dense<0.000000e+00> : vector<8x128xf32>
    %90 = tpu.matmul %87, %89, %cst_42 {dimension_numbers = #tpu.dot_dimension_numbers<[1], [0], [0], [1], [0, 0, 1, 1], [], []>} : vector<8x8xbf16>, vector<8x128xbf16>, vector<8x128xf32> -> vector<8x128xf32>
    %91 = vector.broadcast %88 : vector<8x1xf32> to vector<8x128xf32>
    %92 = arith.addf %90, %91 : vector<8x128xf32>
    %93 = arith.addf %86, %92 : vector<8x128xf32>
    %cst_43 = arith.constant 0.000000e+00 : f32
    %94 = vector.broadcast %cst_43 : f32 to vector<8x128xf32>
    %95 = arith.maximumf %93, %94 : vector<8x128xf32>
    %c0_44 = arith.constant 0 : index
    %c0_45 = arith.constant 0 : index
    %96 = vector.load %arg10[%c0_44, %c0_45] : memref<8x8xbf16, #tpu.memory_space<vmem>>, vector<8x8xbf16>
    %c0_46 = arith.constant 0 : index
    %c0_47 = arith.constant 0 : index
    %97 = vector.load %arg11[%c0_46, %c0_47] : memref<8x8xbf16, #tpu.memory_space<vmem>>, vector<8x8xbf16>
    %c0_48 = arith.constant 0 : index
    %c0_49 = arith.constant 0 : index
    %98 = vector.load %arg12[%c0_48, %c0_49] : memref<8x1xf32, #tpu.memory_space<vmem>>, vector<8x1xf32>
    %c0_50 = arith.constant 0 : index
    %c0_51 = arith.constant 0 : index
    %99 = vector.load %arg13[%c0_50, %c0_51] : memref<8x8xbf16, #tpu.memory_space<vmem>>, vector<8x8xbf16>
    %c0_52 = arith.constant 0 : index
    %c0_53 = arith.constant 0 : index
    %100 = vector.load %arg14[%c0_52, %c0_53] : memref<8x8xbf16, #tpu.memory_space<vmem>>, vector<8x8xbf16>
    %c0_54 = arith.constant 0 : index
    %c0_55 = arith.constant 0 : index
    %101 = vector.load %arg15[%c0_54, %c0_55] : memref<8x1xf32, #tpu.memory_space<vmem>>, vector<8x1xf32>
    %102 = tpu.iota {dimensions = array<i32: 1>} : vector<1x128xi32>
    %c16_i32_56 = arith.constant 16 : i32
    %c0_i32_57 = arith.constant 0 : i32
    %103 = arith.cmpi eq, %c16_i32_56, %c0_i32_57 : i32
    %c1_i32_58 = arith.constant 1 : i32
    %104 = arith.select %103, %c1_i32_58, %c16_i32_56 : i32
    %105 = vector.broadcast %104 : i32 to vector<1x128xi32>
    %106 = arith.remsi %102, %105 : vector<1x128xi32>
    %c0_i32_59 = arith.constant 0 : i32
    %107 = vector.broadcast %c0_i32_59 : i32 to vector<1x128xi32>
    %108 = arith.cmpi ne, %106, %107 : vector<1x128xi32>
    %c0_i32_60 = arith.constant 0 : i32
    %109 = vector.broadcast %c0_i32_60 : i32 to vector<1x128xi32>
    %110 = arith.cmpi slt, %106, %109 : vector<1x128xi32>
    %c0_i32_61 = arith.constant 0 : i32
    %111 = arith.cmpi slt, %104, %c0_i32_61 : i32
    %112 = vector.broadcast %111 : i1 to vector<1x128xi1>
    %113 = vector.broadcast %112 : vector<1x128xi1> to vector<1x128xi1>
    %114 = arith.xori %110, %113 : vector<1x128xi1>
    %115 = arith.andi %114, %108 : vector<1x128xi1>
    %116 = vector.broadcast %104 : i32 to vector<1x128xi32>
    %117 = arith.addi %106, %116 : vector<1x128xi32>
    %118 = arith.select %115, %117, %106 : vector<1x128xi1>, vector<1x128xi32>
    %c2_i32 = arith.constant 2 : i32
    %119 = tpu.dynamic_rotate %95 by %c2_i32 dim 1 : vector<8x128xf32>, i32 -> vector<8x128xf32>
    %c-2_i32 = arith.constant -2 : i32
    %120 = vector.broadcast %c-2_i32 : i32 to vector<1x128xi32>
    %121 = arith.addi %118, %120 : vector<1x128xi32>
    %c0_i32_62 = arith.constant 0 : i32
    %122 = vector.broadcast %c0_i32_62 : i32 to vector<1x128xi32>
    %123 = arith.cmpi sge, %121, %122 : vector<1x128xi32>
    %c-2_i32_63 = arith.constant -2 : i32
    %124 = vector.broadcast %c-2_i32_63 : i32 to vector<1x128xi32>
    %125 = arith.addi %118, %124 : vector<1x128xi32>
    %c16_i32_64 = arith.constant 16 : i32
    %126 = vector.broadcast %c16_i32_64 : i32 to vector<1x128xi32>
    %127 = arith.cmpi slt, %125, %126 : vector<1x128xi32>
    %128 = arith.andi %123, %127 : vector<1x128xi1>
    %cst_65 = arith.constant 0.000000e+00 : f32
    %129 = vector.shape_cast %128 : vector<1x128xi1> to vector<1x128xi1>
    %130 = vector.broadcast %129 : vector<1x128xi1> to vector<8x128xi1>
    %131 = vector.broadcast %cst_65 : f32 to vector<8x128xf32>
    %132 = arith.select %130, %119, %131 : vector<8x128xi1>, vector<8x128xf32>
    %133 = arith.truncf %132 : vector<8x128xf32> to vector<8x128xbf16>
    %cst_66 = arith.constant dense<0.000000e+00> : vector<8x128xf32>
    %134 = tpu.matmul %96, %133, %cst_66 {dimension_numbers = #tpu.dot_dimension_numbers<[1], [0], [0], [1], [0, 0, 1, 1], [], []>} : vector<8x8xbf16>, vector<8x128xbf16>, vector<8x128xf32> -> vector<8x128xf32>
    %135 = arith.truncf %95 : vector<8x128xf32> to vector<8x128xbf16>
    %cst_67 = arith.constant dense<0.000000e+00> : vector<8x128xf32>
    %136 = tpu.matmul %97, %135, %cst_67 {dimension_numbers = #tpu.dot_dimension_numbers<[1], [0], [0], [1], [0, 0, 1, 1], [], []>} : vector<8x8xbf16>, vector<8x128xbf16>, vector<8x128xf32> -> vector<8x128xf32>
    %137 = arith.addf %134, %136 : vector<8x128xf32>
    %138 = vector.broadcast %98 : vector<8x1xf32> to vector<8x128xf32>
    %139 = arith.addf %137, %138 : vector<8x128xf32>
    %cst_68 = arith.constant 0.000000e+00 : f32
    %140 = vector.broadcast %cst_68 : f32 to vector<8x128xf32>
    %141 = arith.maximumf %139, %140 : vector<8x128xf32>
    %142 = tpu.iota {dimensions = array<i32: 1>} : vector<1x128xi32>
    %c16_i32_69 = arith.constant 16 : i32
    %c0_i32_70 = arith.constant 0 : i32
    %143 = arith.cmpi eq, %c16_i32_69, %c0_i32_70 : i32
    %c1_i32_71 = arith.constant 1 : i32
    %144 = arith.select %143, %c1_i32_71, %c16_i32_69 : i32
    %145 = vector.broadcast %144 : i32 to vector<1x128xi32>
    %146 = arith.remsi %142, %145 : vector<1x128xi32>
    %c0_i32_72 = arith.constant 0 : i32
    %147 = vector.broadcast %c0_i32_72 : i32 to vector<1x128xi32>
    %148 = arith.cmpi ne, %146, %147 : vector<1x128xi32>
    %c0_i32_73 = arith.constant 0 : i32
    %149 = vector.broadcast %c0_i32_73 : i32 to vector<1x128xi32>
    %150 = arith.cmpi slt, %146, %149 : vector<1x128xi32>
    %c0_i32_74 = arith.constant 0 : i32
    %151 = arith.cmpi slt, %144, %c0_i32_74 : i32
    %152 = vector.broadcast %151 : i1 to vector<1x128xi1>
    %153 = vector.broadcast %152 : vector<1x128xi1> to vector<1x128xi1>
    %154 = arith.xori %150, %153 : vector<1x128xi1>
    %155 = arith.andi %154, %148 : vector<1x128xi1>
    %156 = vector.broadcast %144 : i32 to vector<1x128xi32>
    %157 = arith.addi %146, %156 : vector<1x128xi32>
    %158 = arith.select %155, %157, %146 : vector<1x128xi1>, vector<1x128xi32>
    %c2_i32_75 = arith.constant 2 : i32
    %159 = tpu.dynamic_rotate %141 by %c2_i32_75 dim 1 : vector<8x128xf32>, i32 -> vector<8x128xf32>
    %c-2_i32_76 = arith.constant -2 : i32
    %160 = vector.broadcast %c-2_i32_76 : i32 to vector<1x128xi32>
    %161 = arith.addi %158, %160 : vector<1x128xi32>
    %c0_i32_77 = arith.constant 0 : i32
    %162 = vector.broadcast %c0_i32_77 : i32 to vector<1x128xi32>
    %163 = arith.cmpi sge, %161, %162 : vector<1x128xi32>
    %c-2_i32_78 = arith.constant -2 : i32
    %164 = vector.broadcast %c-2_i32_78 : i32 to vector<1x128xi32>
    %165 = arith.addi %158, %164 : vector<1x128xi32>
    %c16_i32_79 = arith.constant 16 : i32
    %166 = vector.broadcast %c16_i32_79 : i32 to vector<1x128xi32>
    %167 = arith.cmpi slt, %165, %166 : vector<1x128xi32>
    %168 = arith.andi %163, %167 : vector<1x128xi1>
    %cst_80 = arith.constant 0.000000e+00 : f32
    %169 = vector.shape_cast %168 : vector<1x128xi1> to vector<1x128xi1>
    %170 = vector.broadcast %169 : vector<1x128xi1> to vector<8x128xi1>
    %171 = vector.broadcast %cst_80 : f32 to vector<8x128xf32>
    %172 = arith.select %170, %159, %171 : vector<8x128xi1>, vector<8x128xf32>
    %173 = arith.truncf %172 : vector<8x128xf32> to vector<8x128xbf16>
    %cst_81 = arith.constant dense<0.000000e+00> : vector<8x128xf32>
    %174 = tpu.matmul %99, %173, %cst_81 {dimension_numbers = #tpu.dot_dimension_numbers<[1], [0], [0], [1], [0, 0, 1, 1], [], []>} : vector<8x8xbf16>, vector<8x128xbf16>, vector<8x128xf32> -> vector<8x128xf32>
    %175 = arith.truncf %141 : vector<8x128xf32> to vector<8x128xbf16>
    %cst_82 = arith.constant dense<0.000000e+00> : vector<8x128xf32>
    %176 = tpu.matmul %100, %175, %cst_82 {dimension_numbers = #tpu.dot_dimension_numbers<[1], [0], [0], [1], [0, 0, 1, 1], [], []>} : vector<8x8xbf16>, vector<8x128xbf16>, vector<8x128xf32> -> vector<8x128xf32>
    %177 = arith.addf %174, %176 : vector<8x128xf32>
    %178 = vector.broadcast %101 : vector<8x1xf32> to vector<8x128xf32>
    %179 = arith.addf %177, %178 : vector<8x128xf32>
    %cst_83 = arith.constant 0.000000e+00 : f32
    %180 = vector.broadcast %cst_83 : f32 to vector<8x128xf32>
    %181 = arith.maximumf %179, %180 : vector<8x128xf32>
    %c0_84 = arith.constant 0 : index
    %c0_85 = arith.constant 0 : index
    %182 = vector.load %arg16[%c0_84, %c0_85] : memref<8x8xbf16, #tpu.memory_space<vmem>>, vector<8x8xbf16>
    %c0_86 = arith.constant 0 : index
    %c0_87 = arith.constant 0 : index
    %183 = vector.load %arg17[%c0_86, %c0_87] : memref<8x1xf32, #tpu.memory_space<vmem>>, vector<8x1xf32>
    %184 = arith.truncf %95 : vector<8x128xf32> to vector<8x128xbf16>
    %cst_88 = arith.constant dense<0.000000e+00> : vector<8x128xf32>
    %185 = tpu.matmul %182, %184, %cst_88 {dimension_numbers = #tpu.dot_dimension_numbers<[1], [0], [0], [1], [0, 0, 1, 1], [], []>} : vector<8x8xbf16>, vector<8x128xbf16>, vector<8x128xf32> -> vector<8x128xf32>
    %186 = vector.broadcast %183 : vector<8x1xf32> to vector<8x128xf32>
    %187 = arith.addf %185, %186 : vector<8x128xf32>
    %188 = arith.addf %181, %187 : vector<8x128xf32>
    %cst_89 = arith.constant 0.000000e+00 : f32
    %189 = vector.broadcast %cst_89 : f32 to vector<8x128xf32>
    %190 = arith.maximumf %188, %189 : vector<8x128xf32>
    %c0_90 = arith.constant 0 : index
    %c0_91 = arith.constant 0 : index
    %191 = vector.load %arg18[%c0_90, %c0_91] : memref<8x8xbf16, #tpu.memory_space<vmem>>, vector<8x8xbf16>
    %c0_92 = arith.constant 0 : index
    %c0_93 = arith.constant 0 : index
    %192 = vector.load %arg19[%c0_92, %c0_93] : memref<8x1xf32, #tpu.memory_space<vmem>>, vector<8x1xf32>
    %193 = arith.truncf %190 : vector<8x128xf32> to vector<8x128xbf16>
    %cst_94 = arith.constant dense<0.000000e+00> : vector<8x128xf32>
    %194 = tpu.matmul %191, %193, %cst_94 {dimension_numbers = #tpu.dot_dimension_numbers<[1], [0], [0], [1], [0, 0, 1, 1], [], []>} : vector<8x8xbf16>, vector<8x128xbf16>, vector<8x128xf32> -> vector<8x128xf32>
    %195 = vector.broadcast %192 : vector<8x1xf32> to vector<8x128xf32>
    %196 = arith.addf %194, %195 : vector<8x128xf32>
    %c0_95 = arith.constant 0 : index
    %c0_96 = arith.constant 0 : index
    %197 = vector.load %arg20[%c0_95, %c0_96] : memref<8x128xf32, #tpu.memory_space<vmem>>, vector<8x128xf32>
    tpu.vector_store %arg20[%c0_95, %c0_96], %196 {strides = array<i32>} : memref<8x128xf32, #tpu.memory_space<vmem>>, vector<8x128xf32>,
    return
  }
  func.func @transform_0(%arg0: i32) -> (i32, i32) {
    %c0_i32 = arith.constant 0 : i32
    %c0_i32_0 = arith.constant 0 : i32
    return %c0_i32, %arg0 : i32, i32
  }
  func.func @transform_1(%arg0: i32) -> (i32, i32) {
    %c0_i32 = arith.constant 0 : i32
    %c0_i32_0 = arith.constant 0 : i32
    %c0_i32_1 = arith.constant 0 : i32
    return %c0_i32, %c0_i32_0 : i32, i32
  }
  func.func @transform_2(%arg0: i32) -> (i32, i32) {
    %c0_i32 = arith.constant 0 : i32
    %c0_i32_0 = arith.constant 0 : i32
    %c0_i32_1 = arith.constant 0 : i32
    return %c0_i32, %c0_i32_0 : i32, i32
  }
  func.func @transform_3(%arg0: i32) -> (i32, i32) {
    %c0_i32 = arith.constant 0 : i32
    %c0_i32_0 = arith.constant 0 : i32
    %c0_i32_1 = arith.constant 0 : i32
    return %c0_i32, %c0_i32_0 : i32, i32
  }
  func.func @transform_4(%arg0: i32) -> (i32, i32) {
    %c0_i32 = arith.constant 0 : i32
    %c0_i32_0 = arith.constant 0 : i32
    %c0_i32_1 = arith.constant 0 : i32
    return %c0_i32, %c0_i32_0 : i32, i32
  }
  func.func @transform_5(%arg0: i32) -> (i32, i32) {
    %c0_i32 = arith.constant 0 : i32
    %c0_i32_0 = arith.constant 0 : i32
    %c0_i32_1 = arith.constant 0 : i32
    return %c0_i32, %c0_i32_0 : i32, i32
  }
  func.func @transform_6(%arg0: i32) -> (i32, i32) {
    %c0_i32 = arith.constant 0 : i32
    %c0_i32_0 = arith.constant 0 : i32
    %c0_i32_1 = arith.constant 0 : i32
    return %c0_i32, %c0_i32_0 : i32, i32
  }
  func.func @transform_7(%arg0: i32) -> (i32, i32) {
    %c0_i32 = arith.constant 0 : i32
    %c0_i32_0 = arith.constant 0 : i32
    %c0_i32_1 = arith.constant 0 : i32
    return %c0_i32, %c0_i32_0 : i32, i32
  }
  func.func @transform_8(%arg0: i32) -> (i32, i32) {
    %c0_i32 = arith.constant 0 : i32
    %c0_i32_0 = arith.constant 0 : i32
    %c0_i32_1 = arith.constant 0 : i32
    return %c0_i32, %c0_i32_0 : i32, i32
  }
  func.func @transform_9(%arg0: i32) -> (i32, i32) {
    %c0_i32 = arith.constant 0 : i32
    %c0_i32_0 = arith.constant 0 : i32
    %c0_i32_1 = arith.constant 0 : i32
    return %c0_i32, %c0_i32_0 : i32, i32
  }
  func.func @transform_10(%arg0: i32) -> (i32, i32) {
    %c0_i32 = arith.constant 0 : i32
    %c0_i32_0 = arith.constant 0 : i32
    %c0_i32_1 = arith.constant 0 : i32
    return %c0_i32, %c0_i32_0 : i32, i32
  }
  func.func @transform_11(%arg0: i32) -> (i32, i32) {
    %c0_i32 = arith.constant 0 : i32
    %c0_i32_0 = arith.constant 0 : i32
    %c0_i32_1 = arith.constant 0 : i32
    return %c0_i32, %c0_i32_0 : i32, i32
  }
  func.func @transform_12(%arg0: i32) -> (i32, i32) {
    %c0_i32 = arith.constant 0 : i32
    %c0_i32_0 = arith.constant 0 : i32
    %c0_i32_1 = arith.constant 0 : i32
    return %c0_i32, %c0_i32_0 : i32, i32
  }
  func.func @transform_13(%arg0: i32) -> (i32, i32) {
    %c0_i32 = arith.constant 0 : i32
    %c0_i32_0 = arith.constant 0 : i32
    %c0_i32_1 = arith.constant 0 : i32
    return %c0_i32, %c0_i32_0 : i32, i32
  }
  func.func @transform_14(%arg0: i32) -> (i32, i32) {
    %c0_i32 = arith.constant 0 : i32
    %c0_i32_0 = arith.constant 0 : i32
    %c0_i32_1 = arith.constant 0 : i32
    return %c0_i32, %c0_i32_0 : i32, i32
  }
  func.func @transform_15(%arg0: i32) -> (i32, i32) {
    %c0_i32 = arith.constant 0 : i32
    %c0_i32_0 = arith.constant 0 : i32
    %c0_i32_1 = arith.constant 0 : i32
    return %c0_i32, %c0_i32_0 : i32, i32
  }
  func.func @transform_16(%arg0: i32) -> (i32, i32) {
    %c0_i32 = arith.constant 0 : i32
    %c0_i32_0 = arith.constant 0 : i32
    %c0_i32_1 = arith.constant 0 : i32
    return %c0_i32, %c0_i32_0 : i32, i32
  }
  func.func @transform_17(%arg0: i32) -> (i32, i32) {
    %c0_i32 = arith.constant 0 : i32
    %c0_i32_0 = arith.constant 0 : i32
    %c0_i32_1 = arith.constant 0 : i32
    return %c0_i32, %c0_i32_0 : i32, i32
  }
  func.func @transform_18(%arg0: i32) -> (i32, i32) {
    %c0_i32 = arith.constant 0 : i32
    %c0_i32_0 = arith.constant 0 : i32
    %c0_i32_1 = arith.constant 0 : i32
    return %c0_i32, %c0_i32_0 : i32, i32
  }
  func.func @transform_19(%arg0: i32) -> (i32, i32) {
    %c0_i32 = arith.constant 0 : i32
    %c0_i32_0 = arith.constant 0 : i32
    return %c0_i32, %arg0 : i32, i32
  }
}

module attributes {stable_mosaic.version = 11 : i64} {
  func.func @kernel(%arg0: i32, %arg1: memref<8x128xf32, #tpu.memory_space<vmem>>, %arg2: memref<8x128xf32, #tpu.memory_space<vmem>>, %arg3: memref<8x128xf32, #tpu.memory_space<vmem>>, %arg4: memref<8x8xbf16, #tpu.memory_space<vmem>>, %arg5: memref<8x1xf32, #tpu.memory_space<vmem>>, %arg6: memref<8x8xbf16, #tpu.memory_space<vmem>>, %arg7: memref<8x8xbf16, #tpu.memory_space<vmem>>, %arg8: memref<8x8xbf16, #tpu.memory_space<vmem>>, %arg9: memref<8x1xf32, #tpu.memory_space<vmem>>, %arg10: memref<8x8xbf16, #tpu.memory_space<vmem>>, %arg11: memref<8x8xbf16, #tpu.memory_space<vmem>>, %arg12: memref<8x8xbf16, #tpu.memory_space<vmem>>, %arg13: memref<8x1xf32, #tpu.memory_space<vmem>>, %arg14: memref<8x8xbf16, #tpu.memory_space<vmem>>, %arg15: memref<8x8xbf16, #tpu.memory_space<vmem>>, %arg16: memref<8x8xbf16, #tpu.memory_space<vmem>>, %arg17: memref<8x1xf32, #tpu.memory_space<vmem>>, %arg18: memref<128x8xbf16, #tpu.memory_space<vmem>>, %arg19: memref<128x8xbf16, #tpu.memory_space<vmem>>, %arg20: memref<128x8xbf16, #tpu.memory_space<vmem>>, %arg21: memref<128x8xbf16, #tpu.memory_space<vmem>>, %arg22: memref<128x1xf32, #tpu.memory_space<vmem>>, %arg23: memref<8x128xbf16, #tpu.memory_space<vmem>>, %arg24: memref<8x1xf32, #tpu.memory_space<vmem>>, %arg25: memref<8x1xf32, #tpu.memory_space<vmem>>, %arg26: memref<8x1xf32, #tpu.memory_space<vmem>>, %arg27: memref<8x128xf32, #tpu.memory_space<vmem>>) attributes {dimension_semantics = [#tpu.dimension_semantics<parallel>], iteration_bounds = array<i64: 1>, scalar_prefetch = 0 : i64, scratch_operands = 0 : i64, tpu.core_type = #tpu.core_type<tc>, window_params = [{transform_indices = @transform_0, window_bounds = array<i64: 8, 128>}, {transform_indices = @transform_1, window_bounds = array<i64: 8, 128>}, {transform_indices = @transform_2, window_bounds = array<i64: 8, 128>}, {pipeline_mode = #tpu.pipeline_mode<synchronous>, transform_indices = @transform_3, window_bounds = array<i64: 8, 8>}, {pipeline_mode = #tpu.pipeline_mode<synchronous>, transform_indices = @transform_4, window_bounds = array<i64: 8, 1>}, {pipeline_mode = #tpu.pipeline_mode<synchronous>, transform_indices = @transform_5, window_bounds = array<i64: 8, 8>}, {pipeline_mode = #tpu.pipeline_mode<synchronous>, transform_indices = @transform_6, window_bounds = array<i64: 8, 8>}, {pipeline_mode = #tpu.pipeline_mode<synchronous>, transform_indices = @transform_7, window_bounds = array<i64: 8, 8>}, {pipeline_mode = #tpu.pipeline_mode<synchronous>, transform_indices = @transform_8, window_bounds = array<i64: 8, 1>}, {pipeline_mode = #tpu.pipeline_mode<synchronous>, transform_indices = @transform_9, window_bounds = array<i64: 8, 8>}, {pipeline_mode = #tpu.pipeline_mode<synchronous>, transform_indices = @transform_10, window_bounds = array<i64: 8, 8>}, {pipeline_mode = #tpu.pipeline_mode<synchronous>, transform_indices = @transform_11, window_bounds = array<i64: 8, 8>}, {pipeline_mode = #tpu.pipeline_mode<synchronous>, transform_indices = @transform_12, window_bounds = array<i64: 8, 1>}, {pipeline_mode = #tpu.pipeline_mode<synchronous>, transform_indices = @transform_13, window_bounds = array<i64: 8, 8>}, {pipeline_mode = #tpu.pipeline_mode<synchronous>, transform_indices = @transform_14, window_bounds = array<i64: 8, 8>}, {pipeline_mode = #tpu.pipeline_mode<synchronous>, transform_indices = @transform_15, window_bounds = array<i64: 8, 8>}, {pipeline_mode = #tpu.pipeline_mode<synchronous>, transform_indices = @transform_16, window_bounds = array<i64: 8, 1>}, {pipeline_mode = #tpu.pipeline_mode<synchronous>, transform_indices = @transform_17, window_bounds = array<i64: 128, 8>}, {pipeline_mode = #tpu.pipeline_mode<synchronous>, transform_indices = @transform_18, window_bounds = array<i64: 128, 8>}, {pipeline_mode = #tpu.pipeline_mode<synchronous>, transform_indices = @transform_19, window_bounds = array<i64: 128, 8>}, {pipeline_mode = #tpu.pipeline_mode<synchronous>, transform_indices = @transform_20, window_bounds = array<i64: 128, 8>}, {pipeline_mode = #tpu.pipeline_mode<synchronous>, transform_indices = @transform_21, window_bounds = array<i64: 128, 1>}, {pipeline_mode = #tpu.pipeline_mode<synchronous>, transform_indices = @transform_22, window_bounds = array<i64: 8, 128>}, {pipeline_mode = #tpu.pipeline_mode<synchronous>, transform_indices = @transform_23, window_bounds = array<i64: 8, 1>}, {pipeline_mode = #tpu.pipeline_mode<synchronous>, transform_indices = @transform_24, window_bounds = array<i64: 8, 1>}, {pipeline_mode = #tpu.pipeline_mode<synchronous>, transform_indices = @transform_25, window_bounds = array<i64: 8, 1>}, {transform_indices = @transform_26, window_bounds = array<i64: 8, 128>}]} {
    %c0 = arith.constant 0 : index
    %c0_0 = arith.constant 0 : index
    %0 = vector.load %arg1[%c0, %c0_0] : memref<8x128xf32, #tpu.memory_space<vmem>>, vector<8x128xf32>
    %c0_1 = arith.constant 0 : index
    %c0_2 = arith.constant 0 : index
    %1 = vector.load %arg4[%c0_1, %c0_2] : memref<8x8xbf16, #tpu.memory_space<vmem>>, vector<8x8xbf16>
    %c0_3 = arith.constant 0 : index
    %c0_4 = arith.constant 0 : index
    %2 = vector.load %arg5[%c0_3, %c0_4] : memref<8x1xf32, #tpu.memory_space<vmem>>, vector<8x1xf32>
    %3 = arith.truncf %0 : vector<8x128xf32> to vector<8x128xbf16>
    %cst = arith.constant dense<0.000000e+00> : vector<8x128xf32>
    %4 = tpu.matmul %1, %3, %cst {dimension_numbers = #tpu.dot_dimension_numbers<[1], [0], [0], [1], [0, 0, 1, 1], [], []>} : vector<8x8xbf16>, vector<8x128xbf16>, vector<8x128xf32> -> vector<8x128xf32>
    %5 = vector.broadcast %2 : vector<8x1xf32> to vector<8x128xf32>
    %6 = arith.addf %4, %5 : vector<8x128xf32>
    %c0_5 = arith.constant 0 : index
    %c0_6 = arith.constant 0 : index
    %7 = vector.load %arg6[%c0_5, %c0_6] : memref<8x8xbf16, #tpu.memory_space<vmem>>, vector<8x8xbf16>
    %c0_7 = arith.constant 0 : index
    %c0_8 = arith.constant 0 : index
    %8 = vector.load %arg7[%c0_7, %c0_8] : memref<8x8xbf16, #tpu.memory_space<vmem>>, vector<8x8xbf16>
    %c0_9 = arith.constant 0 : index
    %c0_10 = arith.constant 0 : index
    %9 = vector.load %arg8[%c0_9, %c0_10] : memref<8x8xbf16, #tpu.memory_space<vmem>>, vector<8x8xbf16>
    %c0_11 = arith.constant 0 : index
    %c0_12 = arith.constant 0 : index
    %10 = vector.load %arg9[%c0_11, %c0_12] : memref<8x1xf32, #tpu.memory_space<vmem>>, vector<8x1xf32>
    %11 = tpu.iota {dimensions = array<i32: 1>} : vector<1x128xi32>
    %c16_i32 = arith.constant 16 : i32
    %c0_i32 = arith.constant 0 : i32
    %12 = arith.cmpi eq, %c16_i32, %c0_i32 : i32
    %c1_i32 = arith.constant 1 : i32
    %13 = arith.select %12, %c1_i32, %c16_i32 : i32
    %14 = vector.broadcast %13 : i32 to vector<1x128xi32>
    %15 = arith.remsi %11, %14 : vector<1x128xi32>
    %c0_i32_13 = arith.constant 0 : i32
    %16 = vector.broadcast %c0_i32_13 : i32 to vector<1x128xi32>
    %17 = arith.cmpi ne, %15, %16 : vector<1x128xi32>
    %c0_i32_14 = arith.constant 0 : i32
    %18 = vector.broadcast %c0_i32_14 : i32 to vector<1x128xi32>
    %19 = arith.cmpi slt, %15, %18 : vector<1x128xi32>
    %c0_i32_15 = arith.constant 0 : i32
    %20 = arith.cmpi slt, %13, %c0_i32_15 : i32
    %21 = vector.broadcast %20 : i1 to vector<1x128xi1>
    %22 = vector.broadcast %21 : vector<1x128xi1> to vector<1x128xi1>
    %23 = arith.xori %19, %22 : vector<1x128xi1>
    %24 = arith.andi %23, %17 : vector<1x128xi1>
    %25 = vector.broadcast %13 : i32 to vector<1x128xi32>
    %26 = arith.addi %15, %25 : vector<1x128xi32>
    %27 = arith.select %24, %26, %15 : vector<1x128xi1>, vector<1x128xi32>
    %c1_i32_16 = arith.constant 1 : i32
    %28 = tpu.dynamic_rotate %0 by %c1_i32_16 dim 1 : vector<8x128xf32>, i32 -> vector<8x128xf32>
    %c-1_i32 = arith.constant -1 : i32
    %29 = vector.broadcast %c-1_i32 : i32 to vector<1x128xi32>
    %30 = arith.addi %27, %29 : vector<1x128xi32>
    %c0_i32_17 = arith.constant 0 : i32
    %31 = vector.broadcast %c0_i32_17 : i32 to vector<1x128xi32>
    %32 = arith.cmpi sge, %30, %31 : vector<1x128xi32>
    %c-1_i32_18 = arith.constant -1 : i32
    %33 = vector.broadcast %c-1_i32_18 : i32 to vector<1x128xi32>
    %34 = arith.addi %27, %33 : vector<1x128xi32>
    %c16_i32_19 = arith.constant 16 : i32
    %35 = vector.broadcast %c16_i32_19 : i32 to vector<1x128xi32>
    %36 = arith.cmpi slt, %34, %35 : vector<1x128xi32>
    %37 = arith.andi %32, %36 : vector<1x128xi1>
    %cst_20 = arith.constant 0.000000e+00 : f32
    %38 = vector.shape_cast %37 : vector<1x128xi1> to vector<1x128xi1>
    %39 = vector.broadcast %38 : vector<1x128xi1> to vector<8x128xi1>
    %40 = vector.broadcast %cst_20 : f32 to vector<8x128xf32>
    %41 = arith.select %39, %28, %40 : vector<8x128xi1>, vector<8x128xf32>
    %42 = arith.truncf %41 : vector<8x128xf32> to vector<8x128xbf16>
    %cst_21 = arith.constant dense<0.000000e+00> : vector<8x128xf32>
    %43 = tpu.matmul %7, %42, %cst_21 {dimension_numbers = #tpu.dot_dimension_numbers<[1], [0], [0], [1], [0, 0, 1, 1], [], []>} : vector<8x8xbf16>, vector<8x128xbf16>, vector<8x128xf32> -> vector<8x128xf32>
    %44 = arith.truncf %0 : vector<8x128xf32> to vector<8x128xbf16>
    %cst_22 = arith.constant dense<0.000000e+00> : vector<8x128xf32>
    %45 = tpu.matmul %8, %44, %cst_22 {dimension_numbers = #tpu.dot_dimension_numbers<[1], [0], [0], [1], [0, 0, 1, 1], [], []>} : vector<8x8xbf16>, vector<8x128xbf16>, vector<8x128xf32> -> vector<8x128xf32>
    %46 = arith.addf %43, %45 : vector<8x128xf32>
    %c127_i32 = arith.constant 127 : i32
    %47 = tpu.dynamic_rotate %0 by %c127_i32 dim 1 : vector<8x128xf32>, i32 -> vector<8x128xf32>
    %c1_i32_23 = arith.constant 1 : i32
    %48 = vector.broadcast %c1_i32_23 : i32 to vector<1x128xi32>
    %49 = arith.addi %27, %48 : vector<1x128xi32>
    %c0_i32_24 = arith.constant 0 : i32
    %50 = vector.broadcast %c0_i32_24 : i32 to vector<1x128xi32>
    %51 = arith.cmpi sge, %49, %50 : vector<1x128xi32>
    %c1_i32_25 = arith.constant 1 : i32
    %52 = vector.broadcast %c1_i32_25 : i32 to vector<1x128xi32>
    %53 = arith.addi %27, %52 : vector<1x128xi32>
    %c16_i32_26 = arith.constant 16 : i32
    %54 = vector.broadcast %c16_i32_26 : i32 to vector<1x128xi32>
    %55 = arith.cmpi slt, %53, %54 : vector<1x128xi32>
    %56 = arith.andi %51, %55 : vector<1x128xi1>
    %cst_27 = arith.constant 0.000000e+00 : f32
    %57 = vector.shape_cast %56 : vector<1x128xi1> to vector<1x128xi1>
    %58 = vector.broadcast %57 : vector<1x128xi1> to vector<8x128xi1>
    %59 = vector.broadcast %cst_27 : f32 to vector<8x128xf32>
    %60 = arith.select %58, %47, %59 : vector<8x128xi1>, vector<8x128xf32>
    %61 = arith.truncf %60 : vector<8x128xf32> to vector<8x128xbf16>
    %cst_28 = arith.constant dense<0.000000e+00> : vector<8x128xf32>
    %62 = tpu.matmul %9, %61, %cst_28 {dimension_numbers = #tpu.dot_dimension_numbers<[1], [0], [0], [1], [0, 0, 1, 1], [], []>} : vector<8x8xbf16>, vector<8x128xbf16>, vector<8x128xf32> -> vector<8x128xf32>
    %63 = arith.addf %46, %62 : vector<8x128xf32>
    %64 = vector.broadcast %10 : vector<8x1xf32> to vector<8x128xf32>
    %65 = arith.addf %63, %64 : vector<8x128xf32>
    %c0_29 = arith.constant 0 : index
    %c0_30 = arith.constant 0 : index
    %66 = vector.load %arg10[%c0_29, %c0_30] : memref<8x8xbf16, #tpu.memory_space<vmem>>, vector<8x8xbf16>
    %c0_31 = arith.constant 0 : index
    %c0_32 = arith.constant 0 : index
    %67 = vector.load %arg11[%c0_31, %c0_32] : memref<8x8xbf16, #tpu.memory_space<vmem>>, vector<8x8xbf16>
    %c0_33 = arith.constant 0 : index
    %c0_34 = arith.constant 0 : index
    %68 = vector.load %arg12[%c0_33, %c0_34] : memref<8x8xbf16, #tpu.memory_space<vmem>>, vector<8x8xbf16>
    %c0_35 = arith.constant 0 : index
    %c0_36 = arith.constant 0 : index
    %69 = vector.load %arg13[%c0_35, %c0_36] : memref<8x1xf32, #tpu.memory_space<vmem>>, vector<8x1xf32>
    %70 = tpu.iota {dimensions = array<i32: 1>} : vector<1x128xi32>
    %c16_i32_37 = arith.constant 16 : i32
    %c0_i32_38 = arith.constant 0 : i32
    %71 = arith.cmpi eq, %c16_i32_37, %c0_i32_38 : i32
    %c1_i32_39 = arith.constant 1 : i32
    %72 = arith.select %71, %c1_i32_39, %c16_i32_37 : i32
    %73 = vector.broadcast %72 : i32 to vector<1x128xi32>
    %74 = arith.remsi %70, %73 : vector<1x128xi32>
    %c0_i32_40 = arith.constant 0 : i32
    %75 = vector.broadcast %c0_i32_40 : i32 to vector<1x128xi32>
    %76 = arith.cmpi ne, %74, %75 : vector<1x128xi32>
    %c0_i32_41 = arith.constant 0 : i32
    %77 = vector.broadcast %c0_i32_41 : i32 to vector<1x128xi32>
    %78 = arith.cmpi slt, %74, %77 : vector<1x128xi32>
    %c0_i32_42 = arith.constant 0 : i32
    %79 = arith.cmpi slt, %72, %c0_i32_42 : i32
    %80 = vector.broadcast %79 : i1 to vector<1x128xi1>
    %81 = vector.broadcast %80 : vector<1x128xi1> to vector<1x128xi1>
    %82 = arith.xori %78, %81 : vector<1x128xi1>
    %83 = arith.andi %82, %76 : vector<1x128xi1>
    %84 = vector.broadcast %72 : i32 to vector<1x128xi32>
    %85 = arith.addi %74, %84 : vector<1x128xi32>
    %86 = arith.select %83, %85, %74 : vector<1x128xi1>, vector<1x128xi32>
    %c1_i32_43 = arith.constant 1 : i32
    %87 = tpu.dynamic_rotate %65 by %c1_i32_43 dim 1 : vector<8x128xf32>, i32 -> vector<8x128xf32>
    %c-1_i32_44 = arith.constant -1 : i32
    %88 = vector.broadcast %c-1_i32_44 : i32 to vector<1x128xi32>
    %89 = arith.addi %86, %88 : vector<1x128xi32>
    %c0_i32_45 = arith.constant 0 : i32
    %90 = vector.broadcast %c0_i32_45 : i32 to vector<1x128xi32>
    %91 = arith.cmpi sge, %89, %90 : vector<1x128xi32>
    %c-1_i32_46 = arith.constant -1 : i32
    %92 = vector.broadcast %c-1_i32_46 : i32 to vector<1x128xi32>
    %93 = arith.addi %86, %92 : vector<1x128xi32>
    %c16_i32_47 = arith.constant 16 : i32
    %94 = vector.broadcast %c16_i32_47 : i32 to vector<1x128xi32>
    %95 = arith.cmpi slt, %93, %94 : vector<1x128xi32>
    %96 = arith.andi %91, %95 : vector<1x128xi1>
    %cst_48 = arith.constant 0.000000e+00 : f32
    %97 = vector.shape_cast %96 : vector<1x128xi1> to vector<1x128xi1>
    %98 = vector.broadcast %97 : vector<1x128xi1> to vector<8x128xi1>
    %99 = vector.broadcast %cst_48 : f32 to vector<8x128xf32>
    %100 = arith.select %98, %87, %99 : vector<8x128xi1>, vector<8x128xf32>
    %101 = arith.truncf %100 : vector<8x128xf32> to vector<8x128xbf16>
    %cst_49 = arith.constant dense<0.000000e+00> : vector<8x128xf32>
    %102 = tpu.matmul %66, %101, %cst_49 {dimension_numbers = #tpu.dot_dimension_numbers<[1], [0], [0], [1], [0, 0, 1, 1], [], []>} : vector<8x8xbf16>, vector<8x128xbf16>, vector<8x128xf32> -> vector<8x128xf32>
    %103 = arith.truncf %65 : vector<8x128xf32> to vector<8x128xbf16>
    %cst_50 = arith.constant dense<0.000000e+00> : vector<8x128xf32>
    %104 = tpu.matmul %67, %103, %cst_50 {dimension_numbers = #tpu.dot_dimension_numbers<[1], [0], [0], [1], [0, 0, 1, 1], [], []>} : vector<8x8xbf16>, vector<8x128xbf16>, vector<8x128xf32> -> vector<8x128xf32>
    %105 = arith.addf %102, %104 : vector<8x128xf32>
    %c127_i32_51 = arith.constant 127 : i32
    %106 = tpu.dynamic_rotate %65 by %c127_i32_51 dim 1 : vector<8x128xf32>, i32 -> vector<8x128xf32>
    %c1_i32_52 = arith.constant 1 : i32
    %107 = vector.broadcast %c1_i32_52 : i32 to vector<1x128xi32>
    %108 = arith.addi %86, %107 : vector<1x128xi32>
    %c0_i32_53 = arith.constant 0 : i32
    %109 = vector.broadcast %c0_i32_53 : i32 to vector<1x128xi32>
    %110 = arith.cmpi sge, %108, %109 : vector<1x128xi32>
    %c1_i32_54 = arith.constant 1 : i32
    %111 = vector.broadcast %c1_i32_54 : i32 to vector<1x128xi32>
    %112 = arith.addi %86, %111 : vector<1x128xi32>
    %c16_i32_55 = arith.constant 16 : i32
    %113 = vector.broadcast %c16_i32_55 : i32 to vector<1x128xi32>
    %114 = arith.cmpi slt, %112, %113 : vector<1x128xi32>
    %115 = arith.andi %110, %114 : vector<1x128xi1>
    %cst_56 = arith.constant 0.000000e+00 : f32
    %116 = vector.shape_cast %115 : vector<1x128xi1> to vector<1x128xi1>
    %117 = vector.broadcast %116 : vector<1x128xi1> to vector<8x128xi1>
    %118 = vector.broadcast %cst_56 : f32 to vector<8x128xf32>
    %119 = arith.select %117, %106, %118 : vector<8x128xi1>, vector<8x128xf32>
    %120 = arith.truncf %119 : vector<8x128xf32> to vector<8x128xbf16>
    %cst_57 = arith.constant dense<0.000000e+00> : vector<8x128xf32>
    %121 = tpu.matmul %68, %120, %cst_57 {dimension_numbers = #tpu.dot_dimension_numbers<[1], [0], [0], [1], [0, 0, 1, 1], [], []>} : vector<8x8xbf16>, vector<8x128xbf16>, vector<8x128xf32> -> vector<8x128xf32>
    %122 = arith.addf %105, %121 : vector<8x128xf32>
    %123 = vector.broadcast %69 : vector<8x1xf32> to vector<8x128xf32>
    %124 = arith.addf %122, %123 : vector<8x128xf32>
    %c0_58 = arith.constant 0 : index
    %c0_59 = arith.constant 0 : index
    %125 = vector.load %arg14[%c0_58, %c0_59] : memref<8x8xbf16, #tpu.memory_space<vmem>>, vector<8x8xbf16>
    %c0_60 = arith.constant 0 : index
    %c0_61 = arith.constant 0 : index
    %126 = vector.load %arg15[%c0_60, %c0_61] : memref<8x8xbf16, #tpu.memory_space<vmem>>, vector<8x8xbf16>
    %c0_62 = arith.constant 0 : index
    %c0_63 = arith.constant 0 : index
    %127 = vector.load %arg16[%c0_62, %c0_63] : memref<8x8xbf16, #tpu.memory_space<vmem>>, vector<8x8xbf16>
    %c0_64 = arith.constant 0 : index
    %c0_65 = arith.constant 0 : index
    %128 = vector.load %arg17[%c0_64, %c0_65] : memref<8x1xf32, #tpu.memory_space<vmem>>, vector<8x1xf32>
    %129 = tpu.iota {dimensions = array<i32: 1>} : vector<1x128xi32>
    %c16_i32_66 = arith.constant 16 : i32
    %c0_i32_67 = arith.constant 0 : i32
    %130 = arith.cmpi eq, %c16_i32_66, %c0_i32_67 : i32
    %c1_i32_68 = arith.constant 1 : i32
    %131 = arith.select %130, %c1_i32_68, %c16_i32_66 : i32
    %132 = vector.broadcast %131 : i32 to vector<1x128xi32>
    %133 = arith.remsi %129, %132 : vector<1x128xi32>
    %c0_i32_69 = arith.constant 0 : i32
    %134 = vector.broadcast %c0_i32_69 : i32 to vector<1x128xi32>
    %135 = arith.cmpi ne, %133, %134 : vector<1x128xi32>
    %c0_i32_70 = arith.constant 0 : i32
    %136 = vector.broadcast %c0_i32_70 : i32 to vector<1x128xi32>
    %137 = arith.cmpi slt, %133, %136 : vector<1x128xi32>
    %c0_i32_71 = arith.constant 0 : i32
    %138 = arith.cmpi slt, %131, %c0_i32_71 : i32
    %139 = vector.broadcast %138 : i1 to vector<1x128xi1>
    %140 = vector.broadcast %139 : vector<1x128xi1> to vector<1x128xi1>
    %141 = arith.xori %137, %140 : vector<1x128xi1>
    %142 = arith.andi %141, %135 : vector<1x128xi1>
    %143 = vector.broadcast %131 : i32 to vector<1x128xi32>
    %144 = arith.addi %133, %143 : vector<1x128xi32>
    %145 = arith.select %142, %144, %133 : vector<1x128xi1>, vector<1x128xi32>
    %c1_i32_72 = arith.constant 1 : i32
    %146 = tpu.dynamic_rotate %124 by %c1_i32_72 dim 1 : vector<8x128xf32>, i32 -> vector<8x128xf32>
    %c-1_i32_73 = arith.constant -1 : i32
    %147 = vector.broadcast %c-1_i32_73 : i32 to vector<1x128xi32>
    %148 = arith.addi %145, %147 : vector<1x128xi32>
    %c0_i32_74 = arith.constant 0 : i32
    %149 = vector.broadcast %c0_i32_74 : i32 to vector<1x128xi32>
    %150 = arith.cmpi sge, %148, %149 : vector<1x128xi32>
    %c-1_i32_75 = arith.constant -1 : i32
    %151 = vector.broadcast %c-1_i32_75 : i32 to vector<1x128xi32>
    %152 = arith.addi %145, %151 : vector<1x128xi32>
    %c16_i32_76 = arith.constant 16 : i32
    %153 = vector.broadcast %c16_i32_76 : i32 to vector<1x128xi32>
    %154 = arith.cmpi slt, %152, %153 : vector<1x128xi32>
    %155 = arith.andi %150, %154 : vector<1x128xi1>
    %cst_77 = arith.constant 0.000000e+00 : f32
    %156 = vector.shape_cast %155 : vector<1x128xi1> to vector<1x128xi1>
    %157 = vector.broadcast %156 : vector<1x128xi1> to vector<8x128xi1>
    %158 = vector.broadcast %cst_77 : f32 to vector<8x128xf32>
    %159 = arith.select %157, %146, %158 : vector<8x128xi1>, vector<8x128xf32>
    %160 = arith.truncf %159 : vector<8x128xf32> to vector<8x128xbf16>
    %cst_78 = arith.constant dense<0.000000e+00> : vector<8x128xf32>
    %161 = tpu.matmul %125, %160, %cst_78 {dimension_numbers = #tpu.dot_dimension_numbers<[1], [0], [0], [1], [0, 0, 1, 1], [], []>} : vector<8x8xbf16>, vector<8x128xbf16>, vector<8x128xf32> -> vector<8x128xf32>
    %162 = arith.truncf %124 : vector<8x128xf32> to vector<8x128xbf16>
    %cst_79 = arith.constant dense<0.000000e+00> : vector<8x128xf32>
    %163 = tpu.matmul %126, %162, %cst_79 {dimension_numbers = #tpu.dot_dimension_numbers<[1], [0], [0], [1], [0, 0, 1, 1], [], []>} : vector<8x8xbf16>, vector<8x128xbf16>, vector<8x128xf32> -> vector<8x128xf32>
    %164 = arith.addf %161, %163 : vector<8x128xf32>
    %c127_i32_80 = arith.constant 127 : i32
    %165 = tpu.dynamic_rotate %124 by %c127_i32_80 dim 1 : vector<8x128xf32>, i32 -> vector<8x128xf32>
    %c1_i32_81 = arith.constant 1 : i32
    %166 = vector.broadcast %c1_i32_81 : i32 to vector<1x128xi32>
    %167 = arith.addi %145, %166 : vector<1x128xi32>
    %c0_i32_82 = arith.constant 0 : i32
    %168 = vector.broadcast %c0_i32_82 : i32 to vector<1x128xi32>
    %169 = arith.cmpi sge, %167, %168 : vector<1x128xi32>
    %c1_i32_83 = arith.constant 1 : i32
    %170 = vector.broadcast %c1_i32_83 : i32 to vector<1x128xi32>
    %171 = arith.addi %145, %170 : vector<1x128xi32>
    %c16_i32_84 = arith.constant 16 : i32
    %172 = vector.broadcast %c16_i32_84 : i32 to vector<1x128xi32>
    %173 = arith.cmpi slt, %171, %172 : vector<1x128xi32>
    %174 = arith.andi %169, %173 : vector<1x128xi1>
    %cst_85 = arith.constant 0.000000e+00 : f32
    %175 = vector.shape_cast %174 : vector<1x128xi1> to vector<1x128xi1>
    %176 = vector.broadcast %175 : vector<1x128xi1> to vector<8x128xi1>
    %177 = vector.broadcast %cst_85 : f32 to vector<8x128xf32>
    %178 = arith.select %176, %165, %177 : vector<8x128xi1>, vector<8x128xf32>
    %179 = arith.truncf %178 : vector<8x128xf32> to vector<8x128xbf16>
    %cst_86 = arith.constant dense<0.000000e+00> : vector<8x128xf32>
    %180 = tpu.matmul %127, %179, %cst_86 {dimension_numbers = #tpu.dot_dimension_numbers<[1], [0], [0], [1], [0, 0, 1, 1], [], []>} : vector<8x8xbf16>, vector<8x128xbf16>, vector<8x128xf32> -> vector<8x128xf32>
    %181 = arith.addf %164, %180 : vector<8x128xf32>
    %182 = vector.broadcast %128 : vector<8x1xf32> to vector<8x128xf32>
    %183 = arith.addf %181, %182 : vector<8x128xf32>
    %c0_87 = arith.constant 0 : index
    %c0_88 = arith.constant 0 : index
    %184 = vector.load %arg2[%c0_87, %c0_88] : memref<8x128xf32, #tpu.memory_space<vmem>>, vector<8x128xf32>
    %c0_89 = arith.constant 0 : index
    %c0_90 = arith.constant 0 : index
    %185 = vector.load %arg3[%c0_89, %c0_90] : memref<8x128xf32, #tpu.memory_space<vmem>>, vector<8x128xf32>
    %c0_91 = arith.constant 0 : index
    %c0_92 = arith.constant 0 : index
    %186 = vector.load %arg18[%c0_91, %c0_92] : memref<128x8xbf16, #tpu.memory_space<vmem>>, vector<128x8xbf16>
    %187 = arith.truncf %6 : vector<8x128xf32> to vector<8x128xbf16>
    %cst_93 = arith.constant dense<0.000000e+00> : vector<128x128xf32>
    %188 = tpu.matmul %186, %187, %cst_93 {dimension_numbers = #tpu.dot_dimension_numbers<[1], [0], [0], [1], [0, 0, 1, 1], [], []>} : vector<128x8xbf16>, vector<8x128xbf16>, vector<128x128xf32> -> vector<128x128xf32>
    %c0_94 = arith.constant 0 : index
    %c0_95 = arith.constant 0 : index
    %189 = vector.load %arg19[%c0_94, %c0_95] : memref<128x8xbf16, #tpu.memory_space<vmem>>, vector<128x8xbf16>
    %190 = arith.truncf %183 : vector<8x128xf32> to vector<8x128xbf16>
    %cst_96 = arith.constant dense<0.000000e+00> : vector<128x128xf32>
    %191 = tpu.matmul %189, %190, %cst_96 {dimension_numbers = #tpu.dot_dimension_numbers<[1], [0], [0], [1], [0, 0, 1, 1], [], []>} : vector<128x8xbf16>, vector<8x128xbf16>, vector<128x128xf32> -> vector<128x128xf32>
    %192 = arith.addf %188, %191 : vector<128x128xf32>
    %c0_97 = arith.constant 0 : index
    %c0_98 = arith.constant 0 : index
    %193 = vector.load %arg20[%c0_97, %c0_98] : memref<128x8xbf16, #tpu.memory_space<vmem>>, vector<128x8xbf16>
    %194 = arith.truncf %184 : vector<8x128xf32> to vector<8x128xbf16>
    %cst_99 = arith.constant dense<0.000000e+00> : vector<128x128xf32>
    %195 = tpu.matmul %193, %194, %cst_99 {dimension_numbers = #tpu.dot_dimension_numbers<[1], [0], [0], [1], [0, 0, 1, 1], [], []>} : vector<128x8xbf16>, vector<8x128xbf16>, vector<128x128xf32> -> vector<128x128xf32>
    %196 = arith.addf %192, %195 : vector<128x128xf32>
    %c0_100 = arith.constant 0 : index
    %c0_101 = arith.constant 0 : index
    %197 = vector.load %arg21[%c0_100, %c0_101] : memref<128x8xbf16, #tpu.memory_space<vmem>>, vector<128x8xbf16>
    %198 = arith.truncf %185 : vector<8x128xf32> to vector<8x128xbf16>
    %cst_102 = arith.constant dense<0.000000e+00> : vector<128x128xf32>
    %199 = tpu.matmul %197, %198, %cst_102 {dimension_numbers = #tpu.dot_dimension_numbers<[1], [0], [0], [1], [0, 0, 1, 1], [], []>} : vector<128x8xbf16>, vector<8x128xbf16>, vector<128x128xf32> -> vector<128x128xf32>
    %200 = arith.addf %196, %199 : vector<128x128xf32>
    %c0_103 = arith.constant 0 : index
    %c0_104 = arith.constant 0 : index
    %201 = vector.load %arg22[%c0_103, %c0_104] : memref<128x1xf32, #tpu.memory_space<vmem>>, vector<128x1xf32>
    %202 = vector.broadcast %201 : vector<128x1xf32> to vector<128x128xf32>
    %203 = arith.addf %200, %202 : vector<128x128xf32>
    %c0_105 = arith.constant 0 : index
    %c0_106 = arith.constant 0 : index
    %204 = vector.load %arg23[%c0_105, %c0_106] : memref<8x128xbf16, #tpu.memory_space<vmem>>, vector<8x128xbf16>
    %c0_107 = arith.constant 0 : index
    %c0_108 = arith.constant 0 : index
    %205 = vector.load %arg24[%c0_107, %c0_108] : memref<8x1xf32, #tpu.memory_space<vmem>>, vector<8x1xf32>
    %206 = arith.truncf %203 : vector<128x128xf32> to vector<128x128xbf16>
    %cst_109 = arith.constant dense<0.000000e+00> : vector<8x128xf32>
    %207 = tpu.matmul %204, %206, %cst_109 {dimension_numbers = #tpu.dot_dimension_numbers<[1], [0], [0], [1], [0, 0, 1, 1], [], []>} : vector<8x128xbf16>, vector<128x128xbf16>, vector<8x128xf32> -> vector<8x128xf32>
    %208 = vector.broadcast %205 : vector<8x1xf32> to vector<8x128xf32>
    %209 = arith.addf %207, %208 : vector<8x128xf32>
    %c0_110 = arith.constant 0 : index
    %c0_111 = arith.constant 0 : index
    %210 = vector.load %arg25[%c0_110, %c0_111] : memref<8x1xf32, #tpu.memory_space<vmem>>, vector<8x1xf32>
    %211 = vector.broadcast %210 : vector<8x1xf32> to vector<8x128xf32>
    %212 = arith.mulf %209, %211 : vector<8x128xf32>
    %c0_112 = arith.constant 0 : index
    %c0_113 = arith.constant 0 : index
    %213 = vector.load %arg26[%c0_112, %c0_113] : memref<8x1xf32, #tpu.memory_space<vmem>>, vector<8x1xf32>
    %214 = vector.broadcast %213 : vector<8x1xf32> to vector<8x128xf32>
    %215 = arith.addf %212, %214 : vector<8x128xf32>
    %cst_114 = arith.constant 3.000000e+00 : f32
    %216 = vector.broadcast %cst_114 : f32 to vector<8x128xf32>
    %217 = arith.addf %215, %216 : vector<8x128xf32>
    %cst_115 = arith.constant 0.000000e+00 : f32
    %cst_116 = arith.constant 6.000000e+00 : f32
    %218 = vector.broadcast %cst_115 : f32 to vector<8x128xf32>
    %219 = arith.maximumf %218, %217 : vector<8x128xf32>
    %220 = vector.broadcast %cst_116 : f32 to vector<8x128xf32>
    %221 = arith.minimumf %220, %219 : vector<8x128xf32>
    %222 = arith.mulf %215, %221 : vector<8x128xf32>
    %cst_117 = arith.constant 0.166666672 : f32
    %223 = vector.broadcast %cst_117 : f32 to vector<8x128xf32>
    %224 = arith.mulf %222, %223 : vector<8x128xf32>
    %225 = arith.addf %224, %0 : vector<8x128xf32>
    %c0_118 = arith.constant 0 : index
    %c0_119 = arith.constant 0 : index
    %226 = vector.load %arg27[%c0_118, %c0_119] : memref<8x128xf32, #tpu.memory_space<vmem>>, vector<8x128xf32>
    tpu.vector_store %arg27[%c0_118, %c0_119], %225 {strides = array<i32>} : memref<8x128xf32, #tpu.memory_space<vmem>>, vector<8x128xf32>,
    return
  }
  func.func @transform_0(%arg0: i32) -> (i32, i32) {
    %c0_i32 = arith.constant 0 : i32
    %c0_i32_0 = arith.constant 0 : i32
    return %c0_i32, %arg0 : i32, i32
  }
  func.func @transform_1(%arg0: i32) -> (i32, i32) {
    %c0_i32 = arith.constant 0 : i32
    %c0_i32_0 = arith.constant 0 : i32
    return %c0_i32, %arg0 : i32, i32
  }
  func.func @transform_2(%arg0: i32) -> (i32, i32) {
    %c0_i32 = arith.constant 0 : i32
    %c0_i32_0 = arith.constant 0 : i32
    return %c0_i32, %arg0 : i32, i32
  }
  func.func @transform_3(%arg0: i32) -> (i32, i32) {
    %c0_i32 = arith.constant 0 : i32
    %c0_i32_0 = arith.constant 0 : i32
    %c0_i32_1 = arith.constant 0 : i32
    return %c0_i32, %c0_i32_0 : i32, i32
  }
  func.func @transform_4(%arg0: i32) -> (i32, i32) {
    %c0_i32 = arith.constant 0 : i32
    %c0_i32_0 = arith.constant 0 : i32
    %c0_i32_1 = arith.constant 0 : i32
    return %c0_i32, %c0_i32_0 : i32, i32
  }
  func.func @transform_5(%arg0: i32) -> (i32, i32) {
    %c0_i32 = arith.constant 0 : i32
    %c0_i32_0 = arith.constant 0 : i32
    %c0_i32_1 = arith.constant 0 : i32
    return %c0_i32, %c0_i32_0 : i32, i32
  }
  func.func @transform_6(%arg0: i32) -> (i32, i32) {
    %c0_i32 = arith.constant 0 : i32
    %c0_i32_0 = arith.constant 0 : i32
    %c0_i32_1 = arith.constant 0 : i32
    return %c0_i32, %c0_i32_0 : i32, i32
  }
  func.func @transform_7(%arg0: i32) -> (i32, i32) {
    %c0_i32 = arith.constant 0 : i32
    %c0_i32_0 = arith.constant 0 : i32
    %c0_i32_1 = arith.constant 0 : i32
    return %c0_i32, %c0_i32_0 : i32, i32
  }
  func.func @transform_8(%arg0: i32) -> (i32, i32) {
    %c0_i32 = arith.constant 0 : i32
    %c0_i32_0 = arith.constant 0 : i32
    %c0_i32_1 = arith.constant 0 : i32
    return %c0_i32, %c0_i32_0 : i32, i32
  }
  func.func @transform_9(%arg0: i32) -> (i32, i32) {
    %c0_i32 = arith.constant 0 : i32
    %c0_i32_0 = arith.constant 0 : i32
    %c0_i32_1 = arith.constant 0 : i32
    return %c0_i32, %c0_i32_0 : i32, i32
  }
  func.func @transform_10(%arg0: i32) -> (i32, i32) {
    %c0_i32 = arith.constant 0 : i32
    %c0_i32_0 = arith.constant 0 : i32
    %c0_i32_1 = arith.constant 0 : i32
    return %c0_i32, %c0_i32_0 : i32, i32
  }
  func.func @transform_11(%arg0: i32) -> (i32, i32) {
    %c0_i32 = arith.constant 0 : i32
    %c0_i32_0 = arith.constant 0 : i32
    %c0_i32_1 = arith.constant 0 : i32
    return %c0_i32, %c0_i32_0 : i32, i32
  }
  func.func @transform_12(%arg0: i32) -> (i32, i32) {
    %c0_i32 = arith.constant 0 : i32
    %c0_i32_0 = arith.constant 0 : i32
    %c0_i32_1 = arith.constant 0 : i32
    return %c0_i32, %c0_i32_0 : i32, i32
  }
  func.func @transform_13(%arg0: i32) -> (i32, i32) {
    %c0_i32 = arith.constant 0 : i32
    %c0_i32_0 = arith.constant 0 : i32
    %c0_i32_1 = arith.constant 0 : i32
    return %c0_i32, %c0_i32_0 : i32, i32
  }
  func.func @transform_14(%arg0: i32) -> (i32, i32) {
    %c0_i32 = arith.constant 0 : i32
    %c0_i32_0 = arith.constant 0 : i32
    %c0_i32_1 = arith.constant 0 : i32
    return %c0_i32, %c0_i32_0 : i32, i32
  }
  func.func @transform_15(%arg0: i32) -> (i32, i32) {
    %c0_i32 = arith.constant 0 : i32
    %c0_i32_0 = arith.constant 0 : i32
    %c0_i32_1 = arith.constant 0 : i32
    return %c0_i32, %c0_i32_0 : i32, i32
  }
  func.func @transform_16(%arg0: i32) -> (i32, i32) {
    %c0_i32 = arith.constant 0 : i32
    %c0_i32_0 = arith.constant 0 : i32
    %c0_i32_1 = arith.constant 0 : i32
    return %c0_i32, %c0_i32_0 : i32, i32
  }
  func.func @transform_17(%arg0: i32) -> (i32, i32) {
    %c0_i32 = arith.constant 0 : i32
    %c0_i32_0 = arith.constant 0 : i32
    %c0_i32_1 = arith.constant 0 : i32
    return %c0_i32, %c0_i32_0 : i32, i32
  }
  func.func @transform_18(%arg0: i32) -> (i32, i32) {
    %c0_i32 = arith.constant 0 : i32
    %c0_i32_0 = arith.constant 0 : i32
    %c0_i32_1 = arith.constant 0 : i32
    return %c0_i32, %c0_i32_0 : i32, i32
  }
  func.func @transform_19(%arg0: i32) -> (i32, i32) {
    %c0_i32 = arith.constant 0 : i32
    %c0_i32_0 = arith.constant 0 : i32
    %c0_i32_1 = arith.constant 0 : i32
    return %c0_i32, %c0_i32_0 : i32, i32
  }
  func.func @transform_20(%arg0: i32) -> (i32, i32) {
    %c0_i32 = arith.constant 0 : i32
    %c0_i32_0 = arith.constant 0 : i32
    %c0_i32_1 = arith.constant 0 : i32
    return %c0_i32, %c0_i32_0 : i32, i32
  }
  func.func @transform_21(%arg0: i32) -> (i32, i32) {
    %c0_i32 = arith.constant 0 : i32
    %c0_i32_0 = arith.constant 0 : i32
    %c0_i32_1 = arith.constant 0 : i32
    return %c0_i32, %c0_i32_0 : i32, i32
  }
  func.func @transform_22(%arg0: i32) -> (i32, i32) {
    %c0_i32 = arith.constant 0 : i32
    %c0_i32_0 = arith.constant 0 : i32
    %c0_i32_1 = arith.constant 0 : i32
    return %c0_i32, %c0_i32_0 : i32, i32
  }
  func.func @transform_23(%arg0: i32) -> (i32, i32) {
    %c0_i32 = arith.constant 0 : i32
    %c0_i32_0 = arith.constant 0 : i32
    %c0_i32_1 = arith.constant 0 : i32
    return %c0_i32, %c0_i32_0 : i32, i32
  }
  func.func @transform_24(%arg0: i32) -> (i32, i32) {
    %c0_i32 = arith.constant 0 : i32
    %c0_i32_0 = arith.constant 0 : i32
    %c0_i32_1 = arith.constant 0 : i32
    return %c0_i32, %c0_i32_0 : i32, i32
  }
  func.func @transform_25(%arg0: i32) -> (i32, i32) {
    %c0_i32 = arith.constant 0 : i32
    %c0_i32_0 = arith.constant 0 : i32
    %c0_i32_1 = arith.constant 0 : i32
    return %c0_i32, %c0_i32_0 : i32, i32
  }
  func.func @transform_26(%arg0: i32) -> (i32, i32) {
    %c0_i32 = arith.constant 0 : i32
    %c0_i32_0 = arith.constant 0 : i32
    return %c0_i32, %arg0 : i32, i32
  }
}

</mosaic_0001>

<llo_original>
// kernel: forward.3
$region0: #{forward.3}
  #allocation0 [shape = 'u32[]', space=smem, size = 0x4, offset = 0x4, fixed_abs, tag = 'smem constant byte address 0x4 - core index']
  #allocation1 [shape = 'u32[144,128]{1,0:T(1,128)}', space=vmem, size = 0x12000, scoped, tag = 'internal scratch']
  %s0 = inlined_call_operand.vmem [shape: f32[8,128], index: 0, kind: input, shape index: {}]
  %s1 = inlined_call_operand.vmem [shape: bf16[8,8], index: 1, kind: input, shape index: {}]
  %s2 = inlined_call_operand.vmem [shape: bf16[8,8], index: 2, kind: input, shape index: {}]
  %s3 = inlined_call_operand.vmem [shape: f32[8,1], index: 3, kind: input, shape index: {}]
  %s4 = inlined_call_operand.vmem [shape: bf16[8,8], index: 4, kind: input, shape index: {}]
  %s5 = inlined_call_operand.vmem [shape: bf16[8,8], index: 5, kind: input, shape index: {}]
  %s6 = inlined_call_operand.vmem [shape: f32[8,1], index: 6, kind: input, shape index: {}]
  %s7 = inlined_call_operand.vmem [shape: bf16[8,8], index: 7, kind: input, shape index: {}]
  %s8 = inlined_call_operand.vmem [shape: f32[8,1], index: 8, kind: input, shape index: {}]
  %s9 = inlined_call_operand.vmem [shape: bf16[8,8], index: 9, kind: input, shape index: {}]
  %s10 = inlined_call_operand.vmem [shape: bf16[8,8], index: 10, kind: input, shape index: {}]
  %s11 = inlined_call_operand.vmem [shape: f32[8,1], index: 11, kind: input, shape index: {}]
  %s12 = inlined_call_operand.vmem [shape: bf16[8,8], index: 12, kind: input, shape index: {}]
  %s13 = inlined_call_operand.vmem [shape: bf16[8,8], index: 13, kind: input, shape index: {}]
  %s14 = inlined_call_operand.vmem [shape: f32[8,1], index: 14, kind: input, shape index: {}]
  %s15 = inlined_call_operand.vmem [shape: bf16[8,8], index: 15, kind: input, shape index: {}]
  %s16 = inlined_call_operand.vmem [shape: f32[8,1], index: 16, kind: input, shape index: {}]
  %s17 = inlined_call_operand.vmem [shape: bf16[8,8], index: 17, kind: input, shape index: {}]
  %s18 = inlined_call_operand.vmem [shape: f32[8,1], index: 18, kind: input, shape index: {}]
  %s19 = inlined_call_operand.vmem [shape: f32[8,128], index: 19, kind: output, shape index: {}]
  %s20 = sld [smem:[#allocation0]]
  $region86: #{forward.3} parent=0
    _
  %s22 = ssub.s32 1, %s20
  %s23 = scalar_select 0, %s22, %s20
  // Predicated region
  $region2: #{forward.3} parent=0 // pred_check
    _
  $region3: #{forward.3} parent=0 // pred_check_branch
    %25 = sbr.rel (0) target = $region5
  $region4: #{forward.3} parent=0 // pred_region
    _
  $region5: #{forward.3} parent=0 // pred_fallthru
    _
  // Predicated region
  $region6: #{forward.3} parent=0 // pred_check
    _
  $region7: #{forward.3} parent=0 // pred_check_branch
    %27 = sbr.rel (0) target = $region9
  $region8: #{forward.3} parent=0 // pred_region
    _
  $region9: #{forward.3} parent=0 // pred_fallthru
    _
  // Predicated region
  $region10: #{forward.3} parent=0 // pred_check
    _
  $region11: #{forward.3} parent=0 // pred_check_branch
    %29 = sbr.rel (0) target = $region13
  $region12: #{forward.3} parent=0 // pred_region
    _
  $region13: #{forward.3} parent=0 // pred_fallthru
    _
  // Predicated region
  $region14: #{forward.3} parent=0 // pred_check
    _
  $region15: #{forward.3} parent=0 // pred_check_branch
    %31 = sbr.rel (0) target = $region17
  $region16: #{forward.3} parent=0 // pred_region
    _
  $region17: #{forward.3} parent=0 // pred_fallthru
    _
  // Predicated region
  $region18: #{forward.3} parent=0 // pred_check
    _
  $region19: #{forward.3} parent=0 // pred_check_branch
    %33 = sbr.rel (0) target = $region21
  $region20: #{forward.3} parent=0 // pred_region
    _
  $region21: #{forward.3} parent=0 // pred_fallthru
    _
  // Predicated region
  $region22: #{forward.3} parent=0 // pred_check
    _
  $region23: #{forward.3} parent=0 // pred_check_branch
    %35 = sbr.rel (0) target = $region25
  $region24: #{forward.3} parent=0 // pred_region
    _
  $region25: #{forward.3} parent=0 // pred_fallthru
    _
  // Predicated region
  $region26: #{forward.3} parent=0 // pred_check
    _
  $region27: #{forward.3} parent=0 // pred_check_branch
    %37 = sbr.rel (0) target = $region29
  $region28: #{forward.3} parent=0 // pred_region
    _
  $region29: #{forward.3} parent=0 // pred_fallthru
    _
  // Predicated region
  $region30: #{forward.3} parent=0 // pred_check
    _
  $region31: #{forward.3} parent=0 // pred_check_branch
    %39 = sbr.rel (0) target = $region33
  $region32: #{forward.3} parent=0 // pred_region
    _
  $region33: #{forward.3} parent=0 // pred_fallthru
    _
  // Predicated region
  $region34: #{forward.3} parent=0 // pred_check
    _
  $region35: #{forward.3} parent=0 // pred_check_branch
    %41 = sbr.rel (0) target = $region37
  $region36: #{forward.3} parent=0 // pred_region
    _
  $region37: #{forward.3} parent=0 // pred_fallthru
    _
  // Predicated region
  $region38: #{forward.3} parent=0 // pred_check
    _
  $region39: #{forward.3} parent=0 // pred_check_branch
    %43 = sbr.rel (0) target = $region41
  $region40: #{forward.3} parent=0 // pred_region
    _
  $region41: #{forward.3} parent=0 // pred_fallthru
    _
  // Predicated region
  $region42: #{forward.3} parent=0 // pred_check
    _
  $region43: #{forward.3} parent=0 // pred_check_branch
    %45 = sbr.rel (0) target = $region45
  $region44: #{forward.3} parent=0 // pred_region
    _
  $region45: #{forward.3} parent=0 // pred_fallthru
    _
  // Predicated region
  $region46: #{forward.3} parent=0 // pred_check
    _
  $region47: #{forward.3} parent=0 // pred_check_branch
    %47 = sbr.rel (0) target = $region49
  $region48: #{forward.3} parent=0 // pred_region
    _
  $region49: #{forward.3} parent=0 // pred_fallthru
    _
  // Predicated region
  $region50: #{forward.3} parent=0 // pred_check
    _
  $region51: #{forward.3} parent=0 // pred_check_branch
    %49 = sbr.rel (0) target = $region53
  $region52: #{forward.3} parent=0 // pred_region
    _
  $region53: #{forward.3} parent=0 // pred_fallthru
    _
  // Predicated region
  $region54: #{forward.3} parent=0 // pred_check
    _
  $region55: #{forward.3} parent=0 // pred_check_branch
    %51 = sbr.rel (0) target = $region57
  $region56: #{forward.3} parent=0 // pred_region
    _
  $region57: #{forward.3} parent=0 // pred_fallthru
    _
  // Predicated region
  $region58: #{forward.3} parent=0 // pred_check
    _
  $region59: #{forward.3} parent=0 // pred_check_branch
    %53 = sbr.rel (0) target = $region61
  $region60: #{forward.3} parent=0 // pred_region
    _
  $region61: #{forward.3} parent=0 // pred_fallthru
    _
  // Predicated region
  $region62: #{forward.3} parent=0 // pred_check
    _
  $region63: #{forward.3} parent=0 // pred_check_branch
    %55 = sbr.rel (0) target = $region65
  $region64: #{forward.3} parent=0 // pred_region
    _
  $region65: #{forward.3} parent=0 // pred_fallthru
    _
  // Predicated region
  $region66: #{forward.3} parent=0 // pred_check
    _
  $region67: #{forward.3} parent=0 // pred_check_branch
    %57 = sbr.rel (0) target = $region69
  $region68: #{forward.3} parent=0 // pred_region
    _
  $region69: #{forward.3} parent=0 // pred_fallthru
    _
  // Predicated region
  $region70: #{forward.3} parent=0 // pred_check
    _
  $region71: #{forward.3} parent=0 // pred_check_branch
    %59 = sbr.rel (0) target = $region73
  $region72: #{forward.3} parent=0 // pred_region
    _
  $region73: #{forward.3} parent=0 // pred_fallthru
    _
  // Predicated region
  $region74: #{forward.3} parent=0 // pred_check
    _
  $region75: #{forward.3} parent=0 // pred_check_branch
    %61 = sbr.rel (0) target = $region77
  $region76: #{forward.3} parent=0 // pred_region
    _
  $region77: #{forward.3} parent=0 // pred_fallthru
    _
  %v63 = vld [vmem:[%s0] sm:$0xff]
  %v64 = vld [vmem:[%s1] sm:$0xf]
  %v65 = vld [vmem:[%s2] sm:$0xf]
  %v66 = vld [vmem:[%s3] sm:$0xff]
  %v67 = vld [vmem:[%s4] sm:$0xf]
  %v68 = vld [vmem:[%s5] sm:$0xf]
  %v69 = vld [vmem:[%s6] sm:$0xff]
  %v70 = vlaneseq
  %v71 = vand.u32 %v70, 127
  %vm72 = vcmp.lt.s32.totalorder %v71, 0
  %v73 = vsub.s32 0, %v71
  %v74 = vsel %vm72, %v73, %v71
  %v75 = vshrl.u32 %v74, 4
  %v76 = vand.u32 %v74, 15
  %v77 = vsub.s32 0, %v76
  %v78 = vsel %vm72, %v77, %v76
  %vm79 = vcmp.ne.s32.totalorder %v78, 0
  %vm80 = vcmp.lt.s32.totalorder %v78, 0
  %vm81 = vmand %vm80, %vm79
  %v82 = vadd.s32 %v78, 16
  %v83 = vsel %vm81, %v82, %v78
  %84 = vrot.lane.b32.xlu0 %v63, 1
  %v85 = vpop.permute.xlu0 %84
  %v86 = vadd.s32 %v83, 4294967295
  %vm87 = vcmp.ge.s32.totalorder %v86, 0
  %vm88 = vcmp.lt.s32.totalorder %v86, 16
  %vm89 = vmand %vm87, %vm88
  %v90 = vsel %vm89, 1, 0
  %vm91 = vcmp.eq.s32.totalorder %v90, 1
  %v92 = vsel %vm91, %v85, 0.0
  %v93 = vpack.c.bf16 %v92, %v92
  %v94 = vpack.c.bf16 %v63, %v63
  %vm95 = vcmask 64512
  %v97 = vsel %vm95, %v65, 0
  %vm99 = vcmask 1043456
  %v101 = vsel %vm99, %v94, 0
  %103 = vmatprep.subr.bf16.mxu0 0
  %104 = vmatpush1.bf16.msra.mxu0 %v101
  %105 = vmatprep.subr.bf16.mxu0 0
  %106 = vmatpush1.bf16.msra.mxu0 0
  %107 = vmatprep.subr.bf16.mxu0 0
  %108 = vmatpush1.bf16.msra.mxu0 0
  %109 = vmatprep.subr.bf16.mxu0 0
  %110 = vmatpush1.bf16.msra.mxu0 0
  %111 = vmatprep.subr.bf16.mxu0 0
  %112 = vmatpush1.bf16.msra.mxu0 0
  %113 = vmatprep.subr.bf16.mxu0 0
  %114 = vmatpush1.bf16.msra.mxu0 0
  %115 = vmatprep.subr.bf16.mxu0 0
  %116 = vmatpush1.bf16.msra.mxu0 0
  %117 = vmatprep.subr.bf16.mxu0 0
  %118 = vmatpush1.bf16.msra.mxu0 0
  %119 = vmatprep.subr.bf16.mxu0 0
  %120 = vmatpush1.bf16.msra.mxu0 0
  %121 = vmatprep.subr.bf16.mxu0 0
  %122 = vmatpush1.bf16.msra.mxu0 0
  %123 = vmatprep.subr.bf16.mxu0 0
  %124 = vmatpush1.bf16.msra.mxu0 0
  %125 = vmatprep.subr.bf16.mxu0 0
  %126 = vmatpush1.bf16.msra.mxu0 0
  %127 = vmatprep.subr.bf16.mxu0 0
  %128 = vmatpush1.bf16.msra.mxu0 0
  %129 = vmatprep.subr.bf16.mxu0 0
  %130 = vmatpush1.bf16.msra.mxu0 0
  %131 = vmatprep.subr.bf16.mxu0 0
  %132 = vmatpush1.bf16.msra.mxu0 0
  %133 = vmatprep.subr.bf16.mxu0 0
  %134 = vmatpush1.bf16.msra.mxu0 0
  %135 = vmatprep.mubr.bf16.mxu0 0
  %136 = vmatmul.mubr.bf16.gmra.mrb[0].mxu0 %v97
  %v137 = vpop.f32.mrb[0].mxu0
  %v138 = vadd.f32 0.0, %v137
  %v139 = vpop.f32.mrb[0].mxu0
  %v140 = vpop.f32.mrb[0].mxu0
  %v141 = vpop.f32.mrb[0].mxu0
  %142 = vdwg.mxu0
  %v144 = vsel %vm95, %v64, 0
  %v147 = vsel %vm99, %v93, 0
  %149 = vmatprep.subr.bf16.mxu0 0
  %150 = vmatpush1.bf16.msra.mxu0 %v147
  %151 = vmatprep.subr.bf16.mxu0 0
  %152 = vmatpush1.bf16.msra.mxu0 0
  %153 = vmatprep.subr.bf16.mxu0 0
  %154 = vmatpush1.bf16.msra.mxu0 0
  %155 = vmatprep.subr.bf16.mxu0 0
  %156 = vmatpush1.bf16.msra.mxu0 0
  %157 = vmatprep.subr.bf16.mxu0 0
  %158 = vmatpush1.bf16.msra.mxu0 0
  %159 = vmatprep.subr.bf16.mxu0 0
  %160 = vmatpush1.bf16.msra.mxu0 0
  %161 = vmatprep.subr.bf16.mxu0 0
  %162 = vmatpush1.bf16.msra.mxu0 0
  %163 = vmatprep.subr.bf16.mxu0 0
  %164 = vmatpush1.bf16.msra.mxu0 0
  %165 = vmatprep.subr.bf16.mxu0 0
  %166 = vmatpush1.bf16.msra.mxu0 0
  %167 = vmatprep.subr.bf16.mxu0 0
  %168 = vmatpush1.bf16.msra.mxu0 0
  %169 = vmatprep.subr.bf16.mxu0 0
  %170 = vmatpush1.bf16.msra.mxu0 0
  %171 = vmatprep.subr.bf16.mxu0 0
  %172 = vmatpush1.bf16.msra.mxu0 0
  %173 = vmatprep.subr.bf16.mxu0 0
  %174 = vmatpush1.bf16.msra.mxu0 0
  %175 = vmatprep.subr.bf16.mxu0 0
  %176 = vmatpush1.bf16.msra.mxu0 0
  %177 = vmatprep.subr.bf16.mxu0 0
  %178 = vmatpush1.bf16.msra.mxu0 0
  %179 = vmatprep.subr.bf16.mxu0 0
  %180 = vmatpush1.bf16.msra.mxu0 0
  %181 = vmatprep.mubr.bf16.mxu0 0
  %182 = vmatmul.mubr.bf16.gmra.mrb[0].mxu0 %v144
  %v183 = vpop.f32.mrb[0].mxu0
  %v184 = vadd.f32 %v138, %v183
  %v185 = vpop.f32.mrb[0].mxu0
  %v186 = vpop.f32.mrb[0].mxu0
  %v187 = vpop.f32.mrb[0].mxu0
  %188 = vdwg.mxu0
  %190 = vset.pattern.permute.xlu0 0
  %191 = vperm.xlu0 %190, %v66
  %v192 = vpop.permute.xlu0 %191
  %v194 = vadd.f32 %v184, %v192
  %v195 = vmax.f32 %v194, 0.0
  %196 = vrot.lane.b32.xlu0 %v195, 1
  %v197 = vpop.permute.xlu0 %196
  %v198 = vsel %vm91, %v197, 0.0
  %v199 = vpack.c.bf16 %v198, %v198
  %v200 = vpack.c.bf16 %v195, %v195
  %v202 = vsel %vm95, %v68, 0
  %v205 = vsel %vm99, %v200, 0
  %207 = vmatprep.subr.bf16.mxu0 0
  %208 = vmatpush1.bf16.msra.mxu0 %v205
  %209 = vmatprep.subr.bf16.mxu0 0
  %210 = vmatpush1.bf16.msra.mxu0 0
  %211 = vmatprep.subr.bf16.mxu0 0
  %212 = vmatpush1.bf16.msra.mxu0 0
  %213 = vmatprep.subr.bf16.mxu0 0
  %214 = vmatpush1.bf16.msra.mxu0 0
  %215 = vmatprep.subr.bf16.mxu0 0
  %216 = vmatpush1.bf16.msra.mxu0 0
  %217 = vmatprep.subr.bf16.mxu0 0
  %218 = vmatpush1.bf16.msra.mxu0 0
  %219 = vmatprep.subr.bf16.mxu0 0
  %220 = vmatpush1.bf16.msra.mxu0 0
  %221 = vmatprep.subr.bf16.mxu0 0
  %222 = vmatpush1.bf16.msra.mxu0 0
  %223 = vmatprep.subr.bf16.mxu0 0
  %224 = vmatpush1.bf16.msra.mxu0 0
  %225 = vmatprep.subr.bf16.mxu0 0
  %226 = vmatpush1.bf16.msra.mxu0 0
  %227 = vmatprep.subr.bf16.mxu0 0
  %228 = vmatpush1.bf16.msra.mxu0 0
  %229 = vmatprep.subr.bf16.mxu0 0
  %230 = vmatpush1.bf16.msra.mxu0 0
  %231 = vmatprep.subr.bf16.mxu0 0
  %232 = vmatpush1.bf16.msra.mxu0 0
  %233 = vmatprep.subr.bf16.mxu0 0
  %234 = vmatpush1.bf16.msra.mxu0 0
  %235 = vmatprep.subr.bf16.mxu0 0
  %236 = vmatpush1.bf16.msra.mxu0 0
  %237 = vmatprep.subr.bf16.mxu0 0
  %238 = vmatpush1.bf16.msra.mxu0 0
  %239 = vmatprep.mubr.bf16.mxu0 0
  %240 = vmatmul.mubr.bf16.gmra.mrb[0].mxu0 %v202
  %v241 = vpop.f32.mrb[0].mxu0
  %v242 = vadd.f32 0.0, %v241
  %v243 = vpop.f32.mrb[0].mxu0
  %v244 = vpop.f32.mrb[0].mxu0
  %v245 = vpop.f32.mrb[0].mxu0
  %246 = vdwg.mxu0
  %v248 = vsel %vm95, %v67, 0
  %v251 = vsel %vm99, %v199, 0
  %253 = vmatprep.subr.bf16.mxu0 0
  %254 = vmatpush1.bf16.msra.mxu0 %v251
  %255 = vmatprep.subr.bf16.mxu0 0
  %256 = vmatpush1.bf16.msra.mxu0 0
  %257 = vmatprep.subr.bf16.mxu0 0
  %258 = vmatpush1.bf16.msra.mxu0 0
  %259 = vmatprep.subr.bf16.mxu0 0
  %260 = vmatpush1.bf16.msra.mxu0 0
  %261 = vmatprep.subr.bf16.mxu0 0
  %262 = vmatpush1.bf16.msra.mxu0 0
  %263 = vmatprep.subr.bf16.mxu0 0
  %264 = vmatpush1.bf16.msra.mxu0 0
  %265 = vmatprep.subr.bf16.mxu0 0
  %266 = vmatpush1.bf16.msra.mxu0 0
  %267 = vmatprep.subr.bf16.mxu0 0
  %268 = vmatpush1.bf16.msra.mxu0 0
  %269 = vmatprep.subr.bf16.mxu0 0
  %270 = vmatpush1.bf16.msra.mxu0 0
  %271 = vmatprep.subr.bf16.mxu0 0
  %272 = vmatpush1.bf16.msra.mxu0 0
  %273 = vmatprep.subr.bf16.mxu0 0
  %274 = vmatpush1.bf16.msra.mxu0 0
  %275 = vmatprep.subr.bf16.mxu0 0
  %276 = vmatpush1.bf16.msra.mxu0 0
  %277 = vmatprep.subr.bf16.mxu0 0
  %278 = vmatpush1.bf16.msra.mxu0 0
  %279 = vmatprep.subr.bf16.mxu0 0
  %280 = vmatpush1.bf16.msra.mxu0 0
  %281 = vmatprep.subr.bf16.mxu0 0
  %282 = vmatpush1.bf16.msra.mxu0 0
  %283 = vmatprep.subr.bf16.mxu0 0
  %284 = vmatpush1.bf16.msra.mxu0 0
  %285 = vmatprep.mubr.bf16.mxu0 0
  %286 = vmatmul.mubr.bf16.gmra.mrb[0].mxu0 %v248
  %v287 = vpop.f32.mrb[0].mxu0
  %v288 = vadd.f32 %v242, %v287
  %v289 = vpop.f32.mrb[0].mxu0
  %v290 = vpop.f32.mrb[0].mxu0
  %v291 = vpop.f32.mrb[0].mxu0
  %292 = vdwg.mxu0
  %294 = vset.pattern.permute.xlu0 0
  %295 = vperm.xlu0 %294, %v69
  %v296 = vpop.permute.xlu0 %295
  %v298 = vadd.f32 %v288, %v296
  %v299 = vmax.f32 %v298, 0.0
  %v300 = vld [vmem:[%s7] sm:$0xf]
  %v301 = vld [vmem:[%s8] sm:$0xff]
  %303 = vset.pattern.permute.xlu0 0
  %304 = vperm.xlu0 %303, %v301
  %v305 = vpop.permute.xlu0 %304
  %v308 = vsel %vm95, %v300, 0
  %310 = vmatprep.subr.bf16.mxu0 0
  %311 = vmatpush1.bf16.msra.mxu0 %v101
  %312 = vmatprep.subr.bf16.mxu0 0
  %313 = vmatpush1.bf16.msra.mxu0 0
  %314 = vmatprep.subr.bf16.mxu0 0
  %315 = vmatpush1.bf16.msra.mxu0 0
  %316 = vmatprep.subr.bf16.mxu0 0
  %317 = vmatpush1.bf16.msra.mxu0 0
  %318 = vmatprep.subr.bf16.mxu0 0
  %319 = vmatpush1.bf16.msra.mxu0 0
  %320 = vmatprep.subr.bf16.mxu0 0
  %321 = vmatpush1.bf16.msra.mxu0 0
  %322 = vmatprep.subr.bf16.mxu0 0
  %323 = vmatpush1.bf16.msra.mxu0 0
  %324 = vmatprep.subr.bf16.mxu0 0
  %325 = vmatpush1.bf16.msra.mxu0 0
  %326 = vmatprep.subr.bf16.mxu0 0
  %327 = vmatpush1.bf16.msra.mxu0 0
  %328 = vmatprep.subr.bf16.mxu0 0
  %329 = vmatpush1.bf16.msra.mxu0 0
  %330 = vmatprep.subr.bf16.mxu0 0
  %331 = vmatpush1.bf16.msra.mxu0 0
  %332 = vmatprep.subr.bf16.mxu0 0
  %333 = vmatpush1.bf16.msra.mxu0 0
  %334 = vmatprep.subr.bf16.mxu0 0
  %335 = vmatpush1.bf16.msra.mxu0 0
  %336 = vmatprep.subr.bf16.mxu0 0
  %337 = vmatpush1.bf16.msra.mxu0 0
  %338 = vmatprep.subr.bf16.mxu0 0
  %339 = vmatpush1.bf16.msra.mxu0 0
  %340 = vmatprep.subr.bf16.mxu0 0
  %341 = vmatpush1.bf16.msra.mxu0 0
  %342 = vmatprep.mubr.bf16.mxu0 0
  %343 = vmatmul.mubr.bf16.gmra.mrb[0].mxu0 %v308
  %v344 = vpop.f32.mrb[0].mxu0
  %v345 = vadd.f32 %v305, %v344
  %v346 = vpop.f32.mrb[0].mxu0
  %v347 = vpop.f32.mrb[0].mxu0
  %v348 = vpop.f32.mrb[0].mxu0
  %349 = vdwg.mxu0
  %v350 = vadd.f32 %v299, %v345
  %v351 = vmax.f32 %v350, 0.0
  %v352 = vld [vmem:[%s9] sm:$0xf]
  %v353 = vld [vmem:[%s10] sm:$0xf]
  %v354 = vld [vmem:[%s11] sm:$0xff]
  %v355 = vld [vmem:[%s12] sm:$0xf]
  %v356 = vld [vmem:[%s13] sm:$0xf]
  %v357 = vld [vmem:[%s14] sm:$0xff]
  %358 = vrot.lane.b32.xlu0 %v351, 2
  %v359 = vpop.permute.xlu0 %358
  %v360 = vadd.s32 %v83, 4294967294
  %vm361 = vcmp.ge.s32.totalorder %v360, 0
  %vm362 = vcmp.lt.s32.totalorder %v360, 16
  %vm363 = vmand %vm361, %vm362
  %v364 = vsel %vm363, 1, 0
  %vm365 = vcmp.eq.s32.totalorder %v364, 1
  %v366 = vsel %vm365, %v359, 0.0
  %v367 = vpack.c.bf16 %v366, %v366
  %v368 = vpack.c.bf16 %v351, %v351
  %v370 = vsel %vm95, %v353, 0
  %v373 = vsel %vm99, %v368, 0
  %375 = vmatprep.subr.bf16.mxu0 0
  %376 = vmatpush1.bf16.msra.mxu0 %v373
  %377 = vmatprep.subr.bf16.mxu0 0
  %378 = vmatpush1.bf16.msra.mxu0 0
  %379 = vmatprep.subr.bf16.mxu0 0
  %380 = vmatpush1.bf16.msra.mxu0 0
  %381 = vmatprep.subr.bf16.mxu0 0
  %382 = vmatpush1.bf16.msra.mxu0 0
  %383 = vmatprep.subr.bf16.mxu0 0
  %384 = vmatpush1.bf16.msra.mxu0 0
  %385 = vmatprep.subr.bf16.mxu0 0
  %386 = vmatpush1.bf16.msra.mxu0 0
  %387 = vmatprep.subr.bf16.mxu0 0
  %388 = vmatpush1.bf16.msra.mxu0 0
  %389 = vmatprep.subr.bf16.mxu0 0
  %390 = vmatpush1.bf16.msra.mxu0 0
  %391 = vmatprep.subr.bf16.mxu0 0
  %392 = vmatpush1.bf16.msra.mxu0 0
  %393 = vmatprep.subr.bf16.mxu0 0
  %394 = vmatpush1.bf16.msra.mxu0 0
  %395 = vmatprep.subr.bf16.mxu0 0
  %396 = vmatpush1.bf16.msra.mxu0 0
  %397 = vmatprep.subr.bf16.mxu0 0
  %398 = vmatpush1.bf16.msra.mxu0 0
  %399 = vmatprep.subr.bf16.mxu0 0
  %400 = vmatpush1.bf16.msra.mxu0 0
  %401 = vmatprep.subr.bf16.mxu0 0
  %402 = vmatpush1.bf16.msra.mxu0 0
  %403 = vmatprep.subr.bf16.mxu0 0
  %404 = vmatpush1.bf16.msra.mxu0 0
  %405 = vmatprep.subr.bf16.mxu0 0
  %406 = vmatpush1.bf16.msra.mxu0 0
  %407 = vmatprep.mubr.bf16.mxu0 0
  %408 = vmatmul.mubr.bf16.gmra.mrb[0].mxu0 %v370
  %v409 = vpop.f32.mrb[0].mxu0
  %v410 = vadd.f32 0.0, %v409
  %v411 = vpop.f32.mrb[0].mxu0
  %v412 = vpop.f32.mrb[0].mxu0
  %v413 = vpop.f32.mrb[0].mxu0
  %414 = vdwg.mxu0
  %v416 = vsel %vm95, %v352, 0
  %v419 = vsel %vm99, %v367, 0
  %421 = vmatprep.subr.bf16.mxu0 0
  %422 = vmatpush1.bf16.msra.mxu0 %v419
  %423 = vmatprep.subr.bf16.mxu0 0
  %424 = vmatpush1.bf16.msra.mxu0 0
  %425 = vmatprep.subr.bf16.mxu0 0
  %426 = vmatpush1.bf16.msra.mxu0 0
  %427 = vmatprep.subr.bf16.mxu0 0
  %428 = vmatpush1.bf16.msra.mxu0 0
  %429 = vmatprep.subr.bf16.mxu0 0
  %430 = vmatpush1.bf16.msra.mxu0 0
  %431 = vmatprep.subr.bf16.mxu0 0
  %432 = vmatpush1.bf16.msra.mxu0 0
  %433 = vmatprep.subr.bf16.mxu0 0
  %434 = vmatpush1.bf16.msra.mxu0 0
  %435 = vmatprep.subr.bf16.mxu0 0
  %436 = vmatpush1.bf16.msra.mxu0 0
  %437 = vmatprep.subr.bf16.mxu0 0
  %438 = vmatpush1.bf16.msra.mxu0 0
  %439 = vmatprep.subr.bf16.mxu0 0
  %440 = vmatpush1.bf16.msra.mxu0 0
  %441 = vmatprep.subr.bf16.mxu0 0
  %442 = vmatpush1.bf16.msra.mxu0 0
  %443 = vmatprep.subr.bf16.mxu0 0
  %444 = vmatpush1.bf16.msra.mxu0 0
  %445 = vmatprep.subr.bf16.mxu0 0
  %446 = vmatpush1.bf16.msra.mxu0 0
  %447 = vmatprep.subr.bf16.mxu0 0
  %448 = vmatpush1.bf16.msra.mxu0 0
  %449 = vmatprep.subr.bf16.mxu0 0
  %450 = vmatpush1.bf16.msra.mxu0 0
  %451 = vmatprep.subr.bf16.mxu0 0
  %452 = vmatpush1.bf16.msra.mxu0 0
  %453 = vmatprep.mubr.bf16.mxu0 0
  %454 = vmatmul.mubr.bf16.gmra.mrb[0].mxu0 %v416
  %v455 = vpop.f32.mrb[0].mxu0
  %v456 = vadd.f32 %v410, %v455
  %v457 = vpop.f32.mrb[0].mxu0
  %v458 = vpop.f32.mrb[0].mxu0
  %v459 = vpop.f32.mrb[0].mxu0
  %460 = vdwg.mxu0
  %462 = vset.pattern.permute.xlu0 0
  %463 = vperm.xlu0 %462, %v354
  %v464 = vpop.permute.xlu0 %463
  %v466 = vadd.f32 %v456, %v464
  %v467 = vmax.f32 %v466, 0.0
  %468 = vrot.lane.b32.xlu0 %v467, 2
  %v469 = vpop.permute.xlu0 %468
  %v470 = vsel %vm365, %v469, 0.0
  %v471 = vpack.c.bf16 %v470, %v470
  %v472 = vpack.c.bf16 %v467, %v467
  %v474 = vsel %vm95, %v356, 0
  %v477 = vsel %vm99, %v472, 0
  %479 = vmatprep.subr.bf16.mxu0 0
  %480 = vmatpush1.bf16.msra.mxu0 %v477
  %481 = vmatprep.subr.bf16.mxu0 0
  %482 = vmatpush1.bf16.msra.mxu0 0
  %483 = vmatprep.subr.bf16.mxu0 0
  %484 = vmatpush1.bf16.msra.mxu0 0
  %485 = vmatprep.subr.bf16.mxu0 0
  %486 = vmatpush1.bf16.msra.mxu0 0
  %487 = vmatprep.subr.bf16.mxu0 0
  %488 = vmatpush1.bf16.msra.mxu0 0
  %489 = vmatprep.subr.bf16.mxu0 0
  %490 = vmatpush1.bf16.msra.mxu0 0
  %491 = vmatprep.subr.bf16.mxu0 0
  %492 = vmatpush1.bf16.msra.mxu0 0
  %493 = vmatprep.subr.bf16.mxu0 0
  %494 = vmatpush1.bf16.msra.mxu0 0
  %495 = vmatprep.subr.bf16.mxu0 0
  %496 = vmatpush1.bf16.msra.mxu0 0
  %497 = vmatprep.subr.bf16.mxu0 0
  %498 = vmatpush1.bf16.msra.mxu0 0
  %499 = vmatprep.subr.bf16.mxu0 0
  %500 = vmatpush1.bf16.msra.mxu0 0
  %501 = vmatprep.subr.bf16.mxu0 0
  %502 = vmatpush1.bf16.msra.mxu0 0
  %503 = vmatprep.subr.bf16.mxu0 0
  %504 = vmatpush1.bf16.msra.mxu0 0
  %505 = vmatprep.subr.bf16.mxu0 0
  %506 = vmatpush1.bf16.msra.mxu0 0
  %507 = vmatprep.subr.bf16.mxu0 0
  %508 = vmatpush1.bf16.msra.mxu0 0
  %509 = vmatprep.subr.bf16.mxu0 0
  %510 = vmatpush1.bf16.msra.mxu0 0
  %511 = vmatprep.mubr.bf16.mxu0 0
  %512 = vmatmul.mubr.bf16.gmra.mrb[0].mxu0 %v474
  %v513 = vpop.f32.mrb[0].mxu0
  %v514 = vadd.f32 0.0, %v513
  %v515 = vpop.f32.mrb[0].mxu0
  %v516 = vpop.f32.mrb[0].mxu0
  %v517 = vpop.f32.mrb[0].mxu0
  %518 = vdwg.mxu0
  %v520 = vsel %vm95, %v355, 0
  %v523 = vsel %vm99, %v471, 0
  %525 = vmatprep.subr.bf16.mxu0 0
  %526 = vmatpush1.bf16.msra.mxu0 %v523
  %527 = vmatprep.subr.bf16.mxu0 0
  %528 = vmatpush1.bf16.msra.mxu0 0
  %529 = vmatprep.subr.bf16.mxu0 0
  %530 = vmatpush1.bf16.msra.mxu0 0
  %531 = vmatprep.subr.bf16.mxu0 0
  %532 = vmatpush1.bf16.msra.mxu0 0
  %533 = vmatprep.subr.bf16.mxu0 0
  %534 = vmatpush1.bf16.msra.mxu0 0
  %535 = vmatprep.subr.bf16.mxu0 0
  %536 = vmatpush1.bf16.msra.mxu0 0
  %537 = vmatprep.subr.bf16.mxu0 0
  %538 = vmatpush1.bf16.msra.mxu0 0
  %539 = vmatprep.subr.bf16.mxu0 0
  %540 = vmatpush1.bf16.msra.mxu0 0
  %541 = vmatprep.subr.bf16.mxu0 0
  %542 = vmatpush1.bf16.msra.mxu0 0
  %543 = vmatprep.subr.bf16.mxu0 0
  %544 = vmatpush1.bf16.msra.mxu0 0
  %545 = vmatprep.subr.bf16.mxu0 0
  %546 = vmatpush1.bf16.msra.mxu0 0
  %547 = vmatprep.subr.bf16.mxu0 0
  %548 = vmatpush1.bf16.msra.mxu0 0
  %549 = vmatprep.subr.bf16.mxu0 0
  %550 = vmatpush1.bf16.msra.mxu0 0
  %551 = vmatprep.subr.bf16.mxu0 0
  %552 = vmatpush1.bf16.msra.mxu0 0
  %553 = vmatprep.subr.bf16.mxu0 0
  %554 = vmatpush1.bf16.msra.mxu0 0
  %555 = vmatprep.subr.bf16.mxu0 0
  %556 = vmatpush1.bf16.msra.mxu0 0
  %557 = vmatprep.mubr.bf16.mxu0 0
  %558 = vmatmul.mubr.bf16.gmra.mrb[0].mxu0 %v520
  %v559 = vpop.f32.mrb[0].mxu0
  %v560 = vadd.f32 %v514, %v559
  %v561 = vpop.f32.mrb[0].mxu0
  %v562 = vpop.f32.mrb[0].mxu0
  %v563 = vpop.f32.mrb[0].mxu0
  %564 = vdwg.mxu0
  %566 = vset.pattern.permute.xlu0 0
  %567 = vperm.xlu0 %566, %v357
  %v568 = vpop.permute.xlu0 %567
  %v570 = vadd.f32 %v560, %v568
  %v571 = vmax.f32 %v570, 0.0
  %v572 = vld [vmem:[%s15] sm:$0xf]
  %v573 = vld [vmem:[%s16] sm:$0xff]
  %575 = vset.pattern.permute.xlu0 0
  %576 = vperm.xlu0 %575, %v573
  %v577 = vpop.permute.xlu0 %576
  %v580 = vsel %vm95, %v572, 0
  %582 = vmatprep.subr.bf16.mxu0 0
  %583 = vmatpush1.bf16.msra.mxu0 %v373
  %584 = vmatprep.subr.bf16.mxu0 0
  %585 = vmatpush1.bf16.msra.mxu0 0
  %586 = vmatprep.subr.bf16.mxu0 0
  %587 = vmatpush1.bf16.msra.mxu0 0
  %588 = vmatprep.subr.bf16.mxu0 0
  %589 = vmatpush1.bf16.msra.mxu0 0
  %590 = vmatprep.subr.bf16.mxu0 0
  %591 = vmatpush1.bf16.msra.mxu0 0
  %592 = vmatprep.subr.bf16.mxu0 0
  %593 = vmatpush1.bf16.msra.mxu0 0
  %594 = vmatprep.subr.bf16.mxu0 0
  %595 = vmatpush1.bf16.msra.mxu0 0
  %596 = vmatprep.subr.bf16.mxu0 0
  %597 = vmatpush1.bf16.msra.mxu0 0
  %598 = vmatprep.subr.bf16.mxu0 0
  %599 = vmatpush1.bf16.msra.mxu0 0
  %600 = vmatprep.subr.bf16.mxu0 0
  %601 = vmatpush1.bf16.msra.mxu0 0
  %602 = vmatprep.subr.bf16.mxu0 0
  %603 = vmatpush1.bf16.msra.mxu0 0
  %604 = vmatprep.subr.bf16.mxu0 0
  %605 = vmatpush1.bf16.msra.mxu0 0
  %606 = vmatprep.subr.bf16.mxu0 0
  %607 = vmatpush1.bf16.msra.mxu0 0
  %608 = vmatprep.subr.bf16.mxu0 0
  %609 = vmatpush1.bf16.msra.mxu0 0
  %610 = vmatprep.subr.bf16.mxu0 0
  %611 = vmatpush1.bf16.msra.mxu0 0
  %612 = vmatprep.subr.bf16.mxu0 0
  %613 = vmatpush1.bf16.msra.mxu0 0
  %614 = vmatprep.mubr.bf16.mxu0 0
  %615 = vmatmul.mubr.bf16.gmra.mrb[0].mxu0 %v580
  %v616 = vpop.f32.mrb[0].mxu0
  %v617 = vadd.f32 %v577, %v616
  %v618 = vpop.f32.mrb[0].mxu0
  %v619 = vpop.f32.mrb[0].mxu0
  %v620 = vpop.f32.mrb[0].mxu0
  %621 = vdwg.mxu0
  %v622 = vadd.f32 %v571, %v617
  %v623 = vmax.f32 %v622, 0.0
  %v624 = vld [vmem:[%s17] sm:$0xf]
  %v625 = vld [vmem:[%s18] sm:$0xff]
  %v626 = vpack.c.bf16 %v623, %v623
  %628 = vset.pattern.permute.xlu0 0
  %629 = vperm.xlu0 %628, %v625
  %v630 = vpop.permute.xlu0 %629
  %v633 = vsel %vm95, %v624, 0
  %v636 = vsel %vm99, %v626, 0
  %638 = vmatprep.subr.bf16.mxu0 0
  %639 = vmatpush1.bf16.msra.mxu0 %v636
  %640 = vmatprep.subr.bf16.mxu0 0
  %641 = vmatpush1.bf16.msra.mxu0 0
  %642 = vmatprep.subr.bf16.mxu0 0
  %643 = vmatpush1.bf16.msra.mxu0 0
  %644 = vmatprep.subr.bf16.mxu0 0
  %645 = vmatpush1.bf16.msra.mxu0 0
  %646 = vmatprep.subr.bf16.mxu0 0
  %647 = vmatpush1.bf16.msra.mxu0 0
  %648 = vmatprep.subr.bf16.mxu0 0
  %649 = vmatpush1.bf16.msra.mxu0 0
  %650 = vmatprep.subr.bf16.mxu0 0
  %651 = vmatpush1.bf16.msra.mxu0 0
  %652 = vmatprep.subr.bf16.mxu0 0
  %653 = vmatpush1.bf16.msra.mxu0 0
  %654 = vmatprep.subr.bf16.mxu0 0
  %655 = vmatpush1.bf16.msra.mxu0 0
  %656 = vmatprep.subr.bf16.mxu0 0
  %657 = vmatpush1.bf16.msra.mxu0 0
  %658 = vmatprep.subr.bf16.mxu0 0
  %659 = vmatpush1.bf16.msra.mxu0 0
  %660 = vmatprep.subr.bf16.mxu0 0
  %661 = vmatpush1.bf16.msra.mxu0 0
  %662 = vmatprep.subr.bf16.mxu0 0
  %663 = vmatpush1.bf16.msra.mxu0 0
  %664 = vmatprep.subr.bf16.mxu0 0
  %665 = vmatpush1.bf16.msra.mxu0 0
  %666 = vmatprep.subr.bf16.mxu0 0
  %667 = vmatpush1.bf16.msra.mxu0 0
  %668 = vmatprep.subr.bf16.mxu0 0
  %669 = vmatpush1.bf16.msra.mxu0 0
  %670 = vmatprep.mubr.bf16.mxu0 0
  %671 = vmatmul.mubr.bf16.gmra.mrb[0].mxu0 %v633
  %v672 = vpop.f32.mrb[0].mxu0
  %v673 = vadd.f32 %v630, %v672
  %v674 = vpop.f32.mrb[0].mxu0
  %v675 = vpop.f32.mrb[0].mxu0
  %v676 = vpop.f32.mrb[0].mxu0
  %677 = vdwg.mxu0
  %678 = vst [vmem:[%s19] sm:$0xff] %v673
  // Predicated region
  $region78: #{forward.3} parent=0 // pred_check
    _
  $region79: #{forward.3} parent=0 // pred_check_branch
    %680 = sbr.rel (0) target = $region81
  $region80: #{forward.3} parent=0 // pred_region
    _
  $region81: #{forward.3} parent=0 // pred_fallthru
    _
  // Predicated region
  $region82: #{forward.3} parent=0 // pred_check
    _
  $region83: #{forward.3} parent=0 // pred_check_branch
    %682 = sbr.rel (0) target = $region85
  $region84: #{forward.3} parent=0 // pred_region
    _
  $region85: #{forward.3} parent=0 // pred_fallthru
    _

// kernel: forward.4
$region0: #{forward.4}
  #allocation0 [shape = 'u32[]', space=smem, size = 0x4, offset = 0x4, fixed_abs, tag = 'smem constant byte address 0x4 - core index']
  #allocation1 [shape = 'u32[144,128]{1,0:T(1,128)}', space=vmem, size = 0x12000, scoped, tag = 'internal scratch']
  %s0 = inlined_call_operand.vmem [shape: f32[8,128], index: 0, kind: input, shape index: {}]
  %s1 = inlined_call_operand.vmem [shape: bf16[8,8], index: 1, kind: input, shape index: {}]
  %s2 = inlined_call_operand.vmem [shape: bf16[8,8], index: 2, kind: input, shape index: {}]
  %s3 = inlined_call_operand.vmem [shape: f32[8,1], index: 3, kind: input, shape index: {}]
  %s4 = inlined_call_operand.vmem [shape: bf16[8,8], index: 4, kind: input, shape index: {}]
  %s5 = inlined_call_operand.vmem [shape: bf16[8,8], index: 5, kind: input, shape index: {}]
  %s6 = inlined_call_operand.vmem [shape: f32[8,1], index: 6, kind: input, shape index: {}]
  %s7 = inlined_call_operand.vmem [shape: bf16[8,8], index: 7, kind: input, shape index: {}]
  %s8 = inlined_call_operand.vmem [shape: f32[8,1], index: 8, kind: input, shape index: {}]
  %s9 = inlined_call_operand.vmem [shape: bf16[8,8], index: 9, kind: input, shape index: {}]
  %s10 = inlined_call_operand.vmem [shape: bf16[8,8], index: 10, kind: input, shape index: {}]
  %s11 = inlined_call_operand.vmem [shape: f32[8,1], index: 11, kind: input, shape index: {}]
  %s12 = inlined_call_operand.vmem [shape: bf16[8,8], index: 12, kind: input, shape index: {}]
  %s13 = inlined_call_operand.vmem [shape: bf16[8,8], index: 13, kind: input, shape index: {}]
  %s14 = inlined_call_operand.vmem [shape: f32[8,1], index: 14, kind: input, shape index: {}]
  %s15 = inlined_call_operand.vmem [shape: bf16[8,8], index: 15, kind: input, shape index: {}]
  %s16 = inlined_call_operand.vmem [shape: f32[8,1], index: 16, kind: input, shape index: {}]
  %s17 = inlined_call_operand.vmem [shape: bf16[8,8], index: 17, kind: input, shape index: {}]
  %s18 = inlined_call_operand.vmem [shape: bf16[8,8], index: 18, kind: input, shape index: {}]
  %s19 = inlined_call_operand.vmem [shape: f32[8,1], index: 19, kind: input, shape index: {}]
  %s20 = inlined_call_operand.vmem [shape: bf16[8,8], index: 20, kind: input, shape index: {}]
  %s21 = inlined_call_operand.vmem [shape: bf16[8,8], index: 21, kind: input, shape index: {}]
  %s22 = inlined_call_operand.vmem [shape: f32[8,1], index: 22, kind: input, shape index: {}]
  %s23 = inlined_call_operand.vmem [shape: bf16[8,8], index: 23, kind: input, shape index: {}]
  %s24 = inlined_call_operand.vmem [shape: f32[8,1], index: 24, kind: input, shape index: {}]
  %s25 = inlined_call_operand.vmem [shape: bf16[8,8], index: 25, kind: input, shape index: {}]
  %s26 = inlined_call_operand.vmem [shape: f32[8,1], index: 26, kind: input, shape index: {}]
  %s27 = inlined_call_operand.vmem [shape: f32[8,128], index: 27, kind: output, shape index: {}]
  %s28 = sld [smem:[#allocation0]]
  $region118: #{forward.4} parent=0
    _
  %s30 = ssub.s32 1, %s28
  %s31 = scalar_select 0, %s30, %s28
  // Predicated region
  $region2: #{forward.4} parent=0 // pred_check
    _
  $region3: #{forward.4} parent=0 // pred_check_branch
    %33 = sbr.rel (0) target = $region5
  $region4: #{forward.4} parent=0 // pred_region
    _
  $region5: #{forward.4} parent=0 // pred_fallthru
    _
  // Predicated region
  $region6: #{forward.4} parent=0 // pred_check
    _
  $region7: #{forward.4} parent=0 // pred_check_branch
    %35 = sbr.rel (0) target = $region9
  $region8: #{forward.4} parent=0 // pred_region
    _
  $region9: #{forward.4} parent=0 // pred_fallthru
    _
  // Predicated region
  $region10: #{forward.4} parent=0 // pred_check
    _
  $region11: #{forward.4} parent=0 // pred_check_branch
    %37 = sbr.rel (0) target = $region13
  $region12: #{forward.4} parent=0 // pred_region
    _
  $region13: #{forward.4} parent=0 // pred_fallthru
    _
  // Predicated region
  $region14: #{forward.4} parent=0 // pred_check
    _
  $region15: #{forward.4} parent=0 // pred_check_branch
    %39 = sbr.rel (0) target = $region17
  $region16: #{forward.4} parent=0 // pred_region
    _
  $region17: #{forward.4} parent=0 // pred_fallthru
    _
  // Predicated region
  $region18: #{forward.4} parent=0 // pred_check
    _
  $region19: #{forward.4} parent=0 // pred_check_branch
    %41 = sbr.rel (0) target = $region21
  $region20: #{forward.4} parent=0 // pred_region
    _
  $region21: #{forward.4} parent=0 // pred_fallthru
    _
  // Predicated region
  $region22: #{forward.4} parent=0 // pred_check
    _
  $region23: #{forward.4} parent=0 // pred_check_branch
    %43 = sbr.rel (0) target = $region25
  $region24: #{forward.4} parent=0 // pred_region
    _
  $region25: #{forward.4} parent=0 // pred_fallthru
    _
  // Predicated region
  $region26: #{forward.4} parent=0 // pred_check
    _
  $region27: #{forward.4} parent=0 // pred_check_branch
    %45 = sbr.rel (0) target = $region29
  $region28: #{forward.4} parent=0 // pred_region
    _
  $region29: #{forward.4} parent=0 // pred_fallthru
    _
  // Predicated region
  $region30: #{forward.4} parent=0 // pred_check
    _
  $region31: #{forward.4} parent=0 // pred_check_branch
    %47 = sbr.rel (0) target = $region33
  $region32: #{forward.4} parent=0 // pred_region
    _
  $region33: #{forward.4} parent=0 // pred_fallthru
    _
  // Predicated region
  $region34: #{forward.4} parent=0 // pred_check
    _
  $region35: #{forward.4} parent=0 // pred_check_branch
    %49 = sbr.rel (0) target = $region37
  $region36: #{forward.4} parent=0 // pred_region
    _
  $region37: #{forward.4} parent=0 // pred_fallthru
    _
  // Predicated region
  $region38: #{forward.4} parent=0 // pred_check
    _
  $region39: #{forward.4} parent=0 // pred_check_branch
    %51 = sbr.rel (0) target = $region41
  $region40: #{forward.4} parent=0 // pred_region
    _
  $region41: #{forward.4} parent=0 // pred_fallthru
    _
  // Predicated region
  $region42: #{forward.4} parent=0 // pred_check
    _
  $region43: #{forward.4} parent=0 // pred_check_branch
    %53 = sbr.rel (0) target = $region45
  $region44: #{forward.4} parent=0 // pred_region
    _
  $region45: #{forward.4} parent=0 // pred_fallthru
    _
  // Predicated region
  $region46: #{forward.4} parent=0 // pred_check
    _
  $region47: #{forward.4} parent=0 // pred_check_branch
    %55 = sbr.rel (0) target = $region49
  $region48: #{forward.4} parent=0 // pred_region
    _
  $region49: #{forward.4} parent=0 // pred_fallthru
    _
  // Predicated region
  $region50: #{forward.4} parent=0 // pred_check
    _
  $region51: #{forward.4} parent=0 // pred_check_branch
    %57 = sbr.rel (0) target = $region53
  $region52: #{forward.4} parent=0 // pred_region
    _
  $region53: #{forward.4} parent=0 // pred_fallthru
    _
  // Predicated region
  $region54: #{forward.4} parent=0 // pred_check
    _
  $region55: #{forward.4} parent=0 // pred_check_branch
    %59 = sbr.rel (0) target = $region57
  $region56: #{forward.4} parent=0 // pred_region
    _
  $region57: #{forward.4} parent=0 // pred_fallthru
    _
  // Predicated region
  $region58: #{forward.4} parent=0 // pred_check
    _
  $region59: #{forward.4} parent=0 // pred_check_branch
    %61 = sbr.rel (0) target = $region61
  $region60: #{forward.4} parent=0 // pred_region
    _
  $region61: #{forward.4} parent=0 // pred_fallthru
    _
  // Predicated region
  $region62: #{forward.4} parent=0 // pred_check
    _
  $region63: #{forward.4} parent=0 // pred_check_branch
    %63 = sbr.rel (0) target = $region65
  $region64: #{forward.4} parent=0 // pred_region
    _
  $region65: #{forward.4} parent=0 // pred_fallthru
    _
  // Predicated region
  $region66: #{forward.4} parent=0 // pred_check
    _
  $region67: #{forward.4} parent=0 // pred_check_branch
    %65 = sbr.rel (0) target = $region69
  $region68: #{forward.4} parent=0 // pred_region
    _
  $region69: #{forward.4} parent=0 // pred_fallthru
    _
  // Predicated region
  $region70: #{forward.4} parent=0 // pred_check
    _
  $region71: #{forward.4} parent=0 // pred_check_branch
    %67 = sbr.rel (0) target = $region73
  $region72: #{forward.4} parent=0 // pred_region
    _
  $region73: #{forward.4} parent=0 // pred_fallthru
    _
  // Predicated region
  $region74: #{forward.4} parent=0 // pred_check
    _
  $region75: #{forward.4} parent=0 // pred_check_branch
    %69 = sbr.rel (0) target = $region77
  $region76: #{forward.4} parent=0 // pred_region
    _
  $region77: #{forward.4} parent=0 // pred_fallthru
    _
  // Predicated region
  $region78: #{forward.4} parent=0 // pred_check
    _
  $region79: #{forward.4} parent=0 // pred_check_branch
    %71 = sbr.rel (0) target = $region81
  $region80: #{forward.4} parent=0 // pred_region
    _
  $region81: #{forward.4} parent=0 // pred_fallthru
    _
  // Predicated region
  $region82: #{forward.4} parent=0 // pred_check
    _
  $region83: #{forward.4} parent=0 // pred_check_branch
    %73 = sbr.rel (0) target = $region85
  $region84: #{forward.4} parent=0 // pred_region
    _
  $region85: #{forward.4} parent=0 // pred_fallthru
    _
  // Predicated region
  $region86: #{forward.4} parent=0 // pred_check
    _
  $region87: #{forward.4} parent=0 // pred_check_branch
    %75 = sbr.rel (0) target = $region89
  $region88: #{forward.4} parent=0 // pred_region
    _
  $region89: #{forward.4} parent=0 // pred_fallthru
    _
  // Predicated region
  $region90: #{forward.4} parent=0 // pred_check
    _
  $region91: #{forward.4} parent=0 // pred_check_branch
    %77 = sbr.rel (0) target = $region93
  $region92: #{forward.4} parent=0 // pred_region
    _
  $region93: #{forward.4} parent=0 // pred_fallthru
    _
  // Predicated region
  $region94: #{forward.4} parent=0 // pred_check
    _
  $region95: #{forward.4} parent=0 // pred_check_branch
    %79 = sbr.rel (0) target = $region97
  $region96: #{forward.4} parent=0 // pred_region
    _
  $region97: #{forward.4} parent=0 // pred_fallthru
    _
  // Predicated region
  $region98: #{forward.4} parent=0 // pred_check
    _
  $region99: #{forward.4} parent=0 // pred_check_branch
    %81 = sbr.rel (0) target = $region101
  $region100: #{forward.4} parent=0 // pred_region
    _
  $region101: #{forward.4} parent=0 // pred_fallthru
    _
  // Predicated region
  $region102: #{forward.4} parent=0 // pred_check
    _
  $region103: #{forward.4} parent=0 // pred_check_branch
    %83 = sbr.rel (0) target = $region105
  $region104: #{forward.4} parent=0 // pred_region
    _
  $region105: #{forward.4} parent=0 // pred_fallthru
    _
  // Predicated region
  $region106: #{forward.4} parent=0 // pred_check
    _
  $region107: #{forward.4} parent=0 // pred_check_branch
    %85 = sbr.rel (0) target = $region109
  $region108: #{forward.4} parent=0 // pred_region
    _
  $region109: #{forward.4} parent=0 // pred_fallthru
    _
  %v87 = vld [vmem:[%s0] sm:$0xff]
  %v88 = vld [vmem:[%s1] sm:$0xf]
  %v89 = vld [vmem:[%s2] sm:$0xf]
  %v90 = vld [vmem:[%s3] sm:$0xff]
  %v91 = vld [vmem:[%s4] sm:$0xf]
  %v92 = vld [vmem:[%s5] sm:$0xf]
  %v93 = vld [vmem:[%s6] sm:$0xff]
  %v94 = vlaneseq
  %v95 = vand.u32 %v94, 127
  %vm96 = vcmp.lt.s32.totalorder %v95, 0
  %v97 = vsub.s32 0, %v95
  %v98 = vsel %vm96, %v97, %v95
  %v99 = vshrl.u32 %v98, 4
  %v100 = vand.u32 %v98, 15
  %v101 = vsub.s32 0, %v100
  %v102 = vsel %vm96, %v101, %v100
  %vm103 = vcmp.ne.s32.totalorder %v102, 0
  %vm104 = vcmp.lt.s32.totalorder %v102, 0
  %vm105 = vmand %vm104, %vm103
  %v106 = vadd.s32 %v102, 16
  %v107 = vsel %vm105, %v106, %v102
  %108 = vrot.lane.b32.xlu0 %v87, 1
  %v109 = vpop.permute.xlu0 %108
  %v110 = vadd.s32 %v107, 4294967295
  %vm111 = vcmp.ge.s32.totalorder %v110, 0
  %vm112 = vcmp.lt.s32.totalorder %v110, 16
  %vm113 = vmand %vm111, %vm112
  %v114 = vsel %vm113, 1, 0
  %vm115 = vcmp.eq.s32.totalorder %v114, 1
  %v116 = vsel %vm115, %v109, 0.0
  %v117 = vpack.c.bf16 %v116, %v116
  %v118 = vpack.c.bf16 %v87, %v87
  %vm119 = vcmask 64512
  %v121 = vsel %vm119, %v89, 0
  %vm123 = vcmask 1043456
  %v125 = vsel %vm123, %v118, 0
  %127 = vmatprep.subr.bf16.mxu0 0
  %128 = vmatpush1.bf16.msra.mxu0 %v125
  %129 = vmatprep.subr.bf16.mxu0 0
  %130 = vmatpush1.bf16.msra.mxu0 0
  %131 = vmatprep.subr.bf16.mxu0 0
  %132 = vmatpush1.bf16.msra.mxu0 0
  %133 = vmatprep.subr.bf16.mxu0 0
  %134 = vmatpush1.bf16.msra.mxu0 0
  %135 = vmatprep.subr.bf16.mxu0 0
  %136 = vmatpush1.bf16.msra.mxu0 0
  %137 = vmatprep.subr.bf16.mxu0 0
  %138 = vmatpush1.bf16.msra.mxu0 0
  %139 = vmatprep.subr.bf16.mxu0 0
  %140 = vmatpush1.bf16.msra.mxu0 0
  %141 = vmatprep.subr.bf16.mxu0 0
  %142 = vmatpush1.bf16.msra.mxu0 0
  %143 = vmatprep.subr.bf16.mxu0 0
  %144 = vmatpush1.bf16.msra.mxu0 0
  %145 = vmatprep.subr.bf16.mxu0 0
  %146 = vmatpush1.bf16.msra.mxu0 0
  %147 = vmatprep.subr.bf16.mxu0 0
  %148 = vmatpush1.bf16.msra.mxu0 0
  %149 = vmatprep.subr.bf16.mxu0 0
  %150 = vmatpush1.bf16.msra.mxu0 0
  %151 = vmatprep.subr.bf16.mxu0 0
  %152 = vmatpush1.bf16.msra.mxu0 0
  %153 = vmatprep.subr.bf16.mxu0 0
  %154 = vmatpush1.bf16.msra.mxu0 0
  %155 = vmatprep.subr.bf16.mxu0 0
  %156 = vmatpush1.bf16.msra.mxu0 0
  %157 = vmatprep.subr.bf16.mxu0 0
  %158 = vmatpush1.bf16.msra.mxu0 0
  %159 = vmatprep.mubr.bf16.mxu0 0
  %160 = vmatmul.mubr.bf16.gmra.mrb[0].mxu0 %v121
  %v161 = vpop.f32.mrb[0].mxu0
  %v162 = vadd.f32 0.0, %v161
  %v163 = vpop.f32.mrb[0].mxu0
  %v164 = vpop.f32.mrb[0].mxu0
  %v165 = vpop.f32.mrb[0].mxu0
  %166 = vdwg.mxu0
  %v168 = vsel %vm119, %v88, 0
  %v171 = vsel %vm123, %v117, 0
  %173 = vmatprep.subr.bf16.mxu0 0
  %174 = vmatpush1.bf16.msra.mxu0 %v171
  %175 = vmatprep.subr.bf16.mxu0 0
  %176 = vmatpush1.bf16.msra.mxu0 0
  %177 = vmatprep.subr.bf16.mxu0 0
  %178 = vmatpush1.bf16.msra.mxu0 0
  %179 = vmatprep.subr.bf16.mxu0 0
  %180 = vmatpush1.bf16.msra.mxu0 0
  %181 = vmatprep.subr.bf16.mxu0 0
  %182 = vmatpush1.bf16.msra.mxu0 0
  %183 = vmatprep.subr.bf16.mxu0 0
  %184 = vmatpush1.bf16.msra.mxu0 0
  %185 = vmatprep.subr.bf16.mxu0 0
  %186 = vmatpush1.bf16.msra.mxu0 0
  %187 = vmatprep.subr.bf16.mxu0 0
  %188 = vmatpush1.bf16.msra.mxu0 0
  %189 = vmatprep.subr.bf16.mxu0 0
  %190 = vmatpush1.bf16.msra.mxu0 0
  %191 = vmatprep.subr.bf16.mxu0 0
  %192 = vmatpush1.bf16.msra.mxu0 0
  %193 = vmatprep.subr.bf16.mxu0 0
  %194 = vmatpush1.bf16.msra.mxu0 0
  %195 = vmatprep.subr.bf16.mxu0 0
  %196 = vmatpush1.bf16.msra.mxu0 0
  %197 = vmatprep.subr.bf16.mxu0 0
  %198 = vmatpush1.bf16.msra.mxu0 0
  %199 = vmatprep.subr.bf16.mxu0 0
  %200 = vmatpush1.bf16.msra.mxu0 0
  %201 = vmatprep.subr.bf16.mxu0 0
  %202 = vmatpush1.bf16.msra.mxu0 0
  %203 = vmatprep.subr.bf16.mxu0 0
  %204 = vmatpush1.bf16.msra.mxu0 0
  %205 = vmatprep.mubr.bf16.mxu0 0
  %206 = vmatmul.mubr.bf16.gmra.mrb[0].mxu0 %v168
  %v207 = vpop.f32.mrb[0].mxu0
  %v208 = vadd.f32 %v162, %v207
  %v209 = vpop.f32.mrb[0].mxu0
  %v210 = vpop.f32.mrb[0].mxu0
  %v211 = vpop.f32.mrb[0].mxu0
  %212 = vdwg.mxu0
  %214 = vset.pattern.permute.xlu0 0
  %215 = vperm.xlu0 %214, %v90
  %v216 = vpop.permute.xlu0 %215
  %v218 = vadd.f32 %v208, %v216
  %v219 = vmax.f32 %v218, 0.0
  %220 = vrot.lane.b32.xlu0 %v219, 1
  %v221 = vpop.permute.xlu0 %220
  %v222 = vsel %vm115, %v221, 0.0
  %v223 = vpack.c.bf16 %v222, %v222
  %v224 = vpack.c.bf16 %v219, %v219
  %v226 = vsel %vm119, %v92, 0
  %v229 = vsel %vm123, %v224, 0
  %231 = vmatprep.subr.bf16.mxu0 0
  %232 = vmatpush1.bf16.msra.mxu0 %v229
  %233 = vmatprep.subr.bf16.mxu0 0
  %234 = vmatpush1.bf16.msra.mxu0 0
  %235 = vmatprep.subr.bf16.mxu0 0
  %236 = vmatpush1.bf16.msra.mxu0 0
  %237 = vmatprep.subr.bf16.mxu0 0
  %238 = vmatpush1.bf16.msra.mxu0 0
  %239 = vmatprep.subr.bf16.mxu0 0
  %240 = vmatpush1.bf16.msra.mxu0 0
  %241 = vmatprep.subr.bf16.mxu0 0
  %242 = vmatpush1.bf16.msra.mxu0 0
  %243 = vmatprep.subr.bf16.mxu0 0
  %244 = vmatpush1.bf16.msra.mxu0 0
  %245 = vmatprep.subr.bf16.mxu0 0
  %246 = vmatpush1.bf16.msra.mxu0 0
  %247 = vmatprep.subr.bf16.mxu0 0
  %248 = vmatpush1.bf16.msra.mxu0 0
  %249 = vmatprep.subr.bf16.mxu0 0
  %250 = vmatpush1.bf16.msra.mxu0 0
  %251 = vmatprep.subr.bf16.mxu0 0
  %252 = vmatpush1.bf16.msra.mxu0 0
  %253 = vmatprep.subr.bf16.mxu0 0
  %254 = vmatpush1.bf16.msra.mxu0 0
  %255 = vmatprep.subr.bf16.mxu0 0
  %256 = vmatpush1.bf16.msra.mxu0 0
  %257 = vmatprep.subr.bf16.mxu0 0
  %258 = vmatpush1.bf16.msra.mxu0 0
  %259 = vmatprep.subr.bf16.mxu0 0
  %260 = vmatpush1.bf16.msra.mxu0 0
  %261 = vmatprep.subr.bf16.mxu0 0
  %262 = vmatpush1.bf16.msra.mxu0 0
  %263 = vmatprep.mubr.bf16.mxu0 0
  %264 = vmatmul.mubr.bf16.gmra.mrb[0].mxu0 %v226
  %v265 = vpop.f32.mrb[0].mxu0
  %v266 = vadd.f32 0.0, %v265
  %v267 = vpop.f32.mrb[0].mxu0
  %v268 = vpop.f32.mrb[0].mxu0
  %v269 = vpop.f32.mrb[0].mxu0
  %270 = vdwg.mxu0
  %v272 = vsel %vm119, %v91, 0
  %v275 = vsel %vm123, %v223, 0
  %277 = vmatprep.subr.bf16.mxu0 0
  %278 = vmatpush1.bf16.msra.mxu0 %v275
  %279 = vmatprep.subr.bf16.mxu0 0
  %280 = vmatpush1.bf16.msra.mxu0 0
  %281 = vmatprep.subr.bf16.mxu0 0
  %282 = vmatpush1.bf16.msra.mxu0 0
  %283 = vmatprep.subr.bf16.mxu0 0
  %284 = vmatpush1.bf16.msra.mxu0 0
  %285 = vmatprep.subr.bf16.mxu0 0
  %286 = vmatpush1.bf16.msra.mxu0 0
  %287 = vmatprep.subr.bf16.mxu0 0
  %288 = vmatpush1.bf16.msra.mxu0 0
  %289 = vmatprep.subr.bf16.mxu0 0
  %290 = vmatpush1.bf16.msra.mxu0 0
  %291 = vmatprep.subr.bf16.mxu0 0
  %292 = vmatpush1.bf16.msra.mxu0 0
  %293 = vmatprep.subr.bf16.mxu0 0
  %294 = vmatpush1.bf16.msra.mxu0 0
  %295 = vmatprep.subr.bf16.mxu0 0
  %296 = vmatpush1.bf16.msra.mxu0 0
  %297 = vmatprep.subr.bf16.mxu0 0
  %298 = vmatpush1.bf16.msra.mxu0 0
  %299 = vmatprep.subr.bf16.mxu0 0
  %300 = vmatpush1.bf16.msra.mxu0 0
  %301 = vmatprep.subr.bf16.mxu0 0
  %302 = vmatpush1.bf16.msra.mxu0 0
  %303 = vmatprep.subr.bf16.mxu0 0
  %304 = vmatpush1.bf16.msra.mxu0 0
  %305 = vmatprep.subr.bf16.mxu0 0
  %306 = vmatpush1.bf16.msra.mxu0 0
  %307 = vmatprep.subr.bf16.mxu0 0
  %308 = vmatpush1.bf16.msra.mxu0 0
  %309 = vmatprep.mubr.bf16.mxu0 0
  %310 = vmatmul.mubr.bf16.gmra.mrb[0].mxu0 %v272
  %v311 = vpop.f32.mrb[0].mxu0
  %v312 = vadd.f32 %v266, %v311
  %v313 = vpop.f32.mrb[0].mxu0
  %v314 = vpop.f32.mrb[0].mxu0
  %v315 = vpop.f32.mrb[0].mxu0
  %316 = vdwg.mxu0
  %318 = vset.pattern.permute.xlu0 0
  %319 = vperm.xlu0 %318, %v93
  %v320 = vpop.permute.xlu0 %319
  %v322 = vadd.f32 %v312, %v320
  %v323 = vmax.f32 %v322, 0.0
  %v324 = vld [vmem:[%s7] sm:$0xf]
  %v325 = vld [vmem:[%s8] sm:$0xff]
  %327 = vset.pattern.permute.xlu0 0
  %328 = vperm.xlu0 %327, %v325
  %v329 = vpop.permute.xlu0 %328
  %v332 = vsel %vm119, %v324, 0
  %334 = vmatprep.subr.bf16.mxu0 0
  %335 = vmatpush1.bf16.msra.mxu0 %v125
  %336 = vmatprep.subr.bf16.mxu0 0
  %337 = vmatpush1.bf16.msra.mxu0 0
  %338 = vmatprep.subr.bf16.mxu0 0
  %339 = vmatpush1.bf16.msra.mxu0 0
  %340 = vmatprep.subr.bf16.mxu0 0
  %341 = vmatpush1.bf16.msra.mxu0 0
  %342 = vmatprep.subr.bf16.mxu0 0
  %343 = vmatpush1.bf16.msra.mxu0 0
  %344 = vmatprep.subr.bf16.mxu0 0
  %345 = vmatpush1.bf16.msra.mxu0 0
  %346 = vmatprep.subr.bf16.mxu0 0
  %347 = vmatpush1.bf16.msra.mxu0 0
  %348 = vmatprep.subr.bf16.mxu0 0
  %349 = vmatpush1.bf16.msra.mxu0 0
  %350 = vmatprep.subr.bf16.mxu0 0
  %351 = vmatpush1.bf16.msra.mxu0 0
  %352 = vmatprep.subr.bf16.mxu0 0
  %353 = vmatpush1.bf16.msra.mxu0 0
  %354 = vmatprep.subr.bf16.mxu0 0
  %355 = vmatpush1.bf16.msra.mxu0 0
  %356 = vmatprep.subr.bf16.mxu0 0
  %357 = vmatpush1.bf16.msra.mxu0 0
  %358 = vmatprep.subr.bf16.mxu0 0
  %359 = vmatpush1.bf16.msra.mxu0 0
  %360 = vmatprep.subr.bf16.mxu0 0
  %361 = vmatpush1.bf16.msra.mxu0 0
  %362 = vmatprep.subr.bf16.mxu0 0
  %363 = vmatpush1.bf16.msra.mxu0 0
  %364 = vmatprep.subr.bf16.mxu0 0
  %365 = vmatpush1.bf16.msra.mxu0 0
  %366 = vmatprep.mubr.bf16.mxu0 0
  %367 = vmatmul.mubr.bf16.gmra.mrb[0].mxu0 %v332
  %v368 = vpop.f32.mrb[0].mxu0
  %v369 = vadd.f32 %v329, %v368
  %v370 = vpop.f32.mrb[0].mxu0
  %v371 = vpop.f32.mrb[0].mxu0
  %v372 = vpop.f32.mrb[0].mxu0
  %373 = vdwg.mxu0
  %v374 = vadd.f32 %v323, %v369
  %v375 = vmax.f32 %v374, 0.0
  %v376 = vld [vmem:[%s9] sm:$0xf]
  %v377 = vld [vmem:[%s10] sm:$0xf]
  %v378 = vld [vmem:[%s11] sm:$0xff]
  %v379 = vld [vmem:[%s12] sm:$0xf]
  %v380 = vld [vmem:[%s13] sm:$0xf]
  %v381 = vld [vmem:[%s14] sm:$0xff]
  %382 = vrot.lane.b32.xlu0 %v375, 2
  %v383 = vpop.permute.xlu0 %382
  %v384 = vadd.s32 %v107, 4294967294
  %vm385 = vcmp.ge.s32.totalorder %v384, 0
  %vm386 = vcmp.lt.s32.totalorder %v384, 16
  %vm387 = vmand %vm385, %vm386
  %v388 = vsel %vm387, 1, 0
  %vm389 = vcmp.eq.s32.totalorder %v388, 1
  %v390 = vsel %vm389, %v383, 0.0
  %v391 = vpack.c.bf16 %v390, %v390
  %v392 = vpack.c.bf16 %v375, %v375
  %v394 = vsel %vm119, %v377, 0
  %v397 = vsel %vm123, %v392, 0
  %399 = vmatprep.subr.bf16.mxu0 0
  %400 = vmatpush1.bf16.msra.mxu0 %v397
  %401 = vmatprep.subr.bf16.mxu0 0
  %402 = vmatpush1.bf16.msra.mxu0 0
  %403 = vmatprep.subr.bf16.mxu0 0
  %404 = vmatpush1.bf16.msra.mxu0 0
  %405 = vmatprep.subr.bf16.mxu0 0
  %406 = vmatpush1.bf16.msra.mxu0 0
  %407 = vmatprep.subr.bf16.mxu0 0
  %408 = vmatpush1.bf16.msra.mxu0 0
  %409 = vmatprep.subr.bf16.mxu0 0
  %410 = vmatpush1.bf16.msra.mxu0 0
  %411 = vmatprep.subr.bf16.mxu0 0
  %412 = vmatpush1.bf16.msra.mxu0 0
  %413 = vmatprep.subr.bf16.mxu0 0
  %414 = vmatpush1.bf16.msra.mxu0 0
  %415 = vmatprep.subr.bf16.mxu0 0
  %416 = vmatpush1.bf16.msra.mxu0 0
  %417 = vmatprep.subr.bf16.mxu0 0
  %418 = vmatpush1.bf16.msra.mxu0 0
  %419 = vmatprep.subr.bf16.mxu0 0
  %420 = vmatpush1.bf16.msra.mxu0 0
  %421 = vmatprep.subr.bf16.mxu0 0
  %422 = vmatpush1.bf16.msra.mxu0 0
  %423 = vmatprep.subr.bf16.mxu0 0
  %424 = vmatpush1.bf16.msra.mxu0 0
  %425 = vmatprep.subr.bf16.mxu0 0
  %426 = vmatpush1.bf16.msra.mxu0 0
  %427 = vmatprep.subr.bf16.mxu0 0
  %428 = vmatpush1.bf16.msra.mxu0 0
  %429 = vmatprep.subr.bf16.mxu0 0
  %430 = vmatpush1.bf16.msra.mxu0 0
  %431 = vmatprep.mubr.bf16.mxu0 0
  %432 = vmatmul.mubr.bf16.gmra.mrb[0].mxu0 %v394
  %v433 = vpop.f32.mrb[0].mxu0
  %v434 = vadd.f32 0.0, %v433
  %v435 = vpop.f32.mrb[0].mxu0
  %v436 = vpop.f32.mrb[0].mxu0
  %v437 = vpop.f32.mrb[0].mxu0
  %438 = vdwg.mxu0
  %v440 = vsel %vm119, %v376, 0
  %v443 = vsel %vm123, %v391, 0
  %445 = vmatprep.subr.bf16.mxu0 0
  %446 = vmatpush1.bf16.msra.mxu0 %v443
  %447 = vmatprep.subr.bf16.mxu0 0
  %448 = vmatpush1.bf16.msra.mxu0 0
  %449 = vmatprep.subr.bf16.mxu0 0
  %450 = vmatpush1.bf16.msra.mxu0 0
  %451 = vmatprep.subr.bf16.mxu0 0
  %452 = vmatpush1.bf16.msra.mxu0 0
  %453 = vmatprep.subr.bf16.mxu0 0
  %454 = vmatpush1.bf16.msra.mxu0 0
  %455 = vmatprep.subr.bf16.mxu0 0
  %456 = vmatpush1.bf16.msra.mxu0 0
  %457 = vmatprep.subr.bf16.mxu0 0
  %458 = vmatpush1.bf16.msra.mxu0 0
  %459 = vmatprep.subr.bf16.mxu0 0
  %460 = vmatpush1.bf16.msra.mxu0 0
  %461 = vmatprep.subr.bf16.mxu0 0
  %462 = vmatpush1.bf16.msra.mxu0 0
  %463 = vmatprep.subr.bf16.mxu0 0
  %464 = vmatpush1.bf16.msra.mxu0 0
  %465 = vmatprep.subr.bf16.mxu0 0
  %466 = vmatpush1.bf16.msra.mxu0 0
  %467 = vmatprep.subr.bf16.mxu0 0
  %468 = vmatpush1.bf16.msra.mxu0 0
  %469 = vmatprep.subr.bf16.mxu0 0
  %470 = vmatpush1.bf16.msra.mxu0 0
  %471 = vmatprep.subr.bf16.mxu0 0
  %472 = vmatpush1.bf16.msra.mxu0 0
  %473 = vmatprep.subr.bf16.mxu0 0
  %474 = vmatpush1.bf16.msra.mxu0 0
  %475 = vmatprep.subr.bf16.mxu0 0
  %476 = vmatpush1.bf16.msra.mxu0 0
  %477 = vmatprep.mubr.bf16.mxu0 0
  %478 = vmatmul.mubr.bf16.gmra.mrb[0].mxu0 %v440
  %v479 = vpop.f32.mrb[0].mxu0
  %v480 = vadd.f32 %v434, %v479
  %v481 = vpop.f32.mrb[0].mxu0
  %v482 = vpop.f32.mrb[0].mxu0
  %v483 = vpop.f32.mrb[0].mxu0
  %484 = vdwg.mxu0
  %486 = vset.pattern.permute.xlu0 0
  %487 = vperm.xlu0 %486, %v378
  %v488 = vpop.permute.xlu0 %487
  %v490 = vadd.f32 %v480, %v488
  %v491 = vmax.f32 %v490, 0.0
  %492 = vrot.lane.b32.xlu0 %v491, 2
  %v493 = vpop.permute.xlu0 %492
  %v494 = vsel %vm389, %v493, 0.0
  %v495 = vpack.c.bf16 %v494, %v494
  %v496 = vpack.c.bf16 %v491, %v491
  %v498 = vsel %vm119, %v380, 0
  %v501 = vsel %vm123, %v496, 0
  %503 = vmatprep.subr.bf16.mxu0 0
  %504 = vmatpush1.bf16.msra.mxu0 %v501
  %505 = vmatprep.subr.bf16.mxu0 0
  %506 = vmatpush1.bf16.msra.mxu0 0
  %507 = vmatprep.subr.bf16.mxu0 0
  %508 = vmatpush1.bf16.msra.mxu0 0
  %509 = vmatprep.subr.bf16.mxu0 0
  %510 = vmatpush1.bf16.msra.mxu0 0
  %511 = vmatprep.subr.bf16.mxu0 0
  %512 = vmatpush1.bf16.msra.mxu0 0
  %513 = vmatprep.subr.bf16.mxu0 0
  %514 = vmatpush1.bf16.msra.mxu0 0
  %515 = vmatprep.subr.bf16.mxu0 0
  %516 = vmatpush1.bf16.msra.mxu0 0
  %517 = vmatprep.subr.bf16.mxu0 0
  %518 = vmatpush1.bf16.msra.mxu0 0
  %519 = vmatprep.subr.bf16.mxu0 0
  %520 = vmatpush1.bf16.msra.mxu0 0
  %521 = vmatprep.subr.bf16.mxu0 0
  %522 = vmatpush1.bf16.msra.mxu0 0
  %523 = vmatprep.subr.bf16.mxu0 0
  %524 = vmatpush1.bf16.msra.mxu0 0
  %525 = vmatprep.subr.bf16.mxu0 0
  %526 = vmatpush1.bf16.msra.mxu0 0
  %527 = vmatprep.subr.bf16.mxu0 0
  %528 = vmatpush1.bf16.msra.mxu0 0
  %529 = vmatprep.subr.bf16.mxu0 0
  %530 = vmatpush1.bf16.msra.mxu0 0
  %531 = vmatprep.subr.bf16.mxu0 0
  %532 = vmatpush1.bf16.msra.mxu0 0
  %533 = vmatprep.subr.bf16.mxu0 0
  %534 = vmatpush1.bf16.msra.mxu0 0
  %535 = vmatprep.mubr.bf16.mxu0 0
  %536 = vmatmul.mubr.bf16.gmra.mrb[0].mxu0 %v498
  %v537 = vpop.f32.mrb[0].mxu0
  %v538 = vadd.f32 0.0, %v537
  %v539 = vpop.f32.mrb[0].mxu0
  %v540 = vpop.f32.mrb[0].mxu0
  %v541 = vpop.f32.mrb[0].mxu0
  %542 = vdwg.mxu0
  %v544 = vsel %vm119, %v379, 0
  %v547 = vsel %vm123, %v495, 0
  %549 = vmatprep.subr.bf16.mxu0 0
  %550 = vmatpush1.bf16.msra.mxu0 %v547
  %551 = vmatprep.subr.bf16.mxu0 0
  %552 = vmatpush1.bf16.msra.mxu0 0
  %553 = vmatprep.subr.bf16.mxu0 0
  %554 = vmatpush1.bf16.msra.mxu0 0
  %555 = vmatprep.subr.bf16.mxu0 0
  %556 = vmatpush1.bf16.msra.mxu0 0
  %557 = vmatprep.subr.bf16.mxu0 0
  %558 = vmatpush1.bf16.msra.mxu0 0
  %559 = vmatprep.subr.bf16.mxu0 0
  %560 = vmatpush1.bf16.msra.mxu0 0
  %561 = vmatprep.subr.bf16.mxu0 0
  %562 = vmatpush1.bf16.msra.mxu0 0
  %563 = vmatprep.subr.bf16.mxu0 0
  %564 = vmatpush1.bf16.msra.mxu0 0
  %565 = vmatprep.subr.bf16.mxu0 0
  %566 = vmatpush1.bf16.msra.mxu0 0
  %567 = vmatprep.subr.bf16.mxu0 0
  %568 = vmatpush1.bf16.msra.mxu0 0
  %569 = vmatprep.subr.bf16.mxu0 0
  %570 = vmatpush1.bf16.msra.mxu0 0
  %571 = vmatprep.subr.bf16.mxu0 0
  %572 = vmatpush1.bf16.msra.mxu0 0
  %573 = vmatprep.subr.bf16.mxu0 0
  %574 = vmatpush1.bf16.msra.mxu0 0
  %575 = vmatprep.subr.bf16.mxu0 0
  %576 = vmatpush1.bf16.msra.mxu0 0
  %577 = vmatprep.subr.bf16.mxu0 0
  %578 = vmatpush1.bf16.msra.mxu0 0
  %579 = vmatprep.subr.bf16.mxu0 0
  %580 = vmatpush1.bf16.msra.mxu0 0
  %581 = vmatprep.mubr.bf16.mxu0 0
  %582 = vmatmul.mubr.bf16.gmra.mrb[0].mxu0 %v544
  %v583 = vpop.f32.mrb[0].mxu0
  %v584 = vadd.f32 %v538, %v583
  %v585 = vpop.f32.mrb[0].mxu0
  %v586 = vpop.f32.mrb[0].mxu0
  %v587 = vpop.f32.mrb[0].mxu0
  %588 = vdwg.mxu0
  %590 = vset.pattern.permute.xlu0 0
  %591 = vperm.xlu0 %590, %v381
  %v592 = vpop.permute.xlu0 %591
  %v594 = vadd.f32 %v584, %v592
  %v595 = vmax.f32 %v594, 0.0
  %v596 = vld [vmem:[%s15] sm:$0xf]
  %v597 = vld [vmem:[%s16] sm:$0xff]
  %599 = vset.pattern.permute.xlu0 0
  %600 = vperm.xlu0 %599, %v597
  %v601 = vpop.permute.xlu0 %600
  %v604 = vsel %vm119, %v596, 0
  %606 = vmatprep.subr.bf16.mxu0 0
  %607 = vmatpush1.bf16.msra.mxu0 %v397
  %608 = vmatprep.subr.bf16.mxu0 0
  %609 = vmatpush1.bf16.msra.mxu0 0
  %610 = vmatprep.subr.bf16.mxu0 0
  %611 = vmatpush1.bf16.msra.mxu0 0
  %612 = vmatprep.subr.bf16.mxu0 0
  %613 = vmatpush1.bf16.msra.mxu0 0
  %614 = vmatprep.subr.bf16.mxu0 0
  %615 = vmatpush1.bf16.msra.mxu0 0
  %616 = vmatprep.subr.bf16.mxu0 0
  %617 = vmatpush1.bf16.msra.mxu0 0
  %618 = vmatprep.subr.bf16.mxu0 0
  %619 = vmatpush1.bf16.msra.mxu0 0
  %620 = vmatprep.subr.bf16.mxu0 0
  %621 = vmatpush1.bf16.msra.mxu0 0
  %622 = vmatprep.subr.bf16.mxu0 0
  %623 = vmatpush1.bf16.msra.mxu0 0
  %624 = vmatprep.subr.bf16.mxu0 0
  %625 = vmatpush1.bf16.msra.mxu0 0
  %626 = vmatprep.subr.bf16.mxu0 0
  %627 = vmatpush1.bf16.msra.mxu0 0
  %628 = vmatprep.subr.bf16.mxu0 0
  %629 = vmatpush1.bf16.msra.mxu0 0
  %630 = vmatprep.subr.bf16.mxu0 0
  %631 = vmatpush1.bf16.msra.mxu0 0
  %632 = vmatprep.subr.bf16.mxu0 0
  %633 = vmatpush1.bf16.msra.mxu0 0
  %634 = vmatprep.subr.bf16.mxu0 0
  %635 = vmatpush1.bf16.msra.mxu0 0
  %636 = vmatprep.subr.bf16.mxu0 0
  %637 = vmatpush1.bf16.msra.mxu0 0
  %638 = vmatprep.mubr.bf16.mxu0 0
  %639 = vmatmul.mubr.bf16.gmra.mrb[0].mxu0 %v604
  %v640 = vpop.f32.mrb[0].mxu0
  %v641 = vadd.f32 %v601, %v640
  %v642 = vpop.f32.mrb[0].mxu0
  %v643 = vpop.f32.mrb[0].mxu0
  %v644 = vpop.f32.mrb[0].mxu0
  %645 = vdwg.mxu0
  %v646 = vadd.f32 %v595, %v641
  %v647 = vmax.f32 %v646, 0.0
  %v648 = vld [vmem:[%s17] sm:$0xf]
  %v649 = vld [vmem:[%s18] sm:$0xf]
  %v650 = vld [vmem:[%s19] sm:$0xff]
  %v651 = vld [vmem:[%s20] sm:$0xf]
  %v652 = vld [vmem:[%s21] sm:$0xf]
  %v653 = vld [vmem:[%s22] sm:$0xff]
  %654 = vrot.lane.b32.xlu0 %v647, 4
  %v655 = vpop.permute.xlu0 %654
  %v656 = vadd.s32 %v107, 4294967292
  %vm657 = vcmp.ge.s32.totalorder %v656, 0
  %vm658 = vcmp.lt.s32.totalorder %v656, 16
  %vm659 = vmand %vm657, %vm658
  %v660 = vsel %vm659, 1, 0
  %vm661 = vcmp.eq.s32.totalorder %v660, 1
  %v662 = vsel %vm661, %v655, 0.0
  %v663 = vpack.c.bf16 %v662, %v662
  %v664 = vpack.c.bf16 %v647, %v647
  %v666 = vsel %vm119, %v649, 0
  %v669 = vsel %vm123, %v664, 0
  %671 = vmatprep.subr.bf16.mxu0 0
  %672 = vmatpush1.bf16.msra.mxu0 %v669
  %673 = vmatprep.subr.bf16.mxu0 0
  %674 = vmatpush1.bf16.msra.mxu0 0
  %675 = vmatprep.subr.bf16.mxu0 0
  %676 = vmatpush1.bf16.msra.mxu0 0
  %677 = vmatprep.subr.bf16.mxu0 0
  %678 = vmatpush1.bf16.msra.mxu0 0
  %679 = vmatprep.subr.bf16.mxu0 0
  %680 = vmatpush1.bf16.msra.mxu0 0
  %681 = vmatprep.subr.bf16.mxu0 0
  %682 = vmatpush1.bf16.msra.mxu0 0
  %683 = vmatprep.subr.bf16.mxu0 0
  %684 = vmatpush1.bf16.msra.mxu0 0
  %685 = vmatprep.subr.bf16.mxu0 0
  %686 = vmatpush1.bf16.msra.mxu0 0
  %687 = vmatprep.subr.bf16.mxu0 0
  %688 = vmatpush1.bf16.msra.mxu0 0
  %689 = vmatprep.subr.bf16.mxu0 0
  %690 = vmatpush1.bf16.msra.mxu0 0
  %691 = vmatprep.subr.bf16.mxu0 0
  %692 = vmatpush1.bf16.msra.mxu0 0
  %693 = vmatprep.subr.bf16.mxu0 0
  %694 = vmatpush1.bf16.msra.mxu0 0
  %695 = vmatprep.subr.bf16.mxu0 0
  %696 = vmatpush1.bf16.msra.mxu0 0
  %697 = vmatprep.subr.bf16.mxu0 0
  %698 = vmatpush1.bf16.msra.mxu0 0
  %699 = vmatprep.subr.bf16.mxu0 0
  %700 = vmatpush1.bf16.msra.mxu0 0
  %701 = vmatprep.subr.bf16.mxu0 0
  %702 = vmatpush1.bf16.msra.mxu0 0
  %703 = vmatprep.mubr.bf16.mxu0 0
  %704 = vmatmul.mubr.bf16.gmra.mrb[0].mxu0 %v666
  %v705 = vpop.f32.mrb[0].mxu0
  %v706 = vadd.f32 0.0, %v705
  %v707 = vpop.f32.mrb[0].mxu0
  %v708 = vpop.f32.mrb[0].mxu0
  %v709 = vpop.f32.mrb[0].mxu0
  %710 = vdwg.mxu0
  %v712 = vsel %vm119, %v648, 0
  %v715 = vsel %vm123, %v663, 0
  %717 = vmatprep.subr.bf16.mxu0 0
  %718 = vmatpush1.bf16.msra.mxu0 %v715
  %719 = vmatprep.subr.bf16.mxu0 0
  %720 = vmatpush1.bf16.msra.mxu0 0
  %721 = vmatprep.subr.bf16.mxu0 0
  %722 = vmatpush1.bf16.msra.mxu0 0
  %723 = vmatprep.subr.bf16.mxu0 0
  %724 = vmatpush1.bf16.msra.mxu0 0
  %725 = vmatprep.subr.bf16.mxu0 0
  %726 = vmatpush1.bf16.msra.mxu0 0
  %727 = vmatprep.subr.bf16.mxu0 0
  %728 = vmatpush1.bf16.msra.mxu0 0
  %729 = vmatprep.subr.bf16.mxu0 0
  %730 = vmatpush1.bf16.msra.mxu0 0
  %731 = vmatprep.subr.bf16.mxu0 0
  %732 = vmatpush1.bf16.msra.mxu0 0
  %733 = vmatprep.subr.bf16.mxu0 0
  %734 = vmatpush1.bf16.msra.mxu0 0
  %735 = vmatprep.subr.bf16.mxu0 0
  %736 = vmatpush1.bf16.msra.mxu0 0
  %737 = vmatprep.subr.bf16.mxu0 0
  %738 = vmatpush1.bf16.msra.mxu0 0
  %739 = vmatprep.subr.bf16.mxu0 0
  %740 = vmatpush1.bf16.msra.mxu0 0
  %741 = vmatprep.subr.bf16.mxu0 0
  %742 = vmatpush1.bf16.msra.mxu0 0
  %743 = vmatprep.subr.bf16.mxu0 0
  %744 = vmatpush1.bf16.msra.mxu0 0
  %745 = vmatprep.subr.bf16.mxu0 0
  %746 = vmatpush1.bf16.msra.mxu0 0
  %747 = vmatprep.subr.bf16.mxu0 0
  %748 = vmatpush1.bf16.msra.mxu0 0
  %749 = vmatprep.mubr.bf16.mxu0 0
  %750 = vmatmul.mubr.bf16.gmra.mrb[0].mxu0 %v712
  %v751 = vpop.f32.mrb[0].mxu0
  %v752 = vadd.f32 %v706, %v751
  %v753 = vpop.f32.mrb[0].mxu0
  %v754 = vpop.f32.mrb[0].mxu0
  %v755 = vpop.f32.mrb[0].mxu0
  %756 = vdwg.mxu0
  %758 = vset.pattern.permute.xlu0 0
  %759 = vperm.xlu0 %758, %v650
  %v760 = vpop.permute.xlu0 %759
  %v762 = vadd.f32 %v752, %v760
  %v763 = vmax.f32 %v762, 0.0
  %764 = vrot.lane.b32.xlu0 %v763, 4
  %v765 = vpop.permute.xlu0 %764
  %v766 = vsel %vm661, %v765, 0.0
  %v767 = vpack.c.bf16 %v766, %v766
  %v768 = vpack.c.bf16 %v763, %v763
  %v770 = vsel %vm119, %v652, 0
  %v773 = vsel %vm123, %v768, 0
  %775 = vmatprep.subr.bf16.mxu0 0
  %776 = vmatpush1.bf16.msra.mxu0 %v773
  %777 = vmatprep.subr.bf16.mxu0 0
  %778 = vmatpush1.bf16.msra.mxu0 0
  %779 = vmatprep.subr.bf16.mxu0 0
  %780 = vmatpush1.bf16.msra.mxu0 0
  %781 = vmatprep.subr.bf16.mxu0 0
  %782 = vmatpush1.bf16.msra.mxu0 0
  %783 = vmatprep.subr.bf16.mxu0 0
  %784 = vmatpush1.bf16.msra.mxu0 0
  %785 = vmatprep.subr.bf16.mxu0 0
  %786 = vmatpush1.bf16.msra.mxu0 0
  %787 = vmatprep.subr.bf16.mxu0 0
  %788 = vmatpush1.bf16.msra.mxu0 0
  %789 = vmatprep.subr.bf16.mxu0 0
  %790 = vmatpush1.bf16.msra.mxu0 0
  %791 = vmatprep.subr.bf16.mxu0 0
  %792 = vmatpush1.bf16.msra.mxu0 0
  %793 = vmatprep.subr.bf16.mxu0 0
  %794 = vmatpush1.bf16.msra.mxu0 0
  %795 = vmatprep.subr.bf16.mxu0 0
  %796 = vmatpush1.bf16.msra.mxu0 0
  %797 = vmatprep.subr.bf16.mxu0 0
  %798 = vmatpush1.bf16.msra.mxu0 0
  %799 = vmatprep.subr.bf16.mxu0 0
  %800 = vmatpush1.bf16.msra.mxu0 0
  %801 = vmatprep.subr.bf16.mxu0 0
  %802 = vmatpush1.bf16.msra.mxu0 0
  %803 = vmatprep.subr.bf16.mxu0 0
  %804 = vmatpush1.bf16.msra.mxu0 0
  %805 = vmatprep.subr.bf16.mxu0 0
  %806 = vmatpush1.bf16.msra.mxu0 0
  %807 = vmatprep.mubr.bf16.mxu0 0
  %808 = vmatmul.mubr.bf16.gmra.mrb[0].mxu0 %v770
  %v809 = vpop.f32.mrb[0].mxu0
  %v810 = vadd.f32 0.0, %v809
  %v811 = vpop.f32.mrb[0].mxu0
  %v812 = vpop.f32.mrb[0].mxu0
  %v813 = vpop.f32.mrb[0].mxu0
  %814 = vdwg.mxu0
  %v816 = vsel %vm119, %v651, 0
  %v819 = vsel %vm123, %v767, 0
  %821 = vmatprep.subr.bf16.mxu0 0
  %822 = vmatpush1.bf16.msra.mxu0 %v819
  %823 = vmatprep.subr.bf16.mxu0 0
  %824 = vmatpush1.bf16.msra.mxu0 0
  %825 = vmatprep.subr.bf16.mxu0 0
  %826 = vmatpush1.bf16.msra.mxu0 0
  %827 = vmatprep.subr.bf16.mxu0 0
  %828 = vmatpush1.bf16.msra.mxu0 0
  %829 = vmatprep.subr.bf16.mxu0 0
  %830 = vmatpush1.bf16.msra.mxu0 0
  %831 = vmatprep.subr.bf16.mxu0 0
  %832 = vmatpush1.bf16.msra.mxu0 0
  %833 = vmatprep.subr.bf16.mxu0 0
  %834 = vmatpush1.bf16.msra.mxu0 0
  %835 = vmatprep.subr.bf16.mxu0 0
  %836 = vmatpush1.bf16.msra.mxu0 0
  %837 = vmatprep.subr.bf16.mxu0 0
  %838 = vmatpush1.bf16.msra.mxu0 0
  %839 = vmatprep.subr.bf16.mxu0 0
  %840 = vmatpush1.bf16.msra.mxu0 0
  %841 = vmatprep.subr.bf16.mxu0 0
  %842 = vmatpush1.bf16.msra.mxu0 0
  %843 = vmatprep.subr.bf16.mxu0 0
  %844 = vmatpush1.bf16.msra.mxu0 0
  %845 = vmatprep.subr.bf16.mxu0 0
  %846 = vmatpush1.bf16.msra.mxu0 0
  %847 = vmatprep.subr.bf16.mxu0 0
  %848 = vmatpush1.bf16.msra.mxu0 0
  %849 = vmatprep.subr.bf16.mxu0 0
  %850 = vmatpush1.bf16.msra.mxu0 0
  %851 = vmatprep.subr.bf16.mxu0 0
  %852 = vmatpush1.bf16.msra.mxu0 0
  %853 = vmatprep.mubr.bf16.mxu0 0
  %854 = vmatmul.mubr.bf16.gmra.mrb[0].mxu0 %v816
  %v855 = vpop.f32.mrb[0].mxu0
  %v856 = vadd.f32 %v810, %v855
  %v857 = vpop.f32.mrb[0].mxu0
  %v858 = vpop.f32.mrb[0].mxu0
  %v859 = vpop.f32.mrb[0].mxu0
  %860 = vdwg.mxu0
  %862 = vset.pattern.permute.xlu0 0
  %863 = vperm.xlu0 %862, %v653
  %v864 = vpop.permute.xlu0 %863
  %v866 = vadd.f32 %v856, %v864
  %v867 = vmax.f32 %v866, 0.0
  %v868 = vld [vmem:[%s23] sm:$0xf]
  %v869 = vld [vmem:[%s24] sm:$0xff]
  %871 = vset.pattern.permute.xlu0 0
  %872 = vperm.xlu0 %871, %v869
  %v873 = vpop.permute.xlu0 %872
  %v876 = vsel %vm119, %v868, 0
  %878 = vmatprep.subr.bf16.mxu0 0
  %879 = vmatpush1.bf16.msra.mxu0 %v669
  %880 = vmatprep.subr.bf16.mxu0 0
  %881 = vmatpush1.bf16.msra.mxu0 0
  %882 = vmatprep.subr.bf16.mxu0 0
  %883 = vmatpush1.bf16.msra.mxu0 0
  %884 = vmatprep.subr.bf16.mxu0 0
  %885 = vmatpush1.bf16.msra.mxu0 0
  %886 = vmatprep.subr.bf16.mxu0 0
  %887 = vmatpush1.bf16.msra.mxu0 0
  %888 = vmatprep.subr.bf16.mxu0 0
  %889 = vmatpush1.bf16.msra.mxu0 0
  %890 = vmatprep.subr.bf16.mxu0 0
  %891 = vmatpush1.bf16.msra.mxu0 0
  %892 = vmatprep.subr.bf16.mxu0 0
  %893 = vmatpush1.bf16.msra.mxu0 0
  %894 = vmatprep.subr.bf16.mxu0 0
  %895 = vmatpush1.bf16.msra.mxu0 0
  %896 = vmatprep.subr.bf16.mxu0 0
  %897 = vmatpush1.bf16.msra.mxu0 0
  %898 = vmatprep.subr.bf16.mxu0 0
  %899 = vmatpush1.bf16.msra.mxu0 0
  %900 = vmatprep.subr.bf16.mxu0 0
  %901 = vmatpush1.bf16.msra.mxu0 0
  %902 = vmatprep.subr.bf16.mxu0 0
  %903 = vmatpush1.bf16.msra.mxu0 0
  %904 = vmatprep.subr.bf16.mxu0 0
  %905 = vmatpush1.bf16.msra.mxu0 0
  %906 = vmatprep.subr.bf16.mxu0 0
  %907 = vmatpush1.bf16.msra.mxu0 0
  %908 = vmatprep.subr.bf16.mxu0 0
  %909 = vmatpush1.bf16.msra.mxu0 0
  %910 = vmatprep.mubr.bf16.mxu0 0
  %911 = vmatmul.mubr.bf16.gmra.mrb[0].mxu0 %v876
  %v912 = vpop.f32.mrb[0].mxu0
  %v913 = vadd.f32 %v873, %v912
  %v914 = vpop.f32.mrb[0].mxu0
  %v915 = vpop.f32.mrb[0].mxu0
  %v916 = vpop.f32.mrb[0].mxu0
  %917 = vdwg.mxu0
  %v918 = vadd.f32 %v867, %v913
  %v919 = vmax.f32 %v918, 0.0
  %v920 = vld [vmem:[%s25] sm:$0xf]
  %v921 = vld [vmem:[%s26] sm:$0xff]
  %v922 = vpack.c.bf16 %v919, %v919
  %924 = vset.pattern.permute.xlu0 0
  %925 = vperm.xlu0 %924, %v921
  %v926 = vpop.permute.xlu0 %925
  %v929 = vsel %vm119, %v920, 0
  %v932 = vsel %vm123, %v922, 0
  %934 = vmatprep.subr.bf16.mxu0 0
  %935 = vmatpush1.bf16.msra.mxu0 %v932
  %936 = vmatprep.subr.bf16.mxu0 0
  %937 = vmatpush1.bf16.msra.mxu0 0
  %938 = vmatprep.subr.bf16.mxu0 0
  %939 = vmatpush1.bf16.msra.mxu0 0
  %940 = vmatprep.subr.bf16.mxu0 0
  %941 = vmatpush1.bf16.msra.mxu0 0
  %942 = vmatprep.subr.bf16.mxu0 0
  %943 = vmatpush1.bf16.msra.mxu0 0
  %944 = vmatprep.subr.bf16.mxu0 0
  %945 = vmatpush1.bf16.msra.mxu0 0
  %946 = vmatprep.subr.bf16.mxu0 0
  %947 = vmatpush1.bf16.msra.mxu0 0
  %948 = vmatprep.subr.bf16.mxu0 0
  %949 = vmatpush1.bf16.msra.mxu0 0
  %950 = vmatprep.subr.bf16.mxu0 0
  %951 = vmatpush1.bf16.msra.mxu0 0
  %952 = vmatprep.subr.bf16.mxu0 0
  %953 = vmatpush1.bf16.msra.mxu0 0
  %954 = vmatprep.subr.bf16.mxu0 0
  %955 = vmatpush1.bf16.msra.mxu0 0
  %956 = vmatprep.subr.bf16.mxu0 0
  %957 = vmatpush1.bf16.msra.mxu0 0
  %958 = vmatprep.subr.bf16.mxu0 0
  %959 = vmatpush1.bf16.msra.mxu0 0
  %960 = vmatprep.subr.bf16.mxu0 0
  %961 = vmatpush1.bf16.msra.mxu0 0
  %962 = vmatprep.subr.bf16.mxu0 0
  %963 = vmatpush1.bf16.msra.mxu0 0
  %964 = vmatprep.subr.bf16.mxu0 0
  %965 = vmatpush1.bf16.msra.mxu0 0
  %966 = vmatprep.mubr.bf16.mxu0 0
  %967 = vmatmul.mubr.bf16.gmra.mrb[0].mxu0 %v929
  %v968 = vpop.f32.mrb[0].mxu0
  %v969 = vadd.f32 %v926, %v968
  %v970 = vpop.f32.mrb[0].mxu0
  %v971 = vpop.f32.mrb[0].mxu0
  %v972 = vpop.f32.mrb[0].mxu0
  %973 = vdwg.mxu0
  %974 = vst [vmem:[%s27] sm:$0xff] %v969
  // Predicated region
  $region110: #{forward.4} parent=0 // pred_check
    _
  $region111: #{forward.4} parent=0 // pred_check_branch
    %976 = sbr.rel (0) target = $region113
  $region112: #{forward.4} parent=0 // pred_region
    _
  $region113: #{forward.4} parent=0 // pred_fallthru
    _
  // Predicated region
  $region114: #{forward.4} parent=0 // pred_check
    _
  $region115: #{forward.4} parent=0 // pred_check_branch
    %978 = sbr.rel (0) target = $region117
  $region116: #{forward.4} parent=0 // pred_region
    _
  $region117: #{forward.4} parent=0 // pred_fallthru
    _

// kernel: forward.5
$region0: #{forward.5}
  #allocation0 [shape = 'u32[]', space=smem, size = 0x4, offset = 0x4, fixed_abs, tag = 'smem constant byte address 0x4 - core index']
  #allocation1 [shape = 'u32[144,128]{1,0:T(1,128)}', space=vmem, size = 0x12000, scoped, tag = 'internal scratch']
  %s0 = inlined_call_operand.vmem [shape: f32[8,128], index: 0, kind: input, shape index: {}]
  %s1 = inlined_call_operand.vmem [shape: f32[8,128], index: 1, kind: input, shape index: {}]
  %s2 = inlined_call_operand.vmem [shape: f32[8,128], index: 2, kind: input, shape index: {}]
  %s3 = inlined_call_operand.vmem [shape: bf16[8,8], index: 3, kind: input, shape index: {}]
  %s4 = inlined_call_operand.vmem [shape: f32[8,1], index: 4, kind: input, shape index: {}]
  %s5 = inlined_call_operand.vmem [shape: bf16[8,8], index: 5, kind: input, shape index: {}]
  %s6 = inlined_call_operand.vmem [shape: bf16[8,8], index: 6, kind: input, shape index: {}]
  %s7 = inlined_call_operand.vmem [shape: bf16[8,8], index: 7, kind: input, shape index: {}]
  %s8 = inlined_call_operand.vmem [shape: f32[8,1], index: 8, kind: input, shape index: {}]
  %s9 = inlined_call_operand.vmem [shape: bf16[8,8], index: 9, kind: input, shape index: {}]
  %s10 = inlined_call_operand.vmem [shape: bf16[8,8], index: 10, kind: input, shape index: {}]
  %s11 = inlined_call_operand.vmem [shape: bf16[8,8], index: 11, kind: input, shape index: {}]
  %s12 = inlined_call_operand.vmem [shape: f32[8,1], index: 12, kind: input, shape index: {}]
  %s13 = inlined_call_operand.vmem [shape: bf16[8,8], index: 13, kind: input, shape index: {}]
  %s14 = inlined_call_operand.vmem [shape: bf16[8,8], index: 14, kind: input, shape index: {}]
  %s15 = inlined_call_operand.vmem [shape: bf16[8,8], index: 15, kind: input, shape index: {}]
  %s16 = inlined_call_operand.vmem [shape: f32[8,1], index: 16, kind: input, shape index: {}]
  %s17 = inlined_call_operand.vmem [shape: bf16[128,8], index: 17, kind: input, shape index: {}]
  %s18 = inlined_call_operand.vmem [shape: bf16[128,8], index: 18, kind: input, shape index: {}]
  %s19 = inlined_call_operand.vmem [shape: bf16[128,8], index: 19, kind: input, shape index: {}]
  %s20 = inlined_call_operand.vmem [shape: bf16[128,8], index: 20, kind: input, shape index: {}]
  %s21 = inlined_call_operand.vmem [shape: f32[128,1], index: 21, kind: input, shape index: {}]
  %s22 = inlined_call_operand.vmem [shape: bf16[8,128], index: 22, kind: input, shape index: {}]
  %s23 = inlined_call_operand.vmem [shape: f32[8,1], index: 23, kind: input, shape index: {}]
  %s24 = inlined_call_operand.vmem [shape: f32[8,1], index: 24, kind: input, shape index: {}]
  %s25 = inlined_call_operand.vmem [shape: f32[8,1], index: 25, kind: input, shape index: {}]
  %s26 = inlined_call_operand.vmem [shape: f32[8,128], index: 26, kind: output, shape index: {}]
  %s27 = sld [smem:[#allocation0]]
  $region114: #{forward.5} parent=0
    _
  %s29 = ssub.s32 1, %s27
  %s30 = scalar_select 0, %s29, %s27
  // Predicated region
  $region2: #{forward.5} parent=0 // pred_check
    _
  $region3: #{forward.5} parent=0 // pred_check_branch
    %32 = sbr.rel (0) target = $region5
  $region4: #{forward.5} parent=0 // pred_region
    _
  $region5: #{forward.5} parent=0 // pred_fallthru
    _
  // Predicated region
  $region6: #{forward.5} parent=0 // pred_check
    _
  $region7: #{forward.5} parent=0 // pred_check_branch
    %34 = sbr.rel (0) target = $region9
  $region8: #{forward.5} parent=0 // pred_region
    _
  $region9: #{forward.5} parent=0 // pred_fallthru
    _
  // Predicated region
  $region10: #{forward.5} parent=0 // pred_check
    _
  $region11: #{forward.5} parent=0 // pred_check_branch
    %36 = sbr.rel (0) target = $region13
  $region12: #{forward.5} parent=0 // pred_region
    _
  $region13: #{forward.5} parent=0 // pred_fallthru
    _
  // Predicated region
  $region14: #{forward.5} parent=0 // pred_check
    _
  $region15: #{forward.5} parent=0 // pred_check_branch
    %38 = sbr.rel (0) target = $region17
  $region16: #{forward.5} parent=0 // pred_region
    _
  $region17: #{forward.5} parent=0 // pred_fallthru
    _
  // Predicated region
  $region18: #{forward.5} parent=0 // pred_check
    _
  $region19: #{forward.5} parent=0 // pred_check_branch
    %40 = sbr.rel (0) target = $region21
  $region20: #{forward.5} parent=0 // pred_region
    _
  $region21: #{forward.5} parent=0 // pred_fallthru
    _
  // Predicated region
  $region22: #{forward.5} parent=0 // pred_check
    _
  $region23: #{forward.5} parent=0 // pred_check_branch
    %42 = sbr.rel (0) target = $region25
  $region24: #{forward.5} parent=0 // pred_region
    _
  $region25: #{forward.5} parent=0 // pred_fallthru
    _
  // Predicated region
  $region26: #{forward.5} parent=0 // pred_check
    _
  $region27: #{forward.5} parent=0 // pred_check_branch
    %44 = sbr.rel (0) target = $region29
  $region28: #{forward.5} parent=0 // pred_region
    _
  $region29: #{forward.5} parent=0 // pred_fallthru
    _
  // Predicated region
  $region30: #{forward.5} parent=0 // pred_check
    _
  $region31: #{forward.5} parent=0 // pred_check_branch
    %46 = sbr.rel (0) target = $region33
  $region32: #{forward.5} parent=0 // pred_region
    _
  $region33: #{forward.5} parent=0 // pred_fallthru
    _
  // Predicated region
  $region34: #{forward.5} parent=0 // pred_check
    _
  $region35: #{forward.5} parent=0 // pred_check_branch
    %48 = sbr.rel (0) target = $region37
  $region36: #{forward.5} parent=0 // pred_region
    _
  $region37: #{forward.5} parent=0 // pred_fallthru
    _
  // Predicated region
  $region38: #{forward.5} parent=0 // pred_check
    _
  $region39: #{forward.5} parent=0 // pred_check_branch
    %50 = sbr.rel (0) target = $region41
  $region40: #{forward.5} parent=0 // pred_region
    _
  $region41: #{forward.5} parent=0 // pred_fallthru
    _
  // Predicated region
  $region42: #{forward.5} parent=0 // pred_check
    _
  $region43: #{forward.5} parent=0 // pred_check_branch
    %52 = sbr.rel (0) target = $region45
  $region44: #{forward.5} parent=0 // pred_region
    _
  $region45: #{forward.5} parent=0 // pred_fallthru
    _
  // Predicated region
  $region46: #{forward.5} parent=0 // pred_check
    _
  $region47: #{forward.5} parent=0 // pred_check_branch
    %54 = sbr.rel (0) target = $region49
  $region48: #{forward.5} parent=0 // pred_region
    _
  $region49: #{forward.5} parent=0 // pred_fallthru
    _
  // Predicated region
  $region50: #{forward.5} parent=0 // pred_check
    _
  $region51: #{forward.5} parent=0 // pred_check_branch
    %56 = sbr.rel (0) target = $region53
  $region52: #{forward.5} parent=0 // pred_region
    _
  $region53: #{forward.5} parent=0 // pred_fallthru
    _
  // Predicated region
  $region54: #{forward.5} parent=0 // pred_check
    _
  $region55: #{forward.5} parent=0 // pred_check_branch
    %58 = sbr.rel (0) target = $region57
  $region56: #{forward.5} parent=0 // pred_region
    _
  $region57: #{forward.5} parent=0 // pred_fallthru
    _
  // Predicated region
  $region58: #{forward.5} parent=0 // pred_check
    _
  $region59: #{forward.5} parent=0 // pred_check_branch
    %60 = sbr.rel (0) target = $region61
  $region60: #{forward.5} parent=0 // pred_region
    _
  $region61: #{forward.5} parent=0 // pred_fallthru
    _
  // Predicated region
  $region62: #{forward.5} parent=0 // pred_check
    _
  $region63: #{forward.5} parent=0 // pred_check_branch
    %62 = sbr.rel (0) target = $region65
  $region64: #{forward.5} parent=0 // pred_region
    _
  $region65: #{forward.5} parent=0 // pred_fallthru
    _
  // Predicated region
  $region66: #{forward.5} parent=0 // pred_check
    _
  $region67: #{forward.5} parent=0 // pred_check_branch
    %64 = sbr.rel (0) target = $region69
  $region68: #{forward.5} parent=0 // pred_region
    _
  $region69: #{forward.5} parent=0 // pred_fallthru
    _
  // Predicated region
  $region70: #{forward.5} parent=0 // pred_check
    _
  $region71: #{forward.5} parent=0 // pred_check_branch
    %66 = sbr.rel (0) target = $region73
  $region72: #{forward.5} parent=0 // pred_region
    _
  $region73: #{forward.5} parent=0 // pred_fallthru
    _
  // Predicated region
  $region74: #{forward.5} parent=0 // pred_check
    _
  $region75: #{forward.5} parent=0 // pred_check_branch
    %68 = sbr.rel (0) target = $region77
  $region76: #{forward.5} parent=0 // pred_region
    _
  $region77: #{forward.5} parent=0 // pred_fallthru
    _
  // Predicated region
  $region78: #{forward.5} parent=0 // pred_check
    _
  $region79: #{forward.5} parent=0 // pred_check_branch
    %70 = sbr.rel (0) target = $region81
  $region80: #{forward.5} parent=0 // pred_region
    _
  $region81: #{forward.5} parent=0 // pred_fallthru
    _
  // Predicated region
  $region82: #{forward.5} parent=0 // pred_check
    _
  $region83: #{forward.5} parent=0 // pred_check_branch
    %72 = sbr.rel (0) target = $region85
  $region84: #{forward.5} parent=0 // pred_region
    _
  $region85: #{forward.5} parent=0 // pred_fallthru
    _
  // Predicated region
  $region86: #{forward.5} parent=0 // pred_check
    _
  $region87: #{forward.5} parent=0 // pred_check_branch
    %74 = sbr.rel (0) target = $region89
  $region88: #{forward.5} parent=0 // pred_region
    _
  $region89: #{forward.5} parent=0 // pred_fallthru
    _
  // Predicated region
  $region90: #{forward.5} parent=0 // pred_check
    _
  $region91: #{forward.5} parent=0 // pred_check_branch
    %76 = sbr.rel (0) target = $region93
  $region92: #{forward.5} parent=0 // pred_region
    _
  $region93: #{forward.5} parent=0 // pred_fallthru
    _
  // Predicated region
  $region94: #{forward.5} parent=0 // pred_check
    _
  $region95: #{forward.5} parent=0 // pred_check_branch
    %78 = sbr.rel (0) target = $region97
  $region96: #{forward.5} parent=0 // pred_region
    _
  $region97: #{forward.5} parent=0 // pred_fallthru
    _
  // Predicated region
  $region98: #{forward.5} parent=0 // pred_check
    _
  $region99: #{forward.5} parent=0 // pred_check_branch
    %80 = sbr.rel (0) target = $region101
  $region100: #{forward.5} parent=0 // pred_region
    _
  $region101: #{forward.5} parent=0 // pred_fallthru
    _
  // Predicated region
  $region102: #{forward.5} parent=0 // pred_check
    _
  $region103: #{forward.5} parent=0 // pred_check_branch
    %82 = sbr.rel (0) target = $region105
  $region104: #{forward.5} parent=0 // pred_region
    _
  $region105: #{forward.5} parent=0 // pred_fallthru
    _
  %v84 = vld [vmem:[%s0] sm:$0xff]
  %v85 = vld [vmem:[%s3] sm:$0xf]
  %v86 = vld [vmem:[%s4] sm:$0xff]
  %v87 = vpack.c.bf16 %v84, %v84
  %89 = vset.pattern.permute.xlu0 0
  %90 = vperm.xlu0 %89, %v86
  %v91 = vpop.permute.xlu0 %90
  %vm93 = vcmask 64512
  %v95 = vsel %vm93, %v85, 0
  %vm97 = vcmask 1043456
  %v99 = vsel %vm97, %v87, 0
  %101 = vmatprep.subr.bf16.mxu0 0
  %102 = vmatpush1.bf16.msra.mxu0 %v99
  %103 = vmatprep.subr.bf16.mxu0 0
  %104 = vmatpush1.bf16.msra.mxu0 0
  %105 = vmatprep.subr.bf16.mxu0 0
  %106 = vmatpush1.bf16.msra.mxu0 0
  %107 = vmatprep.subr.bf16.mxu0 0
  %108 = vmatpush1.bf16.msra.mxu0 0
  %109 = vmatprep.subr.bf16.mxu0 0
  %110 = vmatpush1.bf16.msra.mxu0 0
  %111 = vmatprep.subr.bf16.mxu0 0
  %112 = vmatpush1.bf16.msra.mxu0 0
  %113 = vmatprep.subr.bf16.mxu0 0
  %114 = vmatpush1.bf16.msra.mxu0 0
  %115 = vmatprep.subr.bf16.mxu0 0
  %116 = vmatpush1.bf16.msra.mxu0 0
  %117 = vmatprep.subr.bf16.mxu0 0
  %118 = vmatpush1.bf16.msra.mxu0 0
  %119 = vmatprep.subr.bf16.mxu0 0
  %120 = vmatpush1.bf16.msra.mxu0 0
  %121 = vmatprep.subr.bf16.mxu0 0
  %122 = vmatpush1.bf16.msra.mxu0 0
  %123 = vmatprep.subr.bf16.mxu0 0
  %124 = vmatpush1.bf16.msra.mxu0 0
  %125 = vmatprep.subr.bf16.mxu0 0
  %126 = vmatpush1.bf16.msra.mxu0 0
  %127 = vmatprep.subr.bf16.mxu0 0
  %128 = vmatpush1.bf16.msra.mxu0 0
  %129 = vmatprep.subr.bf16.mxu0 0
  %130 = vmatpush1.bf16.msra.mxu0 0
  %131 = vmatprep.subr.bf16.mxu0 0
  %132 = vmatpush1.bf16.msra.mxu0 0
  %133 = vmatprep.mubr.bf16.mxu0 0
  %134 = vmatmul.mubr.bf16.gmra.mrb[0].mxu0 %v95
  %v135 = vpop.f32.mrb[0].mxu0
  %v136 = vadd.f32 %v91, %v135
  %v137 = vpop.f32.mrb[0].mxu0
  %v138 = vpop.f32.mrb[0].mxu0
  %v139 = vpop.f32.mrb[0].mxu0
  %140 = vdwg.mxu0
  %v141 = vld [vmem:[%s5] sm:$0xf]
  %v142 = vld [vmem:[%s6] sm:$0xf]
  %v143 = vld [vmem:[%s7] sm:$0xf]
  %v144 = vld [vmem:[%s8] sm:$0xff]
  %v145 = vlaneseq
  %v146 = vand.u32 %v145, 127
  %vm147 = vcmp.lt.s32.totalorder %v146, 0
  %v148 = vsub.s32 0, %v146
  %v149 = vsel %vm147, %v148, %v146
  %v150 = vshrl.u32 %v149, 4
  %v151 = vand.u32 %v149, 15
  %v152 = vsub.s32 0, %v151
  %v153 = vsel %vm147, %v152, %v151
  %vm154 = vcmp.ne.s32.totalorder %v153, 0
  %vm155 = vcmp.lt.s32.totalorder %v153, 0
  %vm156 = vmand %vm155, %vm154
  %v157 = vadd.s32 %v153, 16
  %v158 = vsel %vm156, %v157, %v153
  %159 = vrot.lane.b32.xlu0 %v84, 1
  %v160 = vpop.permute.xlu0 %159
  %v161 = vadd.s32 %v158, 4294967295
  %vm162 = vcmp.ge.s32.totalorder %v161, 0
  %vm163 = vcmp.lt.s32.totalorder %v161, 16
  %vm164 = vmand %vm162, %vm163
  %v165 = vsel %vm164, 1, 0
  %vm166 = vcmp.eq.s32.totalorder %v165, 1
  %v167 = vsel %vm166, %v160, 0.0
  %v168 = vpack.c.bf16 %v167, %v167
  %v170 = vsel %vm93, %v142, 0
  %172 = vmatprep.subr.bf16.mxu0 0
  %173 = vmatpush1.bf16.msra.mxu0 %v99
  %174 = vmatprep.subr.bf16.mxu0 0
  %175 = vmatpush1.bf16.msra.mxu0 0
  %176 = vmatprep.subr.bf16.mxu0 0
  %177 = vmatpush1.bf16.msra.mxu0 0
  %178 = vmatprep.subr.bf16.mxu0 0
  %179 = vmatpush1.bf16.msra.mxu0 0
  %180 = vmatprep.subr.bf16.mxu0 0
  %181 = vmatpush1.bf16.msra.mxu0 0
  %182 = vmatprep.subr.bf16.mxu0 0
  %183 = vmatpush1.bf16.msra.mxu0 0
  %184 = vmatprep.subr.bf16.mxu0 0
  %185 = vmatpush1.bf16.msra.mxu0 0
  %186 = vmatprep.subr.bf16.mxu0 0
  %187 = vmatpush1.bf16.msra.mxu0 0
  %188 = vmatprep.subr.bf16.mxu0 0
  %189 = vmatpush1.bf16.msra.mxu0 0
  %190 = vmatprep.subr.bf16.mxu0 0
  %191 = vmatpush1.bf16.msra.mxu0 0
  %192 = vmatprep.subr.bf16.mxu0 0
  %193 = vmatpush1.bf16.msra.mxu0 0
  %194 = vmatprep.subr.bf16.mxu0 0
  %195 = vmatpush1.bf16.msra.mxu0 0
  %196 = vmatprep.subr.bf16.mxu0 0
  %197 = vmatpush1.bf16.msra.mxu0 0
  %198 = vmatprep.subr.bf16.mxu0 0
  %199 = vmatpush1.bf16.msra.mxu0 0
  %200 = vmatprep.subr.bf16.mxu0 0
  %201 = vmatpush1.bf16.msra.mxu0 0
  %202 = vmatprep.subr.bf16.mxu0 0
  %203 = vmatpush1.bf16.msra.mxu0 0
  %204 = vmatprep.mubr.bf16.mxu0 0
  %205 = vmatmul.mubr.bf16.gmra.mrb[0].mxu0 %v170
  %v206 = vpop.f32.mrb[0].mxu0
  %v207 = vadd.f32 0.0, %v206
  %v208 = vpop.f32.mrb[0].mxu0
  %v209 = vpop.f32.mrb[0].mxu0
  %v210 = vpop.f32.mrb[0].mxu0
  %211 = vdwg.mxu0
  %v213 = vsel %vm93, %v141, 0
  %v216 = vsel %vm97, %v168, 0
  %218 = vmatprep.subr.bf16.mxu0 0
  %219 = vmatpush1.bf16.msra.mxu0 %v216
  %220 = vmatprep.subr.bf16.mxu0 0
  %221 = vmatpush1.bf16.msra.mxu0 0
  %222 = vmatprep.subr.bf16.mxu0 0
  %223 = vmatpush1.bf16.msra.mxu0 0
  %224 = vmatprep.subr.bf16.mxu0 0
  %225 = vmatpush1.bf16.msra.mxu0 0
  %226 = vmatprep.subr.bf16.mxu0 0
  %227 = vmatpush1.bf16.msra.mxu0 0
  %228 = vmatprep.subr.bf16.mxu0 0
  %229 = vmatpush1.bf16.msra.mxu0 0
  %230 = vmatprep.subr.bf16.mxu0 0
  %231 = vmatpush1.bf16.msra.mxu0 0
  %232 = vmatprep.subr.bf16.mxu0 0
  %233 = vmatpush1.bf16.msra.mxu0 0
  %234 = vmatprep.subr.bf16.mxu0 0
  %235 = vmatpush1.bf16.msra.mxu0 0
  %236 = vmatprep.subr.bf16.mxu0 0
  %237 = vmatpush1.bf16.msra.mxu0 0
  %238 = vmatprep.subr.bf16.mxu0 0
  %239 = vmatpush1.bf16.msra.mxu0 0
  %240 = vmatprep.subr.bf16.mxu0 0
  %241 = vmatpush1.bf16.msra.mxu0 0
  %242 = vmatprep.subr.bf16.mxu0 0
  %243 = vmatpush1.bf16.msra.mxu0 0
  %244 = vmatprep.subr.bf16.mxu0 0
  %245 = vmatpush1.bf16.msra.mxu0 0
  %246 = vmatprep.subr.bf16.mxu0 0
  %247 = vmatpush1.bf16.msra.mxu0 0
  %248 = vmatprep.subr.bf16.mxu0 0
  %249 = vmatpush1.bf16.msra.mxu0 0
  %250 = vmatprep.mubr.bf16.mxu0 0
  %251 = vmatmul.mubr.bf16.gmra.mrb[0].mxu0 %v213
  %v252 = vpop.f32.mrb[0].mxu0
  %v253 = vadd.f32 %v207, %v252
  %v254 = vpop.f32.mrb[0].mxu0
  %v255 = vpop.f32.mrb[0].mxu0
  %v256 = vpop.f32.mrb[0].mxu0
  %257 = vdwg.mxu0
  %258 = vrot.lane.b32.xlu0 %v84, 127
  %v259 = vpop.permute.xlu0 %258
  %v260 = vadd.s32 %v158, 1
  %vm261 = vcmp.ge.s32.totalorder %v260, 0
  %vm262 = vcmp.lt.s32.totalorder %v260, 16
  %vm263 = vmand %vm261, %vm262
  %v264 = vsel %vm263, 1, 0
  %vm265 = vcmp.eq.s32.totalorder %v264, 1
  %v266 = vsel %vm265, %v259, 0.0
  %v267 = vpack.c.bf16 %v266, %v266
  %v269 = vsel %vm93, %v143, 0
  %v272 = vsel %vm97, %v267, 0
  %274 = vmatprep.subr.bf16.mxu0 0
  %275 = vmatpush1.bf16.msra.mxu0 %v272
  %276 = vmatprep.subr.bf16.mxu0 0
  %277 = vmatpush1.bf16.msra.mxu0 0
  %278 = vmatprep.subr.bf16.mxu0 0
  %279 = vmatpush1.bf16.msra.mxu0 0
  %280 = vmatprep.subr.bf16.mxu0 0
  %281 = vmatpush1.bf16.msra.mxu0 0
  %282 = vmatprep.subr.bf16.mxu0 0
  %283 = vmatpush1.bf16.msra.mxu0 0
  %284 = vmatprep.subr.bf16.mxu0 0
  %285 = vmatpush1.bf16.msra.mxu0 0
  %286 = vmatprep.subr.bf16.mxu0 0
  %287 = vmatpush1.bf16.msra.mxu0 0
  %288 = vmatprep.subr.bf16.mxu0 0
  %289 = vmatpush1.bf16.msra.mxu0 0
  %290 = vmatprep.subr.bf16.mxu0 0
  %291 = vmatpush1.bf16.msra.mxu0 0
  %292 = vmatprep.subr.bf16.mxu0 0
  %293 = vmatpush1.bf16.msra.mxu0 0
  %294 = vmatprep.subr.bf16.mxu0 0
  %295 = vmatpush1.bf16.msra.mxu0 0
  %296 = vmatprep.subr.bf16.mxu0 0
  %297 = vmatpush1.bf16.msra.mxu0 0
  %298 = vmatprep.subr.bf16.mxu0 0
  %299 = vmatpush1.bf16.msra.mxu0 0
  %300 = vmatprep.subr.bf16.mxu0 0
  %301 = vmatpush1.bf16.msra.mxu0 0
  %302 = vmatprep.subr.bf16.mxu0 0
  %303 = vmatpush1.bf16.msra.mxu0 0
  %304 = vmatprep.subr.bf16.mxu0 0
  %305 = vmatpush1.bf16.msra.mxu0 0
  %306 = vmatprep.mubr.bf16.mxu0 0
  %307 = vmatmul.mubr.bf16.gmra.mrb[0].mxu0 %v269
  %v308 = vpop.f32.mrb[0].mxu0
  %v309 = vadd.f32 0.0, %v308
  %v310 = vpop.f32.mrb[0].mxu0
  %v311 = vpop.f32.mrb[0].mxu0
  %v312 = vpop.f32.mrb[0].mxu0
  %313 = vdwg.mxu0
  %v314 = vadd.f32 %v253, %v309
  %316 = vset.pattern.permute.xlu0 0
  %317 = vperm.xlu0 %316, %v144
  %v318 = vpop.permute.xlu0 %317
  %v320 = vadd.f32 %v314, %v318
  %v321 = vld [vmem:[%s9] sm:$0xf]
  %v322 = vld [vmem:[%s10] sm:$0xf]
  %v323 = vld [vmem:[%s11] sm:$0xf]
  %v324 = vld [vmem:[%s12] sm:$0xff]
  %325 = vrot.lane.b32.xlu0 %v320, 1
  %v326 = vpop.permute.xlu0 %325
  %v327 = vsel %vm166, %v326, 0.0
  %v328 = vpack.c.bf16 %v327, %v327
  %v329 = vpack.c.bf16 %v320, %v320
  %v331 = vsel %vm93, %v322, 0
  %v334 = vsel %vm97, %v329, 0
  %336 = vmatprep.subr.bf16.mxu0 0
  %337 = vmatpush1.bf16.msra.mxu0 %v334
  %338 = vmatprep.subr.bf16.mxu0 0
  %339 = vmatpush1.bf16.msra.mxu0 0
  %340 = vmatprep.subr.bf16.mxu0 0
  %341 = vmatpush1.bf16.msra.mxu0 0
  %342 = vmatprep.subr.bf16.mxu0 0
  %343 = vmatpush1.bf16.msra.mxu0 0
  %344 = vmatprep.subr.bf16.mxu0 0
  %345 = vmatpush1.bf16.msra.mxu0 0
  %346 = vmatprep.subr.bf16.mxu0 0
  %347 = vmatpush1.bf16.msra.mxu0 0
  %348 = vmatprep.subr.bf16.mxu0 0
  %349 = vmatpush1.bf16.msra.mxu0 0
  %350 = vmatprep.subr.bf16.mxu0 0
  %351 = vmatpush1.bf16.msra.mxu0 0
  %352 = vmatprep.subr.bf16.mxu0 0
  %353 = vmatpush1.bf16.msra.mxu0 0
  %354 = vmatprep.subr.bf16.mxu0 0
  %355 = vmatpush1.bf16.msra.mxu0 0
  %356 = vmatprep.subr.bf16.mxu0 0
  %357 = vmatpush1.bf16.msra.mxu0 0
  %358 = vmatprep.subr.bf16.mxu0 0
  %359 = vmatpush1.bf16.msra.mxu0 0
  %360 = vmatprep.subr.bf16.mxu0 0
  %361 = vmatpush1.bf16.msra.mxu0 0
  %362 = vmatprep.subr.bf16.mxu0 0
  %363 = vmatpush1.bf16.msra.mxu0 0
  %364 = vmatprep.subr.bf16.mxu0 0
  %365 = vmatpush1.bf16.msra.mxu0 0
  %366 = vmatprep.subr.bf16.mxu0 0
  %367 = vmatpush1.bf16.msra.mxu0 0
  %368 = vmatprep.mubr.bf16.mxu0 0
  %369 = vmatmul.mubr.bf16.gmra.mrb[0].mxu0 %v331
  %v370 = vpop.f32.mrb[0].mxu0
  %v371 = vadd.f32 0.0, %v370
  %v372 = vpop.f32.mrb[0].mxu0
  %v373 = vpop.f32.mrb[0].mxu0
  %v374 = vpop.f32.mrb[0].mxu0
  %375 = vdwg.mxu0
  %v377 = vsel %vm93, %v321, 0
  %v380 = vsel %vm97, %v328, 0
  %382 = vmatprep.subr.bf16.mxu0 0
  %383 = vmatpush1.bf16.msra.mxu0 %v380
  %384 = vmatprep.subr.bf16.mxu0 0
  %385 = vmatpush1.bf16.msra.mxu0 0
  %386 = vmatprep.subr.bf16.mxu0 0
  %387 = vmatpush1.bf16.msra.mxu0 0
  %388 = vmatprep.subr.bf16.mxu0 0
  %389 = vmatpush1.bf16.msra.mxu0 0
  %390 = vmatprep.subr.bf16.mxu0 0
  %391 = vmatpush1.bf16.msra.mxu0 0
  %392 = vmatprep.subr.bf16.mxu0 0
  %393 = vmatpush1.bf16.msra.mxu0 0
  %394 = vmatprep.subr.bf16.mxu0 0
  %395 = vmatpush1.bf16.msra.mxu0 0
  %396 = vmatprep.subr.bf16.mxu0 0
  %397 = vmatpush1.bf16.msra.mxu0 0
  %398 = vmatprep.subr.bf16.mxu0 0
  %399 = vmatpush1.bf16.msra.mxu0 0
  %400 = vmatprep.subr.bf16.mxu0 0
  %401 = vmatpush1.bf16.msra.mxu0 0
  %402 = vmatprep.subr.bf16.mxu0 0
  %403 = vmatpush1.bf16.msra.mxu0 0
  %404 = vmatprep.subr.bf16.mxu0 0
  %405 = vmatpush1.bf16.msra.mxu0 0
  %406 = vmatprep.subr.bf16.mxu0 0
  %407 = vmatpush1.bf16.msra.mxu0 0
  %408 = vmatprep.subr.bf16.mxu0 0
  %409 = vmatpush1.bf16.msra.mxu0 0
  %410 = vmatprep.subr.bf16.mxu0 0
  %411 = vmatpush1.bf16.msra.mxu0 0
  %412 = vmatprep.subr.bf16.mxu0 0
  %413 = vmatpush1.bf16.msra.mxu0 0
  %414 = vmatprep.mubr.bf16.mxu0 0
  %415 = vmatmul.mubr.bf16.gmra.mrb[0].mxu0 %v377
  %v416 = vpop.f32.mrb[0].mxu0
  %v417 = vadd.f32 %v371, %v416
  %v418 = vpop.f32.mrb[0].mxu0
  %v419 = vpop.f32.mrb[0].mxu0
  %v420 = vpop.f32.mrb[0].mxu0
  %421 = vdwg.mxu0
  %422 = vrot.lane.b32.xlu0 %v320, 127
  %v423 = vpop.permute.xlu0 %422
  %v424 = vsel %vm265, %v423, 0.0
  %v425 = vpack.c.bf16 %v424, %v424
  %v427 = vsel %vm93, %v323, 0
  %v430 = vsel %vm97, %v425, 0
  %432 = vmatprep.subr.bf16.mxu0 0
  %433 = vmatpush1.bf16.msra.mxu0 %v430
  %434 = vmatprep.subr.bf16.mxu0 0
  %435 = vmatpush1.bf16.msra.mxu0 0
  %436 = vmatprep.subr.bf16.mxu0 0
  %437 = vmatpush1.bf16.msra.mxu0 0
  %438 = vmatprep.subr.bf16.mxu0 0
  %439 = vmatpush1.bf16.msra.mxu0 0
  %440 = vmatprep.subr.bf16.mxu0 0
  %441 = vmatpush1.bf16.msra.mxu0 0
  %442 = vmatprep.subr.bf16.mxu0 0
  %443 = vmatpush1.bf16.msra.mxu0 0
  %444 = vmatprep.subr.bf16.mxu0 0
  %445 = vmatpush1.bf16.msra.mxu0 0
  %446 = vmatprep.subr.bf16.mxu0 0
  %447 = vmatpush1.bf16.msra.mxu0 0
  %448 = vmatprep.subr.bf16.mxu0 0
  %449 = vmatpush1.bf16.msra.mxu0 0
  %450 = vmatprep.subr.bf16.mxu0 0
  %451 = vmatpush1.bf16.msra.mxu0 0
  %452 = vmatprep.subr.bf16.mxu0 0
  %453 = vmatpush1.bf16.msra.mxu0 0
  %454 = vmatprep.subr.bf16.mxu0 0
  %455 = vmatpush1.bf16.msra.mxu0 0
  %456 = vmatprep.subr.bf16.mxu0 0
  %457 = vmatpush1.bf16.msra.mxu0 0
  %458 = vmatprep.subr.bf16.mxu0 0
  %459 = vmatpush1.bf16.msra.mxu0 0
  %460 = vmatprep.subr.bf16.mxu0 0
  %461 = vmatpush1.bf16.msra.mxu0 0
  %462 = vmatprep.subr.bf16.mxu0 0
  %463 = vmatpush1.bf16.msra.mxu0 0
  %464 = vmatprep.mubr.bf16.mxu0 0
  %465 = vmatmul.mubr.bf16.gmra.mrb[0].mxu0 %v427
  %v466 = vpop.f32.mrb[0].mxu0
  %v467 = vadd.f32 0.0, %v466
  %v468 = vpop.f32.mrb[0].mxu0
  %v469 = vpop.f32.mrb[0].mxu0
  %v470 = vpop.f32.mrb[0].mxu0
  %471 = vdwg.mxu0
  %v472 = vadd.f32 %v417, %v467
  %474 = vset.pattern.permute.xlu0 0
  %475 = vperm.xlu0 %474, %v324
  %v476 = vpop.permute.xlu0 %475
  %v478 = vadd.f32 %v472, %v476
  %v479 = vld [vmem:[%s13] sm:$0xf]
  %v480 = vld [vmem:[%s14] sm:$0xf]
  %v481 = vld [vmem:[%s15] sm:$0xf]
  %v482 = vld [vmem:[%s16] sm:$0xff]
  %483 = vrot.lane.b32.xlu0 %v478, 1
  %v484 = vpop.permute.xlu0 %483
  %v485 = vsel %vm166, %v484, 0.0
  %v486 = vpack.c.bf16 %v485, %v485
  %v487 = vpack.c.bf16 %v478, %v478
  %v489 = vsel %vm93, %v480, 0
  %v492 = vsel %vm97, %v487, 0
  %494 = vmatprep.subr.bf16.mxu0 0
  %495 = vmatpush1.bf16.msra.mxu0 %v492
  %496 = vmatprep.subr.bf16.mxu0 0
  %497 = vmatpush1.bf16.msra.mxu0 0
  %498 = vmatprep.subr.bf16.mxu0 0
  %499 = vmatpush1.bf16.msra.mxu0 0
  %500 = vmatprep.subr.bf16.mxu0 0
  %501 = vmatpush1.bf16.msra.mxu0 0
  %502 = vmatprep.subr.bf16.mxu0 0
  %503 = vmatpush1.bf16.msra.mxu0 0
  %504 = vmatprep.subr.bf16.mxu0 0
  %505 = vmatpush1.bf16.msra.mxu0 0
  %506 = vmatprep.subr.bf16.mxu0 0
  %507 = vmatpush1.bf16.msra.mxu0 0
  %508 = vmatprep.subr.bf16.mxu0 0
  %509 = vmatpush1.bf16.msra.mxu0 0
  %510 = vmatprep.subr.bf16.mxu0 0
  %511 = vmatpush1.bf16.msra.mxu0 0
  %512 = vmatprep.subr.bf16.mxu0 0
  %513 = vmatpush1.bf16.msra.mxu0 0
  %514 = vmatprep.subr.bf16.mxu0 0
  %515 = vmatpush1.bf16.msra.mxu0 0
  %516 = vmatprep.subr.bf16.mxu0 0
  %517 = vmatpush1.bf16.msra.mxu0 0
  %518 = vmatprep.subr.bf16.mxu0 0
  %519 = vmatpush1.bf16.msra.mxu0 0
  %520 = vmatprep.subr.bf16.mxu0 0
  %521 = vmatpush1.bf16.msra.mxu0 0
  %522 = vmatprep.subr.bf16.mxu0 0
  %523 = vmatpush1.bf16.msra.mxu0 0
  %524 = vmatprep.subr.bf16.mxu0 0
  %525 = vmatpush1.bf16.msra.mxu0 0
  %526 = vmatprep.mubr.bf16.mxu0 0
  %527 = vmatmul.mubr.bf16.gmra.mrb[0].mxu0 %v489
  %v528 = vpop.f32.mrb[0].mxu0
  %v529 = vadd.f32 0.0, %v528
  %v530 = vpop.f32.mrb[0].mxu0
  %v531 = vpop.f32.mrb[0].mxu0
  %v532 = vpop.f32.mrb[0].mxu0
  %533 = vdwg.mxu0
  %v535 = vsel %vm93, %v479, 0
  %v538 = vsel %vm97, %v486, 0
  %540 = vmatprep.subr.bf16.mxu0 0
  %541 = vmatpush1.bf16.msra.mxu0 %v538
  %542 = vmatprep.subr.bf16.mxu0 0
  %543 = vmatpush1.bf16.msra.mxu0 0
  %544 = vmatprep.subr.bf16.mxu0 0
  %545 = vmatpush1.bf16.msra.mxu0 0
  %546 = vmatprep.subr.bf16.mxu0 0
  %547 = vmatpush1.bf16.msra.mxu0 0
  %548 = vmatprep.subr.bf16.mxu0 0
  %549 = vmatpush1.bf16.msra.mxu0 0
  %550 = vmatprep.subr.bf16.mxu0 0
  %551 = vmatpush1.bf16.msra.mxu0 0
  %552 = vmatprep.subr.bf16.mxu0 0
  %553 = vmatpush1.bf16.msra.mxu0 0
  %554 = vmatprep.subr.bf16.mxu0 0
  %555 = vmatpush1.bf16.msra.mxu0 0
  %556 = vmatprep.subr.bf16.mxu0 0
  %557 = vmatpush1.bf16.msra.mxu0 0
  %558 = vmatprep.subr.bf16.mxu0 0
  %559 = vmatpush1.bf16.msra.mxu0 0
  %560 = vmatprep.subr.bf16.mxu0 0
  %561 = vmatpush1.bf16.msra.mxu0 0
  %562 = vmatprep.subr.bf16.mxu0 0
  %563 = vmatpush1.bf16.msra.mxu0 0
  %564 = vmatprep.subr.bf16.mxu0 0
  %565 = vmatpush1.bf16.msra.mxu0 0
  %566 = vmatprep.subr.bf16.mxu0 0
  %567 = vmatpush1.bf16.msra.mxu0 0
  %568 = vmatprep.subr.bf16.mxu0 0
  %569 = vmatpush1.bf16.msra.mxu0 0
  %570 = vmatprep.subr.bf16.mxu0 0
  %571 = vmatpush1.bf16.msra.mxu0 0
  %572 = vmatprep.mubr.bf16.mxu0 0
  %573 = vmatmul.mubr.bf16.gmra.mrb[0].mxu0 %v535
  %v574 = vpop.f32.mrb[0].mxu0
  %v575 = vadd.f32 %v529, %v574
  %v576 = vpop.f32.mrb[0].mxu0
  %v577 = vpop.f32.mrb[0].mxu0
  %v578 = vpop.f32.mrb[0].mxu0
  %579 = vdwg.mxu0
  %580 = vrot.lane.b32.xlu0 %v478, 127
  %v581 = vpop.permute.xlu0 %580
  %v582 = vsel %vm265, %v581, 0.0
  %v583 = vpack.c.bf16 %v582, %v582
  %v585 = vsel %vm93, %v481, 0
  %v588 = vsel %vm97, %v583, 0
  %590 = vmatprep.subr.bf16.mxu0 0
  %591 = vmatpush1.bf16.msra.mxu0 %v588
  %592 = vmatprep.subr.bf16.mxu0 0
  %593 = vmatpush1.bf16.msra.mxu0 0
  %594 = vmatprep.subr.bf16.mxu0 0
  %595 = vmatpush1.bf16.msra.mxu0 0
  %596 = vmatprep.subr.bf16.mxu0 0
  %597 = vmatpush1.bf16.msra.mxu0 0
  %598 = vmatprep.subr.bf16.mxu0 0
  %599 = vmatpush1.bf16.msra.mxu0 0
  %600 = vmatprep.subr.bf16.mxu0 0
  %601 = vmatpush1.bf16.msra.mxu0 0
  %602 = vmatprep.subr.bf16.mxu0 0
  %603 = vmatpush1.bf16.msra.mxu0 0
  %604 = vmatprep.subr.bf16.mxu0 0
  %605 = vmatpush1.bf16.msra.mxu0 0
  %606 = vmatprep.subr.bf16.mxu0 0
  %607 = vmatpush1.bf16.msra.mxu0 0
  %608 = vmatprep.subr.bf16.mxu0 0
  %609 = vmatpush1.bf16.msra.mxu0 0
  %610 = vmatprep.subr.bf16.mxu0 0
  %611 = vmatpush1.bf16.msra.mxu0 0
  %612 = vmatprep.subr.bf16.mxu0 0
  %613 = vmatpush1.bf16.msra.mxu0 0
  %614 = vmatprep.subr.bf16.mxu0 0
  %615 = vmatpush1.bf16.msra.mxu0 0
  %616 = vmatprep.subr.bf16.mxu0 0
  %617 = vmatpush1.bf16.msra.mxu0 0
  %618 = vmatprep.subr.bf16.mxu0 0
  %619 = vmatpush1.bf16.msra.mxu0 0
  %620 = vmatprep.subr.bf16.mxu0 0
  %621 = vmatpush1.bf16.msra.mxu0 0
  %622 = vmatprep.mubr.bf16.mxu0 0
  %623 = vmatmul.mubr.bf16.gmra.mrb[0].mxu0 %v585
  %v624 = vpop.f32.mrb[0].mxu0
  %v625 = vadd.f32 0.0, %v624
  %v626 = vpop.f32.mrb[0].mxu0
  %v627 = vpop.f32.mrb[0].mxu0
  %v628 = vpop.f32.mrb[0].mxu0
  %629 = vdwg.mxu0
  %v630 = vadd.f32 %v575, %v625
  %632 = vset.pattern.permute.xlu0 0
  %633 = vperm.xlu0 %632, %v482
  %v634 = vpop.permute.xlu0 %633
  %v636 = vadd.f32 %v630, %v634
  %v637 = vld [vmem:[%s1] sm:$0xff]
  %v638 = vld [vmem:[%s2] sm:$0xff]
  %v639 = vld [vmem:[%s17] sm:$0xf]
  %v640 = vld [vmem:[%s17 + $0x4] sm:$0xf]
  %v641 = vld [vmem:[%s17 + $0x8] sm:$0xf]
  %v642 = vld [vmem:[%s17 + $0xc] sm:$0xf]
  %v643 = vld [vmem:[%s17 + $0x10] sm:$0xf]
  %v644 = vld [vmem:[%s17 + $0x14] sm:$0xf]
  %v645 = vld [vmem:[%s17 + $0x18] sm:$0xf]
  %v646 = vld [vmem:[%s17 + $0x1c] sm:$0xf]
  %v647 = vld [vmem:[%s17 + $0x20] sm:$0xf]
  %v648 = vld [vmem:[%s17 + $0x24] sm:$0xf]
  %v649 = vld [vmem:[%s17 + $0x28] sm:$0xf]
  %v650 = vld [vmem:[%s17 + $0x2c] sm:$0xf]
  %v651 = vld [vmem:[%s17 + $0x30] sm:$0xf]
  %v652 = vld [vmem:[%s17 + $0x34] sm:$0xf]
  %v653 = vld [vmem:[%s17 + $0x38] sm:$0xf]
  %v654 = vld [vmem:[%s17 + $0x3c] sm:$0xf]
  %v655 = vpack.c.bf16 %v136, %v136
  %v656 = vld [vmem:[%s18] sm:$0xf]
  %v657 = vld [vmem:[%s18 + $0x4] sm:$0xf]
  %v658 = vld [vmem:[%s18 + $0x8] sm:$0xf]
  %v659 = vld [vmem:[%s18 + $0xc] sm:$0xf]
  %v660 = vld [vmem:[%s18 + $0x10] sm:$0xf]
  %v661 = vld [vmem:[%s18 + $0x14] sm:$0xf]
  %v662 = vld [vmem:[%s18 + $0x18] sm:$0xf]
  %v663 = vld [vmem:[%s18 + $0x1c] sm:$0xf]
  %v664 = vld [vmem:[%s18 + $0x20] sm:$0xf]
  %v665 = vld [vmem:[%s18 + $0x24] sm:$0xf]
  %v666 = vld [vmem:[%s18 + $0x28] sm:$0xf]
  %v667 = vld [vmem:[%s18 + $0x2c] sm:$0xf]
  %v668 = vld [vmem:[%s18 + $0x30] sm:$0xf]
  %v669 = vld [vmem:[%s18 + $0x34] sm:$0xf]
  %v670 = vld [vmem:[%s18 + $0x38] sm:$0xf]
  %v671 = vld [vmem:[%s18 + $0x3c] sm:$0xf]
  %v672 = vpack.c.bf16 %v636, %v636
  %v689 = vunpack.c.l.b16 %v656
  %v690 = vunpack.c.l.b16 %v657
  %v691 = vunpack.c.l.b16 %v658
  %v692 = vunpack.c.l.b16 %v659
  %v693 = vunpack.c.l.b16 %v660
  %v694 = vunpack.c.l.b16 %v661
  %v695 = vunpack.c.l.b16 %v662
  %v696 = vunpack.c.l.b16 %v663
  %v697 = vunpack.c.l.b16 %v664
  %v698 = vunpack.c.l.b16 %v665
  %v699 = vunpack.c.l.b16 %v666
  %v700 = vunpack.c.l.b16 %v667
  %v701 = vunpack.c.l.b16 %v668
  %v702 = vunpack.c.l.b16 %v669
  %v703 = vunpack.c.l.b16 %v670
  %v704 = vunpack.c.l.b16 %v671
  %v705 = vpack.c.b16 %v690, %v689
  %v706 = vpack.c.b16 %v692, %v691
  %v707 = vpack.c.b16 %v694, %v693
  %v708 = vpack.c.b16 %v696, %v695
  %v709 = vpack.c.b16 %v698, %v697
  %v710 = vpack.c.b16 %v700, %v699
  %v711 = vpack.c.b16 %v702, %v701
  %v712 = vpack.c.b16 %v704, %v703
  %v714 = vsel %vm93, %v705, 0
  %v717 = vsel %vm93, %v706, 0
  %v720 = vsel %vm93, %v707, 0
  %v723 = vsel %vm93, %v708, 0
  %v726 = vsel %vm93, %v709, 0
  %v729 = vsel %vm93, %v710, 0
  %v732 = vsel %vm93, %v711, 0
  %v735 = vsel %vm93, %v712, 0
  %v738 = vsel %vm97, %v672, 0
  %740 = vmatprep.subr.bf16.mxu0 0
  %741 = vmatpush1.bf16.msra.mxu0 %v738
  %742 = vmatprep.subr.bf16.mxu0 0
  %743 = vmatpush1.bf16.msra.mxu0 0
  %744 = vmatprep.subr.bf16.mxu0 0
  %745 = vmatpush1.bf16.msra.mxu0 0
  %746 = vmatprep.subr.bf16.mxu0 0
  %747 = vmatpush1.bf16.msra.mxu0 0
  %748 = vmatprep.subr.bf16.mxu0 0
  %749 = vmatpush1.bf16.msra.mxu0 0
  %750 = vmatprep.subr.bf16.mxu0 0
  %751 = vmatpush1.bf16.msra.mxu0 0
  %752 = vmatprep.subr.bf16.mxu0 0
  %753 = vmatpush1.bf16.msra.mxu0 0
  %754 = vmatprep.subr.bf16.mxu0 0
  %755 = vmatpush1.bf16.msra.mxu0 0
  %756 = vmatprep.subr.bf16.mxu0 0
  %757 = vmatpush1.bf16.msra.mxu0 0
  %758 = vmatprep.subr.bf16.mxu0 0
  %759 = vmatpush1.bf16.msra.mxu0 0
  %760 = vmatprep.subr.bf16.mxu0 0
  %761 = vmatpush1.bf16.msra.mxu0 0
  %762 = vmatprep.subr.bf16.mxu0 0
  %763 = vmatpush1.bf16.msra.mxu0 0
  %764 = vmatprep.subr.bf16.mxu0 0
  %765 = vmatpush1.bf16.msra.mxu0 0
  %766 = vmatprep.subr.bf16.mxu0 0
  %767 = vmatpush1.bf16.msra.mxu0 0
  %768 = vmatprep.subr.bf16.mxu0 0
  %769 = vmatpush1.bf16.msra.mxu0 0
  %770 = vmatprep.subr.bf16.mxu0 0
  %771 = vmatpush1.bf16.msra.mxu0 0
  %772 = vmatprep.mubr.bf16.mxu0 0
  %773 = vmatmul.mubr.bf16.gmra.mrb[0].mxu0 %v714
  %v774 = vpop.f32.mrb[0].mxu0
  %v775 = vadd.f32 0.0, %v774
  %v776 = vpop.f32.mrb[0].mxu0
  %v777 = vpop.f32.mrb[0].mxu0
  %v778 = vadd.f32 0.0, %v777
  %v779 = vpop.f32.mrb[0].mxu0
  %780 = vmatprep.mubr.bf16.mxu0 0
  %781 = vmatmul.mubr.bf16.gmra.mrb[0].mxu0 %v717
  %v782 = vpop.f32.mrb[0].mxu0
  %v783 = vadd.f32 0.0, %v782
  %v784 = vpop.f32.mrb[0].mxu0
  %v785 = vpop.f32.mrb[0].mxu0
  %v786 = vadd.f32 0.0, %v785
  %v787 = vpop.f32.mrb[0].mxu0
  %788 = vmatprep.mubr.bf16.mxu0 0
  %789 = vmatmul.mubr.bf16.gmra.mrb[0].mxu0 %v720
  %v790 = vpop.f32.mrb[0].mxu0
  %v791 = vadd.f32 0.0, %v790
  %v792 = vpop.f32.mrb[0].mxu0
  %v793 = vpop.f32.mrb[0].mxu0
  %v794 = vadd.f32 0.0, %v793
  %v795 = vpop.f32.mrb[0].mxu0
  %796 = vmatprep.mubr.bf16.mxu0 0
  %797 = vmatmul.mubr.bf16.gmra.mrb[0].mxu0 %v723
  %v798 = vpop.f32.mrb[0].mxu0
  %v799 = vadd.f32 0.0, %v798
  %v800 = vpop.f32.mrb[0].mxu0
  %v801 = vpop.f32.mrb[0].mxu0
  %v802 = vadd.f32 0.0, %v801
  %v803 = vpop.f32.mrb[0].mxu0
  %804 = vmatprep.mubr.bf16.mxu0 0
  %805 = vmatmul.mubr.bf16.gmra.mrb[0].mxu0 %v726
  %v806 = vpop.f32.mrb[0].mxu0
  %v807 = vadd.f32 0.0, %v806
  %v808 = vpop.f32.mrb[0].mxu0
  %v809 = vpop.f32.mrb[0].mxu0
  %v810 = vadd.f32 0.0, %v809
  %v811 = vpop.f32.mrb[0].mxu0
  %812 = vmatprep.mubr.bf16.mxu0 0
  %813 = vmatmul.mubr.bf16.gmra.mrb[0].mxu0 %v729
  %v814 = vpop.f32.mrb[0].mxu0
  %v815 = vadd.f32 0.0, %v814
  %v816 = vpop.f32.mrb[0].mxu0
  %v817 = vpop.f32.mrb[0].mxu0
  %v818 = vadd.f32 0.0, %v817
  %v819 = vpop.f32.mrb[0].mxu0
  %820 = vmatprep.mubr.bf16.mxu0 0
  %821 = vmatmul.mubr.bf16.gmra.mrb[0].mxu0 %v732
  %v822 = vpop.f32.mrb[0].mxu0
  %v823 = vadd.f32 0.0, %v822
  %v824 = vpop.f32.mrb[0].mxu0
  %v825 = vpop.f32.mrb[0].mxu0
  %v826 = vadd.f32 0.0, %v825
  %v827 = vpop.f32.mrb[0].mxu0
  %828 = vmatprep.mubr.bf16.mxu0 0
  %829 = vmatmul.mubr.bf16.gmra.mrb[0].mxu0 %v735
  %v830 = vpop.f32.mrb[0].mxu0
  %v831 = vadd.f32 0.0, %v830
  %v832 = vpop.f32.mrb[0].mxu0
  %v833 = vpop.f32.mrb[0].mxu0
  %v834 = vadd.f32 0.0, %v833
  %v835 = vpop.f32.mrb[0].mxu0
  %836 = vdwg.mxu0
  %v853 = vunpack.c.l.b16 %v639
  %v854 = vunpack.c.l.b16 %v640
  %v855 = vunpack.c.l.b16 %v641
  %v856 = vunpack.c.l.b16 %v642
  %v857 = vunpack.c.l.b16 %v643
  %v858 = vunpack.c.l.b16 %v644
  %v859 = vunpack.c.l.b16 %v645
  %v860 = vunpack.c.l.b16 %v646
  %v861 = vunpack.c.l.b16 %v647
  %v862 = vunpack.c.l.b16 %v648
  %v863 = vunpack.c.l.b16 %v649
  %v864 = vunpack.c.l.b16 %v650
  %v865 = vunpack.c.l.b16 %v651
  %v866 = vunpack.c.l.b16 %v652
  %v867 = vunpack.c.l.b16 %v653
  %v868 = vunpack.c.l.b16 %v654
  %v869 = vpack.c.b16 %v854, %v853
  %v870 = vpack.c.b16 %v856, %v855
  %v871 = vpack.c.b16 %v858, %v857
  %v872 = vpack.c.b16 %v860, %v859
  %v873 = vpack.c.b16 %v862, %v861
  %v874 = vpack.c.b16 %v864, %v863
  %v875 = vpack.c.b16 %v866, %v865
  %v876 = vpack.c.b16 %v868, %v867
  %v878 = vsel %vm93, %v869, 0
  %v881 = vsel %vm93, %v870, 0
  %v884 = vsel %vm93, %v871, 0
  %v887 = vsel %vm93, %v872, 0
  %v890 = vsel %vm93, %v873, 0
  %v893 = vsel %vm93, %v874, 0
  %v896 = vsel %vm93, %v875, 0
  %v899 = vsel %vm93, %v876, 0
  %v902 = vsel %vm97, %v655, 0
  %904 = vmatprep.subr.bf16.mxu0 0
  %905 = vmatpush1.bf16.msra.mxu0 %v902
  %906 = vmatprep.subr.bf16.mxu0 0
  %907 = vmatpush1.bf16.msra.mxu0 0
  %908 = vmatprep.subr.bf16.mxu0 0
  %909 = vmatpush1.bf16.msra.mxu0 0
  %910 = vmatprep.subr.bf16.mxu0 0
  %911 = vmatpush1.bf16.msra.mxu0 0
  %912 = vmatprep.subr.bf16.mxu0 0
  %913 = vmatpush1.bf16.msra.mxu0 0
  %914 = vmatprep.subr.bf16.mxu0 0
  %915 = vmatpush1.bf16.msra.mxu0 0
  %916 = vmatprep.subr.bf16.mxu0 0
  %917 = vmatpush1.bf16.msra.mxu0 0
  %918 = vmatprep.subr.bf16.mxu0 0
  %919 = vmatpush1.bf16.msra.mxu0 0
  %920 = vmatprep.subr.bf16.mxu0 0
  %921 = vmatpush1.bf16.msra.mxu0 0
  %922 = vmatprep.subr.bf16.mxu0 0
  %923 = vmatpush1.bf16.msra.mxu0 0
  %924 = vmatprep.subr.bf16.mxu0 0
  %925 = vmatpush1.bf16.msra.mxu0 0
  %926 = vmatprep.subr.bf16.mxu0 0
  %927 = vmatpush1.bf16.msra.mxu0 0
  %928 = vmatprep.subr.bf16.mxu0 0
  %929 = vmatpush1.bf16.msra.mxu0 0
  %930 = vmatprep.subr.bf16.mxu0 0
  %931 = vmatpush1.bf16.msra.mxu0 0
  %932 = vmatprep.subr.bf16.mxu0 0
  %933 = vmatpush1.bf16.msra.mxu0 0
  %934 = vmatprep.subr.bf16.mxu0 0
  %935 = vmatpush1.bf16.msra.mxu0 0
  %936 = vmatprep.mubr.bf16.mxu0 0
  %937 = vmatmul.mubr.bf16.gmra.mrb[0].mxu0 %v878
  %v938 = vpop.f32.mrb[0].mxu0
  %v939 = vadd.f32 %v775, %v938
  %v940 = vpop.f32.mrb[0].mxu0
  %v941 = vpop.f32.mrb[0].mxu0
  %v942 = vadd.f32 %v778, %v941
  %v943 = vpop.f32.mrb[0].mxu0
  %944 = vmatprep.mubr.bf16.mxu0 0
  %945 = vmatmul.mubr.bf16.gmra.mrb[0].mxu0 %v881
  %v946 = vpop.f32.mrb[0].mxu0
  %v947 = vadd.f32 %v783, %v946
  %v948 = vpop.f32.mrb[0].mxu0
  %v949 = vpop.f32.mrb[0].mxu0
  %v950 = vadd.f32 %v786, %v949
  %v951 = vpop.f32.mrb[0].mxu0
  %952 = vmatprep.mubr.bf16.mxu0 0
  %953 = vmatmul.mubr.bf16.gmra.mrb[0].mxu0 %v884
  %v954 = vpop.f32.mrb[0].mxu0
  %v955 = vadd.f32 %v791, %v954
  %v956 = vpop.f32.mrb[0].mxu0
  %v957 = vpop.f32.mrb[0].mxu0
  %v958 = vadd.f32 %v794, %v957
  %v959 = vpop.f32.mrb[0].mxu0
  %960 = vmatprep.mubr.bf16.mxu0 0
  %961 = vmatmul.mubr.bf16.gmra.mrb[0].mxu0 %v887
  %v962 = vpop.f32.mrb[0].mxu0
  %v963 = vadd.f32 %v799, %v962
  %v964 = vpop.f32.mrb[0].mxu0
  %v965 = vpop.f32.mrb[0].mxu0
  %v966 = vadd.f32 %v802, %v965
  %v967 = vpop.f32.mrb[0].mxu0
  %968 = vmatprep.mubr.bf16.mxu0 0
  %969 = vmatmul.mubr.bf16.gmra.mrb[0].mxu0 %v890
  %v970 = vpop.f32.mrb[0].mxu0
  %v971 = vadd.f32 %v807, %v970
  %v972 = vpop.f32.mrb[0].mxu0
  %v973 = vpop.f32.mrb[0].mxu0
  %v974 = vadd.f32 %v810, %v973
  %v975 = vpop.f32.mrb[0].mxu0
  %976 = vmatprep.mubr.bf16.mxu0 0
  %977 = vmatmul.mubr.bf16.gmra.mrb[0].mxu0 %v893
  %v978 = vpop.f32.mrb[0].mxu0
  %v979 = vadd.f32 %v815, %v978
  %v980 = vpop.f32.mrb[0].mxu0
  %v981 = vpop.f32.mrb[0].mxu0
  %v982 = vadd.f32 %v818, %v981
  %v983 = vpop.f32.mrb[0].mxu0
  %984 = vmatprep.mubr.bf16.mxu0 0
  %985 = vmatmul.mubr.bf16.gmra.mrb[0].mxu0 %v896
  %v986 = vpop.f32.mrb[0].mxu0
  %v987 = vadd.f32 %v823, %v986
  %v988 = vpop.f32.mrb[0].mxu0
  %v989 = vpop.f32.mrb[0].mxu0
  %v990 = vadd.f32 %v826, %v989
  %v991 = vpop.f32.mrb[0].mxu0
  %992 = vmatprep.mubr.bf16.mxu0 0
  %993 = vmatmul.mubr.bf16.gmra.mrb[0].mxu0 %v899
  %v994 = vpop.f32.mrb[0].mxu0
  %v995 = vadd.f32 %v831, %v994
  %v996 = vpop.f32.mrb[0].mxu0
  %v997 = vpop.f32.mrb[0].mxu0
  %v998 = vadd.f32 %v834, %v997
  %v999 = vpop.f32.mrb[0].mxu0
  %1000 = vdwg.mxu0
  %v1001 = vld [vmem:[%s19] sm:$0xf]
  %v1002 = vld [vmem:[%s19 + $0x4] sm:$0xf]
  %v1003 = vld [vmem:[%s19 + $0x8] sm:$0xf]
  %v1004 = vld [vmem:[%s19 + $0xc] sm:$0xf]
  %v1005 = vld [vmem:[%s19 + $0x10] sm:$0xf]
  %v1006 = vld [vmem:[%s19 + $0x14] sm:$0xf]
  %v1007 = vld [vmem:[%s19 + $0x18] sm:$0xf]
  %v1008 = vld [vmem:[%s19 + $0x1c] sm:$0xf]
  %v1009 = vld [vmem:[%s19 + $0x20] sm:$0xf]
  %v1010 = vld [vmem:[%s19 + $0x24] sm:$0xf]
  %v1011 = vld [vmem:[%s19 + $0x28] sm:$0xf]
  %v1012 = vld [vmem:[%s19 + $0x2c] sm:$0xf]
  %v1013 = vld [vmem:[%s19 + $0x30] sm:$0xf]
  %v1014 = vld [vmem:[%s19 + $0x34] sm:$0xf]
  %v1015 = vld [vmem:[%s19 + $0x38] sm:$0xf]
  %v1016 = vld [vmem:[%s19 + $0x3c] sm:$0xf]
  %v1017 = vpack.c.bf16 %v637, %v637
  %v1034 = vunpack.c.l.b16 %v1001
  %v1035 = vunpack.c.l.b16 %v1002
  %v1036 = vunpack.c.l.b16 %v1003
  %v1037 = vunpack.c.l.b16 %v1004
  %v1038 = vunpack.c.l.b16 %v1005
  %v1039 = vunpack.c.l.b16 %v1006
  %v1040 = vunpack.c.l.b16 %v1007
  %v1041 = vunpack.c.l.b16 %v1008
  %v1042 = vunpack.c.l.b16 %v1009
  %v1043 = vunpack.c.l.b16 %v1010
  %v1044 = vunpack.c.l.b16 %v1011
  %v1045 = vunpack.c.l.b16 %v1012
  %v1046 = vunpack.c.l.b16 %v1013
  %v1047 = vunpack.c.l.b16 %v1014
  %v1048 = vunpack.c.l.b16 %v1015
  %v1049 = vunpack.c.l.b16 %v1016
  %v1050 = vpack.c.b16 %v1035, %v1034
  %v1051 = vpack.c.b16 %v1037, %v1036
  %v1052 = vpack.c.b16 %v1039, %v1038
  %v1053 = vpack.c.b16 %v1041, %v1040
  %v1054 = vpack.c.b16 %v1043, %v1042
  %v1055 = vpack.c.b16 %v1045, %v1044
  %v1056 = vpack.c.b16 %v1047, %v1046
  %v1057 = vpack.c.b16 %v1049, %v1048
  %v1059 = vsel %vm93, %v1050, 0
  %v1062 = vsel %vm93, %v1051, 0
  %v1065 = vsel %vm93, %v1052, 0
  %v1068 = vsel %vm93, %v1053, 0
  %v1071 = vsel %vm93, %v1054, 0
  %v1074 = vsel %vm93, %v1055, 0
  %v1077 = vsel %vm93, %v1056, 0
  %v1080 = vsel %vm93, %v1057, 0
  %v1083 = vsel %vm97, %v1017, 0
  %1085 = vmatprep.subr.bf16.mxu0 0
  %1086 = vmatpush1.bf16.msra.mxu0 %v1083
  %1087 = vmatprep.subr.bf16.mxu0 0
  %1088 = vmatpush1.bf16.msra.mxu0 0
  %1089 = vmatprep.subr.bf16.mxu0 0
  %1090 = vmatpush1.bf16.msra.mxu0 0
  %1091 = vmatprep.subr.bf16.mxu0 0
  %1092 = vmatpush1.bf16.msra.mxu0 0
  %1093 = vmatprep.subr.bf16.mxu0 0
  %1094 = vmatpush1.bf16.msra.mxu0 0
  %1095 = vmatprep.subr.bf16.mxu0 0
  %1096 = vmatpush1.bf16.msra.mxu0 0
  %1097 = vmatprep.subr.bf16.mxu0 0
  %1098 = vmatpush1.bf16.msra.mxu0 0
  %1099 = vmatprep.subr.bf16.mxu0 0
  %1100 = vmatpush1.bf16.msra.mxu0 0
  %1101 = vmatprep.subr.bf16.mxu0 0
  %1102 = vmatpush1.bf16.msra.mxu0 0
  %1103 = vmatprep.subr.bf16.mxu0 0
  %1104 = vmatpush1.bf16.msra.mxu0 0
  %1105 = vmatprep.subr.bf16.mxu0 0
  %1106 = vmatpush1.bf16.msra.mxu0 0
  %1107 = vmatprep.subr.bf16.mxu0 0
  %1108 = vmatpush1.bf16.msra.mxu0 0
  %1109 = vmatprep.subr.bf16.mxu0 0
  %1110 = vmatpush1.bf16.msra.mxu0 0
  %1111 = vmatprep.subr.bf16.mxu0 0
  %1112 = vmatpush1.bf16.msra.mxu0 0
  %1113 = vmatprep.subr.bf16.mxu0 0
  %1114 = vmatpush1.bf16.msra.mxu0 0
  %1115 = vmatprep.subr.bf16.mxu0 0
  %1116 = vmatpush1.bf16.msra.mxu0 0
  %1117 = vmatprep.mubr.bf16.mxu0 0
  %1118 = vmatmul.mubr.bf16.gmra.mrb[0].mxu0 %v1059
  %v1119 = vpop.f32.mrb[0].mxu0
  %v1120 = vadd.f32 0.0, %v1119
  %v1121 = vpop.f32.mrb[0].mxu0
  %v1122 = vpop.f32.mrb[0].mxu0
  %v1123 = vadd.f32 0.0, %v1122
  %v1124 = vpop.f32.mrb[0].mxu0
  %1125 = vmatprep.mubr.bf16.mxu0 0
  %1126 = vmatmul.mubr.bf16.gmra.mrb[0].mxu0 %v1062
  %v1127 = vpop.f32.mrb[0].mxu0
  %v1128 = vadd.f32 0.0, %v1127
  %v1129 = vpop.f32.mrb[0].mxu0
  %v1130 = vpop.f32.mrb[0].mxu0
  %v1131 = vadd.f32 0.0, %v1130
  %v1132 = vpop.f32.mrb[0].mxu0
  %1133 = vmatprep.mubr.bf16.mxu0 0
  %1134 = vmatmul.mubr.bf16.gmra.mrb[0].mxu0 %v1065
  %v1135 = vpop.f32.mrb[0].mxu0
  %v1136 = vadd.f32 0.0, %v1135
  %v1137 = vpop.f32.mrb[0].mxu0
  %v1138 = vpop.f32.mrb[0].mxu0
  %v1139 = vadd.f32 0.0, %v1138
  %v1140 = vpop.f32.mrb[0].mxu0
  %1141 = vmatprep.mubr.bf16.mxu0 0
  %1142 = vmatmul.mubr.bf16.gmra.mrb[0].mxu0 %v1068
  %v1143 = vpop.f32.mrb[0].mxu0
  %v1144 = vadd.f32 0.0, %v1143
  %v1145 = vpop.f32.mrb[0].mxu0
  %v1146 = vpop.f32.mrb[0].mxu0
  %v1147 = vadd.f32 0.0, %v1146
  %v1148 = vpop.f32.mrb[0].mxu0
  %1149 = vmatprep.mubr.bf16.mxu0 0
  %1150 = vmatmul.mubr.bf16.gmra.mrb[0].mxu0 %v1071
  %v1151 = vpop.f32.mrb[0].mxu0
  %v1152 = vadd.f32 0.0, %v1151
  %v1153 = vpop.f32.mrb[0].mxu0
  %v1154 = vpop.f32.mrb[0].mxu0
  %v1155 = vadd.f32 0.0, %v1154
  %v1156 = vpop.f32.mrb[0].mxu0
  %1157 = vmatprep.mubr.bf16.mxu0 0
  %1158 = vmatmul.mubr.bf16.gmra.mrb[0].mxu0 %v1074
  %v1159 = vpop.f32.mrb[0].mxu0
  %v1160 = vadd.f32 0.0, %v1159
  %v1161 = vpop.f32.mrb[0].mxu0
  %v1162 = vpop.f32.mrb[0].mxu0
  %v1163 = vadd.f32 0.0, %v1162
  %v1164 = vpop.f32.mrb[0].mxu0
  %1165 = vmatprep.mubr.bf16.mxu0 0
  %1166 = vmatmul.mubr.bf16.gmra.mrb[0].mxu0 %v1077
  %v1167 = vpop.f32.mrb[0].mxu0
  %v1168 = vadd.f32 0.0, %v1167
  %v1169 = vpop.f32.mrb[0].mxu0
  %v1170 = vpop.f32.mrb[0].mxu0
  %v1171 = vadd.f32 0.0, %v1170
  %v1172 = vpop.f32.mrb[0].mxu0
  %1173 = vmatprep.mubr.bf16.mxu0 0
  %1174 = vmatmul.mubr.bf16.gmra.mrb[0].mxu0 %v1080
  %v1175 = vpop.f32.mrb[0].mxu0
  %v1176 = vadd.f32 0.0, %v1175
  %v1177 = vpop.f32.mrb[0].mxu0
  %v1178 = vpop.f32.mrb[0].mxu0
  %v1179 = vadd.f32 0.0, %v1178
  %v1180 = vpop.f32.mrb[0].mxu0
  %1181 = vdwg.mxu0
  %v1182 = vadd.f32 %v939, %v1120
  %v1183 = vadd.f32 %v942, %v1123
  %v1184 = vadd.f32 %v947, %v1128
  %v1185 = vadd.f32 %v950, %v1131
  %v1186 = vadd.f32 %v955, %v1136
  %v1187 = vadd.f32 %v958, %v1139
  %v1188 = vadd.f32 %v963, %v1144
  %v1189 = vadd.f32 %v966, %v1147
  %v1190 = vadd.f32 %v971, %v1152
  %v1191 = vadd.f32 %v974, %v1155
  %v1192 = vadd.f32 %v979, %v1160
  %v1193 = vadd.f32 %v982, %v1163
  %v1194 = vadd.f32 %v987, %v1168
  %v1195 = vadd.f32 %v990, %v1171
  %v1196 = vadd.f32 %v995, %v1176
  %v1197 = vadd.f32 %v998, %v1179
  %v1198 = vld [vmem:[%s20] sm:$0xf]
  %v1199 = vld [vmem:[%s20 + $0x4] sm:$0xf]
  %v1200 = vld [vmem:[%s20 + $0x8] sm:$0xf]
  %v1201 = vld [vmem:[%s20 + $0xc] sm:$0xf]
  %v1202 = vld [vmem:[%s20 + $0x10] sm:$0xf]
  %v1203 = vld [vmem:[%s20 + $0x14] sm:$0xf]
  %v1204 = vld [vmem:[%s20 + $0x18] sm:$0xf]
  %v1205 = vld [vmem:[%s20 + $0x1c] sm:$0xf]
  %v1206 = vld [vmem:[%s20 + $0x20] sm:$0xf]
  %v1207 = vld [vmem:[%s20 + $0x24] sm:$0xf]
  %v1208 = vld [vmem:[%s20 + $0x28] sm:$0xf]
  %v1209 = vld [vmem:[%s20 + $0x2c] sm:$0xf]
  %v1210 = vld [vmem:[%s20 + $0x30] sm:$0xf]
  %v1211 = vld [vmem:[%s20 + $0x34] sm:$0xf]
  %v1212 = vld [vmem:[%s20 + $0x38] sm:$0xf]
  %v1213 = vld [vmem:[%s20 + $0x3c] sm:$0xf]
  %v1214 = vpack.c.bf16 %v638, %v638
  %v1231 = vunpack.c.l.b16 %v1198
  %v1232 = vunpack.c.l.b16 %v1199
  %v1233 = vunpack.c.l.b16 %v1200
  %v1234 = vunpack.c.l.b16 %v1201
  %v1235 = vunpack.c.l.b16 %v1202
  %v1236 = vunpack.c.l.b16 %v1203
  %v1237 = vunpack.c.l.b16 %v1204
  %v1238 = vunpack.c.l.b16 %v1205
  %v1239 = vunpack.c.l.b16 %v1206
  %v1240 = vunpack.c.l.b16 %v1207
  %v1241 = vunpack.c.l.b16 %v1208
  %v1242 = vunpack.c.l.b16 %v1209
  %v1243 = vunpack.c.l.b16 %v1210
  %v1244 = vunpack.c.l.b16 %v1211
  %v1245 = vunpack.c.l.b16 %v1212
  %v1246 = vunpack.c.l.b16 %v1213
  %v1247 = vpack.c.b16 %v1232, %v1231
  %v1248 = vpack.c.b16 %v1234, %v1233
  %v1249 = vpack.c.b16 %v1236, %v1235
  %v1250 = vpack.c.b16 %v1238, %v1237
  %v1251 = vpack.c.b16 %v1240, %v1239
  %v1252 = vpack.c.b16 %v1242, %v1241
  %v1253 = vpack.c.b16 %v1244, %v1243
  %v1254 = vpack.c.b16 %v1246, %v1245
  %v1256 = vsel %vm93, %v1247, 0
  %v1259 = vsel %vm93, %v1248, 0
  %v1262 = vsel %vm93, %v1249, 0
  %v1265 = vsel %vm93, %v1250, 0
  %v1268 = vsel %vm93, %v1251, 0
  %v1271 = vsel %vm93, %v1252, 0
  %v1274 = vsel %vm93, %v1253, 0
  %v1277 = vsel %vm93, %v1254, 0
  %v1280 = vsel %vm97, %v1214, 0
  %1282 = vmatprep.subr.bf16.mxu0 0
  %1283 = vmatpush1.bf16.msra.mxu0 %v1280
  %1284 = vmatprep.subr.bf16.mxu0 0
  %1285 = vmatpush1.bf16.msra.mxu0 0
  %1286 = vmatprep.subr.bf16.mxu0 0
  %1287 = vmatpush1.bf16.msra.mxu0 0
  %1288 = vmatprep.subr.bf16.mxu0 0
  %1289 = vmatpush1.bf16.msra.mxu0 0
  %1290 = vmatprep.subr.bf16.mxu0 0
  %1291 = vmatpush1.bf16.msra.mxu0 0
  %1292 = vmatprep.subr.bf16.mxu0 0
  %1293 = vmatpush1.bf16.msra.mxu0 0
  %1294 = vmatprep.subr.bf16.mxu0 0
  %1295 = vmatpush1.bf16.msra.mxu0 0
  %1296 = vmatprep.subr.bf16.mxu0 0
  %1297 = vmatpush1.bf16.msra.mxu0 0
  %1298 = vmatprep.subr.bf16.mxu0 0
  %1299 = vmatpush1.bf16.msra.mxu0 0
  %1300 = vmatprep.subr.bf16.mxu0 0
  %1301 = vmatpush1.bf16.msra.mxu0 0
  %1302 = vmatprep.subr.bf16.mxu0 0
  %1303 = vmatpush1.bf16.msra.mxu0 0
  %1304 = vmatprep.subr.bf16.mxu0 0
  %1305 = vmatpush1.bf16.msra.mxu0 0
  %1306 = vmatprep.subr.bf16.mxu0 0
  %1307 = vmatpush1.bf16.msra.mxu0 0
  %1308 = vmatprep.subr.bf16.mxu0 0
  %1309 = vmatpush1.bf16.msra.mxu0 0
  %1310 = vmatprep.subr.bf16.mxu0 0
  %1311 = vmatpush1.bf16.msra.mxu0 0
  %1312 = vmatprep.subr.bf16.mxu0 0
  %1313 = vmatpush1.bf16.msra.mxu0 0
  %1314 = vmatprep.mubr.bf16.mxu0 0
  %1315 = vmatmul.mubr.bf16.gmra.mrb[0].mxu0 %v1256
  %v1316 = vpop.f32.mrb[0].mxu0
  %v1317 = vadd.f32 0.0, %v1316
  %v1318 = vpop.f32.mrb[0].mxu0
  %v1319 = vpop.f32.mrb[0].mxu0
  %v1320 = vadd.f32 0.0, %v1319
  %v1321 = vpop.f32.mrb[0].mxu0
  %1322 = vmatprep.mubr.bf16.mxu0 0
  %1323 = vmatmul.mubr.bf16.gmra.mrb[0].mxu0 %v1259
  %v1324 = vpop.f32.mrb[0].mxu0
  %v1325 = vadd.f32 0.0, %v1324
  %v1326 = vpop.f32.mrb[0].mxu0
  %v1327 = vpop.f32.mrb[0].mxu0
  %v1328 = vadd.f32 0.0, %v1327
  %v1329 = vpop.f32.mrb[0].mxu0
  %1330 = vmatprep.mubr.bf16.mxu0 0
  %1331 = vmatmul.mubr.bf16.gmra.mrb[0].mxu0 %v1262
  %v1332 = vpop.f32.mrb[0].mxu0
  %v1333 = vadd.f32 0.0, %v1332
  %v1334 = vpop.f32.mrb[0].mxu0
  %v1335 = vpop.f32.mrb[0].mxu0
  %v1336 = vadd.f32 0.0, %v1335
  %v1337 = vpop.f32.mrb[0].mxu0
  %1338 = vmatprep.mubr.bf16.mxu0 0
  %1339 = vmatmul.mubr.bf16.gmra.mrb[0].mxu0 %v1265
  %v1340 = vpop.f32.mrb[0].mxu0
  %v1341 = vadd.f32 0.0, %v1340
  %v1342 = vpop.f32.mrb[0].mxu0
  %v1343 = vpop.f32.mrb[0].mxu0
  %v1344 = vadd.f32 0.0, %v1343
  %v1345 = vpop.f32.mrb[0].mxu0
  %1346 = vmatprep.mubr.bf16.mxu0 0
  %1347 = vmatmul.mubr.bf16.gmra.mrb[0].mxu0 %v1268
  %v1348 = vpop.f32.mrb[0].mxu0
  %v1349 = vadd.f32 0.0, %v1348
  %v1350 = vpop.f32.mrb[0].mxu0
  %v1351 = vpop.f32.mrb[0].mxu0
  %v1352 = vadd.f32 0.0, %v1351
  %v1353 = vpop.f32.mrb[0].mxu0
  %1354 = vmatprep.mubr.bf16.mxu0 0
  %1355 = vmatmul.mubr.bf16.gmra.mrb[0].mxu0 %v1271
  %v1356 = vpop.f32.mrb[0].mxu0
  %v1357 = vadd.f32 0.0, %v1356
  %v1358 = vpop.f32.mrb[0].mxu0
  %v1359 = vpop.f32.mrb[0].mxu0
  %v1360 = vadd.f32 0.0, %v1359
  %v1361 = vpop.f32.mrb[0].mxu0
  %1362 = vmatprep.mubr.bf16.mxu0 0
  %1363 = vmatmul.mubr.bf16.gmra.mrb[0].mxu0 %v1274
  %v1364 = vpop.f32.mrb[0].mxu0
  %v1365 = vadd.f32 0.0, %v1364
  %v1366 = vpop.f32.mrb[0].mxu0
  %v1367 = vpop.f32.mrb[0].mxu0
  %v1368 = vadd.f32 0.0, %v1367
  %v1369 = vpop.f32.mrb[0].mxu0
  %1370 = vmatprep.mubr.bf16.mxu0 0
  %1371 = vmatmul.mubr.bf16.gmra.mrb[0].mxu0 %v1277
  %v1372 = vpop.f32.mrb[0].mxu0
  %v1373 = vadd.f32 0.0, %v1372
  %v1374 = vpop.f32.mrb[0].mxu0
  %v1375 = vpop.f32.mrb[0].mxu0
  %v1376 = vadd.f32 0.0, %v1375
  %v1377 = vpop.f32.mrb[0].mxu0
  %1378 = vdwg.mxu0
  %v1379 = vadd.f32 %v1182, %v1317
  %v1380 = vadd.f32 %v1183, %v1320
  %v1381 = vadd.f32 %v1184, %v1325
  %v1382 = vadd.f32 %v1185, %v1328
  %v1383 = vadd.f32 %v1186, %v1333
  %v1384 = vadd.f32 %v1187, %v1336
  %v1385 = vadd.f32 %v1188, %v1341
  %v1386 = vadd.f32 %v1189, %v1344
  %v1387 = vadd.f32 %v1190, %v1349
  %v1388 = vadd.f32 %v1191, %v1352
  %v1389 = vadd.f32 %v1192, %v1357
  %v1390 = vadd.f32 %v1193, %v1360
  %v1391 = vadd.f32 %v1194, %v1365
  %v1392 = vadd.f32 %v1195, %v1368
  %v1393 = vadd.f32 %v1196, %v1373
  %v1394 = vadd.f32 %v1197, %v1376
  %v1395 = vld [vmem:[%s21] sm:$0xff]
  %v1396 = vld [vmem:[%s21 + $0x8] sm:$0xff]
  %v1397 = vld [vmem:[%s21 + $0x10] sm:$0xff]
  %v1398 = vld [vmem:[%s21 + $0x18] sm:$0xff]
  %v1399 = vld [vmem:[%s21 + $0x20] sm:$0xff]
  %v1400 = vld [vmem:[%s21 + $0x28] sm:$0xff]
  %v1401 = vld [vmem:[%s21 + $0x30] sm:$0xff]
  %v1402 = vld [vmem:[%s21 + $0x38] sm:$0xff]
  %v1403 = vld [vmem:[%s21 + $0x40] sm:$0xff]
  %v1404 = vld [vmem:[%s21 + $0x48] sm:$0xff]
  %v1405 = vld [vmem:[%s21 + $0x50] sm:$0xff]
  %v1406 = vld [vmem:[%s21 + $0x58] sm:$0xff]
  %v1407 = vld [vmem:[%s21 + $0x60] sm:$0xff]
  %v1408 = vld [vmem:[%s21 + $0x68] sm:$0xff]
  %v1409 = vld [vmem:[%s21 + $0x70] sm:$0xff]
  %v1410 = vld [vmem:[%s21 + $0x78] sm:$0xff]
  %1412 = vset.pattern.permute.xlu0 0
  %1413 = vperm.xlu0 %1412, %v1395
  %v1414 = vpop.permute.xlu0 %1413
  %1417 = vset.pattern.permute.xlu0 0
  %1418 = vperm.xlu0 %1417, %v1396
  %v1419 = vpop.permute.xlu0 %1418
  %1422 = vset.pattern.permute.xlu0 0
  %1423 = vperm.xlu0 %1422, %v1397
  %v1424 = vpop.permute.xlu0 %1423
  %1427 = vset.pattern.permute.xlu0 0
  %1428 = vperm.xlu0 %1427, %v1398
  %v1429 = vpop.permute.xlu0 %1428
  %1432 = vset.pattern.permute.xlu0 0
  %1433 = vperm.xlu0 %1432, %v1399
  %v1434 = vpop.permute.xlu0 %1433
  %1437 = vset.pattern.permute.xlu0 0
  %1438 = vperm.xlu0 %1437, %v1400
  %v1439 = vpop.permute.xlu0 %1438
  %1442 = vset.pattern.permute.xlu0 0
  %1443 = vperm.xlu0 %1442, %v1401
  %v1444 = vpop.permute.xlu0 %1443
  %1447 = vset.pattern.permute.xlu0 0
  %1448 = vperm.xlu0 %1447, %v1402
  %v1449 = vpop.permute.xlu0 %1448
  %1452 = vset.pattern.permute.xlu0 0
  %1453 = vperm.xlu0 %1452, %v1403
  %v1454 = vpop.permute.xlu0 %1453
  %1457 = vset.pattern.permute.xlu0 0
  %1458 = vperm.xlu0 %1457, %v1404
  %v1459 = vpop.permute.xlu0 %1458
  %1462 = vset.pattern.permute.xlu0 0
  %1463 = vperm.xlu0 %1462, %v1405
  %v1464 = vpop.permute.xlu0 %1463
  %1467 = vset.pattern.permute.xlu0 0
  %1468 = vperm.xlu0 %1467, %v1406
  %v1469 = vpop.permute.xlu0 %1468
  %1472 = vset.pattern.permute.xlu0 0
  %1473 = vperm.xlu0 %1472, %v1407
  %v1474 = vpop.permute.xlu0 %1473
  %1477 = vset.pattern.permute.xlu0 0
  %1478 = vperm.xlu0 %1477, %v1408
  %v1479 = vpop.permute.xlu0 %1478
  %1482 = vset.pattern.permute.xlu0 0
  %1483 = vperm.xlu0 %1482, %v1409
  %v1484 = vpop.permute.xlu0 %1483
  %1487 = vset.pattern.permute.xlu0 0
  %1488 = vperm.xlu0 %1487, %v1410
  %v1489 = vpop.permute.xlu0 %1488
  %v1491 = vadd.f32 %v1379, %v1414
  %v1492 = vadd.f32 %v1380, %v1419
  %v1493 = vadd.f32 %v1381, %v1424
  %v1494 = vadd.f32 %v1382, %v1429
  %v1495 = vadd.f32 %v1383, %v1434
  %v1496 = vadd.f32 %v1384, %v1439
  %v1497 = vadd.f32 %v1385, %v1444
  %v1498 = vadd.f32 %v1386, %v1449
  %v1499 = vadd.f32 %v1387, %v1454
  %v1500 = vadd.f32 %v1388, %v1459
  %v1501 = vadd.f32 %v1389, %v1464
  %v1502 = vadd.f32 %v1390, %v1469
  %v1503 = vadd.f32 %v1391, %v1474
  %v1504 = vadd.f32 %v1392, %v1479
  %v1505 = vadd.f32 %v1393, %v1484
  %v1506 = vadd.f32 %v1394, %v1489
  %v1507 = vld [vmem:[%s22] sm:$0xf]
  %v1508 = vld [vmem:[%s23] sm:$0xff]
  %v1509 = vpack.c.bf16 %v1492, %v1491
  %v1510 = vpack.c.bf16 %v1494, %v1493
  %v1511 = vpack.c.bf16 %v1496, %v1495
  %v1512 = vpack.c.bf16 %v1498, %v1497
  %v1513 = vpack.c.bf16 %v1500, %v1499
  %v1514 = vpack.c.bf16 %v1502, %v1501
  %v1515 = vpack.c.bf16 %v1504, %v1503
  %v1516 = vpack.c.bf16 %v1506, %v1505
  %1518 = vset.pattern.permute.xlu0 0
  %1519 = vperm.xlu0 %1518, %v1508
  %v1520 = vpop.permute.xlu0 %1519
  %1522 = vmatprep.subr.bf16.mxu0 0
  %1523 = vmatpush1.bf16.msra.mxu0 %v1509
  %1524 = vmatprep.subr.bf16.mxu0 0
  %1525 = vmatpush1.bf16.msra.mxu0 %v1510
  %1526 = vmatprep.subr.bf16.mxu0 0
  %1527 = vmatpush1.bf16.msra.mxu0 %v1511
  %1528 = vmatprep.subr.bf16.mxu0 0
  %1529 = vmatpush1.bf16.msra.mxu0 %v1512
  %1530 = vmatprep.subr.bf16.mxu0 0
  %1531 = vmatpush1.bf16.msra.mxu0 %v1513
  %1532 = vmatprep.subr.bf16.mxu0 0
  %1533 = vmatpush1.bf16.msra.mxu0 %v1514
  %1534 = vmatprep.subr.bf16.mxu0 0
  %1535 = vmatpush1.bf16.msra.mxu0 %v1515
  %1536 = vmatprep.subr.bf16.mxu0 0
  %1537 = vmatpush1.bf16.msra.mxu0 %v1516
  %1538 = vmatprep.subr.bf16.mxu0 0
  %1539 = vmatpush1.bf16.msra.mxu0 0
  %1540 = vmatprep.subr.bf16.mxu0 0
  %1541 = vmatpush1.bf16.msra.mxu0 0
  %1542 = vmatprep.subr.bf16.mxu0 0
  %1543 = vmatpush1.bf16.msra.mxu0 0
  %1544 = vmatprep.subr.bf16.mxu0 0
  %1545 = vmatpush1.bf16.msra.mxu0 0
  %1546 = vmatprep.subr.bf16.mxu0 0
  %1547 = vmatpush1.bf16.msra.mxu0 0
  %1548 = vmatprep.subr.bf16.mxu0 0
  %1549 = vmatpush1.bf16.msra.mxu0 0
  %1550 = vmatprep.subr.bf16.mxu0 0
  %1551 = vmatpush1.bf16.msra.mxu0 0
  %1552 = vmatprep.subr.bf16.mxu0 0
  %1553 = vmatpush1.bf16.msra.mxu0 0
  %1554 = vmatprep.mubr.bf16.mxu0 0
  %1555 = vmatmul.mubr.bf16.gmra.mrb[0].mxu0 %v1507
  %v1556 = vpop.f32.mrb[0].mxu0
  %v1557 = vadd.f32 %v1520, %v1556
  %v1558 = vpop.f32.mrb[0].mxu0
  %v1559 = vpop.f32.mrb[0].mxu0
  %v1560 = vpop.f32.mrb[0].mxu0
  %1561 = vdwg.mxu0
  %v1562 = vld [vmem:[%s24] sm:$0xff]
  %1564 = vset.pattern.permute.xlu0 0
  %1565 = vperm.xlu0 %1564, %v1562
  %v1566 = vpop.permute.xlu0 %1565
  %v1568 = vmul.f32 %v1557, %v1566
  %v1569 = vld [vmem:[%s25] sm:$0xff]
  %1571 = vset.pattern.permute.xlu0 0
  %1572 = vperm.xlu0 %1571, %v1569
  %v1573 = vpop.permute.xlu0 %1572
  %v1575 = vadd.f32 %v1568, %v1573
  %v1576 = vadd.f32 %v1575, 3.0
  %v1577 = vmax.f32 %v1576, 0.0
  %v1578 = vmin.f32 %v1577, 6.0
  %v1579 = vmul.f32 %v1575, %v1578
  %v1580 = vmul.f32 %v1579, 0.16666667
  %v1581 = vadd.f32 %v1580, %v84
  %1582 = vst [vmem:[%s26] sm:$0xff] %v1581
  // Predicated region
  $region106: #{forward.5} parent=0 // pred_check
    _
  $region107: #{forward.5} parent=0 // pred_check_branch
    %1584 = sbr.rel (0) target = $region109
  $region108: #{forward.5} parent=0 // pred_region
    _
  $region109: #{forward.5} parent=0 // pred_fallthru
    _
  // Predicated region
  $region110: #{forward.5} parent=0 // pred_check
    _
  $region111: #{forward.5} parent=0 // pred_check_branch
    %1586 = sbr.rel (0) target = $region113
  $region112: #{forward.5} parent=0 // pred_region
    _
  $region113: #{forward.5} parent=0 // pred_fallthru
    _

</llo_original>
